<compile_context>
chip_gen: v7x
topology: tpu7x:2x2x1
jax: 0.10.0
libtpu: 0.0.40
codegen_flags: <defaults>
</compile_context>

<pallas_src>
import jax
import jax.numpy as jnp
from jax.experimental import pallas as pl
from jax.experimental.pallas import tpu as pltpu

# ---------------- model hyper-parameters (small, synthetic) -----------------
B, S, D, H, E, LAYERS = 2, 8, 32, 4, 16, 2   # batch, seq, width, heads, proj dim, layers
HD = D // H                                  # head dim
MLP = 4 * D
EPS = 1e-5
NEG = -1e9                                   # causal-mask fill (stands in for -inf)
SCALE = 1.0 / (HD ** 0.5)
N_LAYER_PARAMS = 12

VMEM_SPEC = pl.BlockSpec(memory_space=pltpu.MemorySpace.VMEM)


def _layernorm(x, g, b):
    mu = jnp.mean(x, axis=-1, keepdims=True)
    var = jnp.mean((x - mu) ** 2, axis=-1, keepdims=True)
    return (x - mu) * jax.lax.rsqrt(var + EPS) * g + b


def _quick_gelu(x):
    # CLIP QuickGELU: x * sigmoid(1.702 * x)
    return x * (1.0 / (1.0 + jnp.exp(-1.702 * x)))


# ------------------------------ fused Pallas kernel --------------------------
def text_encoder_kernel(*refs):
    # refs = (eot, prompts, pos, 12*LAYERS layer params, lnf_g, lnf_b, proj,
    #         out, score_scratch, ctx_scratch)
    n_in = 3 + N_LAYER_PARAMS * LAYERS + 3
    eot_ref, x_ref, pos_ref = refs[:3]
    w_refs = refs[3:n_in - 3]
    lnf_g_ref, lnf_b_ref, proj_ref = refs[n_in - 3:n_in]
    o_ref = refs[n_in]
    s_ref, ctx_ref = refs[n_in + 1], refs[n_in + 2]      # VMEM scratch

    # Causal mask, built once and reused by every layer / head.
    rows = jax.lax.broadcasted_iota(jnp.int32, (S, S), 0)
    cols = jax.lax.broadcasted_iota(jnp.int32, (S, S), 1)
    mask = jnp.where(cols > rows, NEG, 0.0).astype(jnp.float32)

    # prompts + positional embedding, then keep activations stacked as (B*S, D).
    # (The PyTorch permute(1,0,2) is only an nn.MultiheadAttention layout detail.)
    x = (x_ref[...] + pos_ref[...][None, :, :]).reshape(B * S, D)

    # TODO(synk): CLIP's self.dtype is usually float16; we run everything in float32
    # (bf16 matmul operands only become worthwhile at real CLIP widths).
    for l in range(LAYERS):
        (ln1g, ln1b, wqkv, bqkv, wo, bo,
         ln2g, ln2b, w1, b1, w2, b2) = [
            r[...] for r in w_refs[l * N_LAYER_PARAMS:(l + 1) * N_LAYER_PARAMS]]

        # ---- causal multi-head self-attention -------------------------------
        h = _layernorm(x, ln1g, ln1b)
        qkv = jnp.dot(h, wqkv, preferred_element_type=jnp.float32) + bqkv   # (B*S, 3D)
        q3 = qkv[:, 0 * D:1 * D].reshape(B, S, D)
        k3 = qkv[:, 1 * D:2 * D].reshape(B, S, D)
        v3 = qkv[:, 2 * D:3 * D].reshape(B, S, D)

        # Scores for every head, batched over B (one 3-D dot per head), staged into a
        # (H*B*S, S) scratch so softmax runs as a single pass over all heads at once.
        for hh in range(H):
            qh = q3[:, :, hh * HD:(hh + 1) * HD]
            kh = k3[:, :, hh * HD:(hh + 1) * HD]
            s_h = jnp.einsum('bqd,bkd->bqk', qh, kh,
                             preferred_element_type=jnp.float32)            # (B,S,S)
            s_ref[hh * B * S:(hh + 1) * B * S, :] = (
                s_h * SCALE + mask[None]).reshape(B * S, S)

        s_all = s_ref[...]                                                  # (H*B*S, S)
        s_all = s_all - jnp.max(s_all, axis=-1, keepdims=True)
        p_all = jnp.exp(s_all)
        p_all = p_all / jnp.sum(p_all, axis=-1, keepdims=True)

        # Per-head context (batched over B), written into the lane slice of a
        # (B*S, D) scratch == "concat heads", then ONE output-projection matmul.
        for hh in range(H):
            p_h = p_all[hh * B * S:(hh + 1) * B * S, :].reshape(B, S, S)
            vh = v3[:, :, hh * HD:(hh + 1) * HD]
            ctx_h = jnp.einsum('bqk,bkd->bqd', p_h, vh,
                               preferred_element_type=jnp.float32)          # (B,S,HD)
            ctx_ref[:, hh * HD:(hh + 1) * HD] = ctx_h.reshape(B * S, HD)

        attn = jnp.dot(ctx_ref[...], wo, preferred_element_type=jnp.float32) + bo
        x = x + attn

        # ---- MLP (QuickGELU) -------------------------------------------------
        h2 = _layernorm(x, ln2g, ln2b)
        u = _quick_gelu(jnp.dot(h2, w1, preferred_element_type=jnp.float32) + b1)
        x = x + jnp.dot(u, w2, preferred_element_type=jnp.float32) + b2

    # ---- EOT gather (one-hot matmul) + ln_final + text_projection -----------
    # ln_final is per-token, so LN on just the gathered EOT rows == LN then gather.
    flat_eot = eot_ref[...] + S * jax.lax.broadcasted_iota(jnp.int32, (B, 1), 0)
    col = jax.lax.broadcasted_iota(jnp.int32, (B, B * S), 1)
    onehot = (col == flat_eot).astype(jnp.float32)                          # (B, B*S)
    eot_rows = jnp.dot(onehot, x, preferred_element_type=jnp.float32)       # (B, D)
    normed = _layernorm(eot_rows, lnf_g_ref[...], lnf_b_ref[...])
    o_ref[...] = jnp.dot(normed, proj_ref[...], preferred_element_type=jnp.float32)


# ------------------------------ pallas_call glue -----------------------------
@jax.jit
def text_encoder_forward(prompts, tokenized_prompts, params):
    pos, layers, lnf_g, lnf_b, proj = params
    # argmax over token ids picks the EOT position (glue, stays in plain JAX).
    eot = jnp.argmax(tokenized_prompts, axis=-1).astype(jnp.int32).reshape(B, 1)
    flat_layer_params = [p for layer in layers for p in layer]
    n_in = 3 + len(flat_layer_params) + 3
    return pl.pallas_call(
        text_encoder_kernel,
        out_shape=jax.ShapeDtypeStruct((B, E), jnp.float32),
        in_specs=[VMEM_SPEC] * n_in,
        out_specs=VMEM_SPEC,
        scratch_shapes=[pltpu.VMEM((H * B * S, S), jnp.float32),   # stacked scores
                        pltpu.VMEM((B * S, D), jnp.float32)],      # concat'd heads
    )(eot, prompts, pos, *flat_layer_params, lnf_g, lnf_b, proj)


# ------------------------------ pure-JAX reference ---------------------------
def ref_forward(prompts, tokenized_prompts, params):
    pos, layers, lnf_g, lnf_b, proj = params
    rows = jax.lax.broadcasted_iota(jnp.int32, (S, S), 0)
    cols = jax.lax.broadcasted_iota(jnp.int32, (S, S), 1)
    mask = jnp.where(cols > rows, NEG, 0.0).astype(jnp.float32)

    x = prompts + pos[None]
    for (ln1g, ln1b, wqkv, bqkv, wo, bo, ln2g, ln2b, w1, b1, w2, b2) in layers:
        h = _layernorm(x, ln1g, ln1b)
        qkv = h @ wqkv + bqkv
        q, k, v = qkv[..., :D], qkv[..., D:2 * D], qkv[..., 2 * D:]
        qh = q.reshape(B, S, H, HD).transpose(0, 2, 1, 3)
        kh = k.reshape(B, S, H, HD).transpose(0, 2, 1, 3)
        vh = v.reshape(B, S, H, HD).transpose(0, 2, 1, 3)
        s = jnp.einsum('bhqd,bhkd->bhqk', qh, kh) * SCALE + mask
        s = s - jnp.max(s, axis=-1, keepdims=True)
        p = jnp.exp(s)
        p = p / jnp.sum(p, axis=-1, keepdims=True)
        o = jnp.einsum('bhqk,bhkd->bhqd', p, vh).transpose(0, 2, 1, 3).reshape(B, S, D)
        x = x + o @ wo + bo
        h2 = _layernorm(x, ln2g, ln2b)
        u = _quick_gelu(h2 @ w1 + b1)
        x = x + u @ w2 + b2
    xg = x[jnp.arange(B), jnp.argmax(tokenized_prompts, axis=-1)]
    xg = _layernorm(xg, lnf_g, lnf_b)
    return xg @ proj


# ------------------------------ deterministic init ---------------------------
def init_params(key):
    keys = jax.random.split(key, 2 + LAYERS)
    pos = (jax.random.normal(keys[0], (S, D), jnp.float32) * 0.02)
    proj = (jax.random.normal(keys[1], (D, E), jnp.float32) * (D ** -0.5))
    lnf_g = jnp.ones((1, D), jnp.float32)
    lnf_b = jnp.zeros((1, D), jnp.float32)
    layers = []
    for l in range(LAYERS):
        k = jax.random.split(keys[2 + l], 6)
        layer = (
            jnp.ones((1, D), jnp.float32),                                   # ln1 gamma
            jnp.zeros((1, D), jnp.float32),                                  # ln1 beta
            jax.random.normal(k[0], (D, 3 * D), jnp.float32) * 0.02,         # Wqkv (pre-transposed)
            jax.random.normal(k[1], (1, 3 * D), jnp.float32) * 0.02,         # bqkv
            jax.random.normal(k[2], (D, D), jnp.float32) * 0.02,             # Wo (pre-transposed)
            jnp.zeros((1, D), jnp.float32),                                  # bo
            jnp.ones((1, D), jnp.float32),                                   # ln2 gamma
            jnp.zeros((1, D), jnp.float32),                                  # ln2 beta
            jax.random.normal(k[3], (D, MLP), jnp.float32) * 0.02,           # W_fc (pre-transposed)
            jnp.zeros((1, MLP), jnp.float32),                                # b_fc
            jax.random.normal(k[4], (MLP, D), jnp.float32) * 0.02,           # W_proj (pre-transposed)
            jnp.zeros((1, D), jnp.float32),                                  # b_proj
        )
        layers.append(layer)
    return pos, layers, lnf_g, lnf_b, proj


if __name__ == "__main__":
    root = jax.random.PRNGKey(0)
    k_prompts, k_params = jax.random.split(root)

    prompts = jax.random.normal(k_prompts, (B, S, D), jnp.float32) * 0.1
    tokenized_prompts = jnp.array(
        [[49406, 320, 1125, 49407, 0, 0, 0, 0],
         [49406, 320, 530, 269, 1125, 2368, 49407, 0]], dtype=jnp.int32)

    params = init_params(k_params)

    out = text_encoder_forward(prompts, tokenized_prompts, params)
    out = jax.block_until_ready(out)

    ref = ref_forward(prompts, tokenized_prompts, params)
    assert out.shape == (B, E)
    assert jnp.allclose(out, ref, atol=2e-3, rtol=2e-3), "mismatch vs reference"

    print("KERNEL_OK")
</pallas_src>

<mosaic_0001>
module attributes {stable_mosaic.version = 11 : i64} {
  func.func @text_encoder_kernel(%arg0: memref<2x1xi32, #tpu.memory_space<vmem>>, %arg1: memref<2x8x32xf32, #tpu.memory_space<vmem>>, %arg2: memref<8x32xf32, #tpu.memory_space<vmem>>, %arg3: memref<1x32xf32, #tpu.memory_space<vmem>>, %arg4: memref<1x32xf32, #tpu.memory_space<vmem>>, %arg5: memref<32x96xf32, #tpu.memory_space<vmem>>, %arg6: memref<1x96xf32, #tpu.memory_space<vmem>>, %arg7: memref<32x32xf32, #tpu.memory_space<vmem>>, %arg8: memref<1x32xf32, #tpu.memory_space<vmem>>, %arg9: memref<1x32xf32, #tpu.memory_space<vmem>>, %arg10: memref<1x32xf32, #tpu.memory_space<vmem>>, %arg11: memref<32x128xf32, #tpu.memory_space<vmem>>, %arg12: memref<1x128xf32, #tpu.memory_space<vmem>>, %arg13: memref<128x32xf32, #tpu.memory_space<vmem>>, %arg14: memref<1x32xf32, #tpu.memory_space<vmem>>, %arg15: memref<1x32xf32, #tpu.memory_space<vmem>>, %arg16: memref<1x32xf32, #tpu.memory_space<vmem>>, %arg17: memref<32x96xf32, #tpu.memory_space<vmem>>, %arg18: memref<1x96xf32, #tpu.memory_space<vmem>>, %arg19: memref<32x32xf32, #tpu.memory_space<vmem>>, %arg20: memref<1x32xf32, #tpu.memory_space<vmem>>, %arg21: memref<1x32xf32, #tpu.memory_space<vmem>>, %arg22: memref<1x32xf32, #tpu.memory_space<vmem>>, %arg23: memref<32x128xf32, #tpu.memory_space<vmem>>, %arg24: memref<1x128xf32, #tpu.memory_space<vmem>>, %arg25: memref<128x32xf32, #tpu.memory_space<vmem>>, %arg26: memref<1x32xf32, #tpu.memory_space<vmem>>, %arg27: memref<1x32xf32, #tpu.memory_space<vmem>>, %arg28: memref<1x32xf32, #tpu.memory_space<vmem>>, %arg29: memref<32x16xf32, #tpu.memory_space<vmem>>, %arg30: memref<2x16xf32, #tpu.memory_space<vmem>>, %arg31: memref<64x8xf32, #tpu.memory_space<vmem>>, %arg32: memref<16x32xf32, #tpu.memory_space<vmem>>) attributes {dimension_semantics = [], scalar_prefetch = 0 : i64, scratch_operands = 2 : i64, tpu.core_type = #tpu.core_type<tc>} {
    %0 = tpu.iota {dimensions = array<i32: 0>} : vector<8x8xi32>
    %1 = tpu.iota {dimensions = array<i32: 1>} : vector<8x8xi32>
    %2 = arith.cmpi sgt, %1, %0 : vector<8x8xi32>
    %cst = arith.constant -1.000000e+09 : f32
    %cst_0 = arith.constant 0.000000e+00 : f32
    %3 = vector.broadcast %cst : f32 to vector<8x8xf32>
    %4 = vector.broadcast %cst_0 : f32 to vector<8x8xf32>
    %5 = arith.select %2, %3, %4 : vector<8x8xi1>, vector<8x8xf32>
    %c0 = arith.constant 0 : index
    %c0_1 = arith.constant 0 : index
    %c0_2 = arith.constant 0 : index
    %6 = vector.load %arg1[%c0, %c0_1, %c0_2] : memref<2x8x32xf32, #tpu.memory_space<vmem>>, vector<2x8x32xf32>
    %c0_3 = arith.constant 0 : index
    %c0_4 = arith.constant 0 : index
    %7 = vector.load %arg2[%c0_3, %c0_4] : memref<8x32xf32, #tpu.memory_space<vmem>>, vector<8x32xf32>
    %8 = vector.shape_cast %7 : vector<8x32xf32> to vector<1x8x32xf32>
    %9 = vector.broadcast %8 : vector<1x8x32xf32> to vector<2x8x32xf32>
    %10 = arith.addf %6, %9 : vector<2x8x32xf32>
    %11 = vector.shape_cast %10 : vector<2x8x32xf32> to vector<16x32xf32>
    %c0_5 = arith.constant 0 : index
    %c0_6 = arith.constant 0 : index
    %12 = vector.load %arg3[%c0_5, %c0_6] : memref<1x32xf32, #tpu.memory_space<vmem>>, vector<1x32xf32>
    %c0_7 = arith.constant 0 : index
    %c0_8 = arith.constant 0 : index
    %13 = vector.load %arg4[%c0_7, %c0_8] : memref<1x32xf32, #tpu.memory_space<vmem>>, vector<1x32xf32>
    %c0_9 = arith.constant 0 : index
    %c0_10 = arith.constant 0 : index
    %14 = vector.load %arg5[%c0_9, %c0_10] : memref<32x96xf32, #tpu.memory_space<vmem>>, vector<32x96xf32>
    %c0_11 = arith.constant 0 : index
    %c0_12 = arith.constant 0 : index
    %15 = vector.load %arg6[%c0_11, %c0_12] : memref<1x96xf32, #tpu.memory_space<vmem>>, vector<1x96xf32>
    %c0_13 = arith.constant 0 : index
    %c0_14 = arith.constant 0 : index
    %16 = vector.load %arg7[%c0_13, %c0_14] : memref<32x32xf32, #tpu.memory_space<vmem>>, vector<32x32xf32>
    %c0_15 = arith.constant 0 : index
    %c0_16 = arith.constant 0 : index
    %17 = vector.load %arg8[%c0_15, %c0_16] : memref<1x32xf32, #tpu.memory_space<vmem>>, vector<1x32xf32>
    %c0_17 = arith.constant 0 : index
    %c0_18 = arith.constant 0 : index
    %18 = vector.load %arg9[%c0_17, %c0_18] : memref<1x32xf32, #tpu.memory_space<vmem>>, vector<1x32xf32>
    %c0_19 = arith.constant 0 : index
    %c0_20 = arith.constant 0 : index
    %19 = vector.load %arg10[%c0_19, %c0_20] : memref<1x32xf32, #tpu.memory_space<vmem>>, vector<1x32xf32>
    %c0_21 = arith.constant 0 : index
    %c0_22 = arith.constant 0 : index
    %20 = vector.load %arg11[%c0_21, %c0_22] : memref<32x128xf32, #tpu.memory_space<vmem>>, vector<32x128xf32>
    %c0_23 = arith.constant 0 : index
    %c0_24 = arith.constant 0 : index
    %21 = vector.load %arg12[%c0_23, %c0_24] : memref<1x128xf32, #tpu.memory_space<vmem>>, vector<1x128xf32>
    %c0_25 = arith.constant 0 : index
    %c0_26 = arith.constant 0 : index
    %22 = vector.load %arg13[%c0_25, %c0_26] : memref<128x32xf32, #tpu.memory_space<vmem>>, vector<128x32xf32>
    %c0_27 = arith.constant 0 : index
    %c0_28 = arith.constant 0 : index
    %23 = vector.load %arg14[%c0_27, %c0_28] : memref<1x32xf32, #tpu.memory_space<vmem>>, vector<1x32xf32>
    %cst_29 = arith.constant dense<0.000000e+00> : vector<16xf32>
    %24 = vector.multi_reduction <add>, %11, %cst_29 [1] : vector<16x32xf32> to vector<16xf32>
    %25 = vector.shape_cast %24 : vector<16xf32> to vector<16x1xf32>
    %cst_30 = arith.constant 3.200000e+01 : f32
    %26 = vector.broadcast %cst_30 : f32 to vector<16x1xf32>
    %27 = arith.divf %25, %26 : vector<16x1xf32>
    %28 = vector.broadcast %27 : vector<16x1xf32> to vector<16x32xf32>
    %29 = arith.subf %11, %28 : vector<16x32xf32>
    %30 = arith.mulf %29, %29 : vector<16x32xf32>
    %cst_31 = arith.constant dense<0.000000e+00> : vector<16xf32>
    %31 = vector.multi_reduction <add>, %30, %cst_31 [1] : vector<16x32xf32> to vector<16xf32>
    %32 = vector.shape_cast %31 : vector<16xf32> to vector<16x1xf32>
    %cst_32 = arith.constant 3.200000e+01 : f32
    %33 = vector.broadcast %cst_32 : f32 to vector<16x1xf32>
    %34 = arith.divf %32, %33 : vector<16x1xf32>
    %35 = vector.broadcast %27 : vector<16x1xf32> to vector<16x32xf32>
    %36 = arith.subf %11, %35 : vector<16x32xf32>
    %cst_33 = arith.constant 9.99999974E-6 : f32
    %37 = vector.broadcast %cst_33 : f32 to vector<16x1xf32>
    %38 = arith.addf %34, %37 : vector<16x1xf32>
    %39 = math.rsqrt %38 : vector<16x1xf32>
    %40 = vector.broadcast %39 : vector<16x1xf32> to vector<16x32xf32>
    %41 = arith.mulf %36, %40 : vector<16x32xf32>
    %42 = vector.broadcast %12 : vector<1x32xf32> to vector<16x32xf32>
    %43 = arith.mulf %41, %42 : vector<16x32xf32>
    %44 = vector.broadcast %13 : vector<1x32xf32> to vector<16x32xf32>
    %45 = arith.addf %43, %44 : vector<16x32xf32>
    %cst_34 = arith.constant dense<0.000000e+00> : vector<16x96xf32>
    %46 = tpu.matmul %45, %14, %cst_34 {dimension_numbers = #tpu.dot_dimension_numbers<[1], [0], [0], [1], [0, 0, 1, 1], [], []>} : vector<16x32xf32>, vector<32x96xf32>, vector<16x96xf32> -> vector<16x96xf32>
    %47 = vector.broadcast %15 : vector<1x96xf32> to vector<16x96xf32>
    %48 = arith.addf %46, %47 : vector<16x96xf32>
    %49 = vector.extract_strided_slice %48 {offsets = [0, 0], sizes = [16, 32], strides = [1, 1]} : vector<16x96xf32> to vector<16x32xf32>
    %50 = vector.shape_cast %49 : vector<16x32xf32> to vector<2x8x32xf32>
    %51 = vector.extract_strided_slice %48 {offsets = [0, 32], sizes = [16, 32], strides = [1, 1]} : vector<16x96xf32> to vector<16x32xf32>
    %52 = vector.shape_cast %51 : vector<16x32xf32> to vector<2x8x32xf32>
    %53 = vector.extract_strided_slice %48 {offsets = [0, 64], sizes = [16, 32], strides = [1, 1]} : vector<16x96xf32> to vector<16x32xf32>
    %54 = vector.shape_cast %53 : vector<16x32xf32> to vector<2x8x32xf32>
    %55 = vector.extract_strided_slice %50 {offsets = [0, 0, 0], sizes = [2, 8, 8], strides = [1, 1, 1]} : vector<2x8x32xf32> to vector<2x8x8xf32>
    %56 = vector.extract_strided_slice %52 {offsets = [0, 0, 0], sizes = [2, 8, 8], strides = [1, 1, 1]} : vector<2x8x32xf32> to vector<2x8x8xf32>
    "tpu.trace_start"() <{level = 10 : i32, message = "bqd,bkd->bqk"}> : () -> ()
    %cst_35 = arith.constant dense<0.000000e+00> : vector<2x8x8xf32>
    %57 = tpu.matmul %55, %56, %cst_35 {dimension_numbers = #tpu.dot_dimension_numbers<[2], [2], [1], [1], [0, 0, 0, 1, 1, 1], [0], [0]>} : vector<2x8x8xf32>, vector<2x8x8xf32>, vector<2x8x8xf32> -> vector<2x8x8xf32>
    "tpu.trace_stop"() : () -> ()
    %cst_36 = arith.constant 0.353553385 : f32
    %58 = vector.broadcast %cst_36 : f32 to vector<2x8x8xf32>
    %59 = arith.mulf %57, %58 : vector<2x8x8xf32>
    %60 = vector.shape_cast %5 : vector<8x8xf32> to vector<1x8x8xf32>
    %61 = vector.broadcast %60 : vector<1x8x8xf32> to vector<2x8x8xf32>
    %62 = arith.addf %59, %61 : vector<2x8x8xf32>
    %63 = vector.shape_cast %62 : vector<2x8x8xf32> to vector<16x8xf32>
    %c0_37 = arith.constant 0 : index
    %c0_38 = arith.constant 0 : index
    %64 = vector.load %arg31[%c0_37, %c0_38] : memref<64x8xf32, #tpu.memory_space<vmem>>, vector<16x8xf32>
    tpu.vector_store %arg31[%c0_37, %c0_38], %63 {strides = array<i32>} : memref<64x8xf32, #tpu.memory_space<vmem>>, vector<16x8xf32>,
    %65 = vector.extract_strided_slice %50 {offsets = [0, 0, 8], sizes = [2, 8, 8], strides = [1, 1, 1]} : vector<2x8x32xf32> to vector<2x8x8xf32>
    %66 = vector.extract_strided_slice %52 {offsets = [0, 0, 8], sizes = [2, 8, 8], strides = [1, 1, 1]} : vector<2x8x32xf32> to vector<2x8x8xf32>
    "tpu.trace_start"() <{level = 10 : i32, message = "bqd,bkd->bqk"}> : () -> ()
    %cst_39 = arith.constant dense<0.000000e+00> : vector<2x8x8xf32>
    %67 = tpu.matmul %65, %66, %cst_39 {dimension_numbers = #tpu.dot_dimension_numbers<[2], [2], [1], [1], [0, 0, 0, 1, 1, 1], [0], [0]>} : vector<2x8x8xf32>, vector<2x8x8xf32>, vector<2x8x8xf32> -> vector<2x8x8xf32>
    "tpu.trace_stop"() : () -> ()
    %cst_40 = arith.constant 0.353553385 : f32
    %68 = vector.broadcast %cst_40 : f32 to vector<2x8x8xf32>
    %69 = arith.mulf %67, %68 : vector<2x8x8xf32>
    %70 = vector.shape_cast %5 : vector<8x8xf32> to vector<1x8x8xf32>
    %71 = vector.broadcast %70 : vector<1x8x8xf32> to vector<2x8x8xf32>
    %72 = arith.addf %69, %71 : vector<2x8x8xf32>
    %73 = vector.shape_cast %72 : vector<2x8x8xf32> to vector<16x8xf32>
    %c16 = arith.constant 16 : index
    %c0_41 = arith.constant 0 : index
    %74 = vector.load %arg31[%c16, %c0_41] : memref<64x8xf32, #tpu.memory_space<vmem>>, vector<16x8xf32>
    tpu.vector_store %arg31[%c16, %c0_41], %73 {strides = array<i32>} : memref<64x8xf32, #tpu.memory_space<vmem>>, vector<16x8xf32>,
    %75 = vector.extract_strided_slice %50 {offsets = [0, 0, 16], sizes = [2, 8, 8], strides = [1, 1, 1]} : vector<2x8x32xf32> to vector<2x8x8xf32>
    %76 = vector.extract_strided_slice %52 {offsets = [0, 0, 16], sizes = [2, 8, 8], strides = [1, 1, 1]} : vector<2x8x32xf32> to vector<2x8x8xf32>
    "tpu.trace_start"() <{level = 10 : i32, message = "bqd,bkd->bqk"}> : () -> ()
    %cst_42 = arith.constant dense<0.000000e+00> : vector<2x8x8xf32>
    %77 = tpu.matmul %75, %76, %cst_42 {dimension_numbers = #tpu.dot_dimension_numbers<[2], [2], [1], [1], [0, 0, 0, 1, 1, 1], [0], [0]>} : vector<2x8x8xf32>, vector<2x8x8xf32>, vector<2x8x8xf32> -> vector<2x8x8xf32>
    "tpu.trace_stop"() : () -> ()
    %cst_43 = arith.constant 0.353553385 : f32
    %78 = vector.broadcast %cst_43 : f32 to vector<2x8x8xf32>
    %79 = arith.mulf %77, %78 : vector<2x8x8xf32>
    %80 = vector.shape_cast %5 : vector<8x8xf32> to vector<1x8x8xf32>
    %81 = vector.broadcast %80 : vector<1x8x8xf32> to vector<2x8x8xf32>
    %82 = arith.addf %79, %81 : vector<2x8x8xf32>
    %83 = vector.shape_cast %82 : vector<2x8x8xf32> to vector<16x8xf32>
    %c32 = arith.constant 32 : index
    %c0_44 = arith.constant 0 : index
    %84 = vector.load %arg31[%c32, %c0_44] : memref<64x8xf32, #tpu.memory_space<vmem>>, vector<16x8xf32>
    tpu.vector_store %arg31[%c32, %c0_44], %83 {strides = array<i32>} : memref<64x8xf32, #tpu.memory_space<vmem>>, vector<16x8xf32>,
    %85 = vector.extract_strided_slice %50 {offsets = [0, 0, 24], sizes = [2, 8, 8], strides = [1, 1, 1]} : vector<2x8x32xf32> to vector<2x8x8xf32>
    %86 = vector.extract_strided_slice %52 {offsets = [0, 0, 24], sizes = [2, 8, 8], strides = [1, 1, 1]} : vector<2x8x32xf32> to vector<2x8x8xf32>
    "tpu.trace_start"() <{level = 10 : i32, message = "bqd,bkd->bqk"}> : () -> ()
    %cst_45 = arith.constant dense<0.000000e+00> : vector<2x8x8xf32>
    %87 = tpu.matmul %85, %86, %cst_45 {dimension_numbers = #tpu.dot_dimension_numbers<[2], [2], [1], [1], [0, 0, 0, 1, 1, 1], [0], [0]>} : vector<2x8x8xf32>, vector<2x8x8xf32>, vector<2x8x8xf32> -> vector<2x8x8xf32>
    "tpu.trace_stop"() : () -> ()
    %cst_46 = arith.constant 0.353553385 : f32
    %88 = vector.broadcast %cst_46 : f32 to vector<2x8x8xf32>
    %89 = arith.mulf %87, %88 : vector<2x8x8xf32>
    %90 = vector.shape_cast %5 : vector<8x8xf32> to vector<1x8x8xf32>
    %91 = vector.broadcast %90 : vector<1x8x8xf32> to vector<2x8x8xf32>
    %92 = arith.addf %89, %91 : vector<2x8x8xf32>
    %93 = vector.shape_cast %92 : vector<2x8x8xf32> to vector<16x8xf32>
    %c48 = arith.constant 48 : index
    %c0_47 = arith.constant 0 : index
    %94 = vector.load %arg31[%c48, %c0_47] : memref<64x8xf32, #tpu.memory_space<vmem>>, vector<16x8xf32>
    tpu.vector_store %arg31[%c48, %c0_47], %93 {strides = array<i32>} : memref<64x8xf32, #tpu.memory_space<vmem>>, vector<16x8xf32>,
    %c0_48 = arith.constant 0 : index
    %c0_49 = arith.constant 0 : index
    %95 = vector.load %arg31[%c0_48, %c0_49] : memref<64x8xf32, #tpu.memory_space<vmem>>, vector<64x8xf32>
    %cst_50 = arith.constant dense<0xFF800000> : vector<64xf32>
    %96 = vector.multi_reduction <maximumf>, %95, %cst_50 [1] : vector<64x8xf32> to vector<64xf32>
    %97 = vector.shape_cast %96 : vector<64xf32> to vector<64x1xf32>
    %98 = vector.broadcast %97 : vector<64x1xf32> to vector<64x8xf32>
    %99 = arith.subf %95, %98 : vector<64x8xf32>
    %100 = math.exp %99 : vector<64x8xf32>
    %cst_51 = arith.constant dense<0.000000e+00> : vector<64xf32>
    %101 = vector.multi_reduction <add>, %100, %cst_51 [1] : vector<64x8xf32> to vector<64xf32>
    %102 = vector.shape_cast %101 : vector<64xf32> to vector<64x1xf32>
    %103 = vector.broadcast %102 : vector<64x1xf32> to vector<64x8xf32>
    %104 = arith.divf %100, %103 : vector<64x8xf32>
    %105 = vector.extract_strided_slice %104 {offsets = [0, 0], sizes = [16, 8], strides = [1, 1]} : vector<64x8xf32> to vector<16x8xf32>
    %106 = vector.shape_cast %105 : vector<16x8xf32> to vector<2x8x8xf32>
    %107 = vector.extract_strided_slice %54 {offsets = [0, 0, 0], sizes = [2, 8, 8], strides = [1, 1, 1]} : vector<2x8x32xf32> to vector<2x8x8xf32>
    "tpu.trace_start"() <{level = 10 : i32, message = "bqk,bkd->bqd"}> : () -> ()
    %cst_52 = arith.constant dense<0.000000e+00> : vector<2x8x8xf32>
    %108 = tpu.matmul %106, %107, %cst_52 {dimension_numbers = #tpu.dot_dimension_numbers<[2], [1], [1], [2], [0, 0, 0, 1, 1, 2], [0], [0]>} : vector<2x8x8xf32>, vector<2x8x8xf32>, vector<2x8x8xf32> -> vector<2x8x8xf32>
    "tpu.trace_stop"() : () -> ()
    %109 = vector.shape_cast %108 : vector<2x8x8xf32> to vector<16x8xf32>
    %c0_53 = arith.constant 0 : index
    %c0_54 = arith.constant 0 : index
    %110 = vector.load %arg32[%c0_53, %c0_54] : memref<16x32xf32, #tpu.memory_space<vmem>>, vector<16x8xf32>
    tpu.vector_store %arg32[%c0_53, %c0_54], %109 {strides = array<i32>} : memref<16x32xf32, #tpu.memory_space<vmem>>, vector<16x8xf32>,
    %111 = vector.extract_strided_slice %104 {offsets = [16, 0], sizes = [16, 8], strides = [1, 1]} : vector<64x8xf32> to vector<16x8xf32>
    %112 = vector.shape_cast %111 : vector<16x8xf32> to vector<2x8x8xf32>
    %113 = vector.extract_strided_slice %54 {offsets = [0, 0, 8], sizes = [2, 8, 8], strides = [1, 1, 1]} : vector<2x8x32xf32> to vector<2x8x8xf32>
    "tpu.trace_start"() <{level = 10 : i32, message = "bqk,bkd->bqd"}> : () -> ()
    %cst_55 = arith.constant dense<0.000000e+00> : vector<2x8x8xf32>
    %114 = tpu.matmul %112, %113, %cst_55 {dimension_numbers = #tpu.dot_dimension_numbers<[2], [1], [1], [2], [0, 0, 0, 1, 1, 2], [0], [0]>} : vector<2x8x8xf32>, vector<2x8x8xf32>, vector<2x8x8xf32> -> vector<2x8x8xf32>
    "tpu.trace_stop"() : () -> ()
    %115 = vector.shape_cast %114 : vector<2x8x8xf32> to vector<16x8xf32>
    %c0_56 = arith.constant 0 : index
    %c8 = arith.constant 8 : index
    %116 = vector.load %arg32[%c0_56, %c8] : memref<16x32xf32, #tpu.memory_space<vmem>>, vector<16x8xf32>
    tpu.vector_store %arg32[%c0_56, %c8], %115 {strides = array<i32>} : memref<16x32xf32, #tpu.memory_space<vmem>>, vector<16x8xf32>,
    %117 = vector.extract_strided_slice %104 {offsets = [32, 0], sizes = [16, 8], strides = [1, 1]} : vector<64x8xf32> to vector<16x8xf32>
    %118 = vector.shape_cast %117 : vector<16x8xf32> to vector<2x8x8xf32>
    %119 = vector.extract_strided_slice %54 {offsets = [0, 0, 16], sizes = [2, 8, 8], strides = [1, 1, 1]} : vector<2x8x32xf32> to vector<2x8x8xf32>
    "tpu.trace_start"() <{level = 10 : i32, message = "bqk,bkd->bqd"}> : () -> ()
    %cst_57 = arith.constant dense<0.000000e+00> : vector<2x8x8xf32>
    %120 = tpu.matmul %118, %119, %cst_57 {dimension_numbers = #tpu.dot_dimension_numbers<[2], [1], [1], [2], [0, 0, 0, 1, 1, 2], [0], [0]>} : vector<2x8x8xf32>, vector<2x8x8xf32>, vector<2x8x8xf32> -> vector<2x8x8xf32>
    "tpu.trace_stop"() : () -> ()
    %121 = vector.shape_cast %120 : vector<2x8x8xf32> to vector<16x8xf32>
    %c0_58 = arith.constant 0 : index
    %c16_59 = arith.constant 16 : index
    %122 = vector.load %arg32[%c0_58, %c16_59] : memref<16x32xf32, #tpu.memory_space<vmem>>, vector<16x8xf32>
    tpu.vector_store %arg32[%c0_58, %c16_59], %121 {strides = array<i32>} : memref<16x32xf32, #tpu.memory_space<vmem>>, vector<16x8xf32>,
    %123 = vector.extract_strided_slice %104 {offsets = [48, 0], sizes = [16, 8], strides = [1, 1]} : vector<64x8xf32> to vector<16x8xf32>
    %124 = vector.shape_cast %123 : vector<16x8xf32> to vector<2x8x8xf32>
    %125 = vector.extract_strided_slice %54 {offsets = [0, 0, 24], sizes = [2, 8, 8], strides = [1, 1, 1]} : vector<2x8x32xf32> to vector<2x8x8xf32>
    "tpu.trace_start"() <{level = 10 : i32, message = "bqk,bkd->bqd"}> : () -> ()
    %cst_60 = arith.constant dense<0.000000e+00> : vector<2x8x8xf32>
    %126 = tpu.matmul %124, %125, %cst_60 {dimension_numbers = #tpu.dot_dimension_numbers<[2], [1], [1], [2], [0, 0, 0, 1, 1, 2], [0], [0]>} : vector<2x8x8xf32>, vector<2x8x8xf32>, vector<2x8x8xf32> -> vector<2x8x8xf32>
    "tpu.trace_stop"() : () -> ()
    %127 = vector.shape_cast %126 : vector<2x8x8xf32> to vector<16x8xf32>
    %c0_61 = arith.constant 0 : index
    %c24 = arith.constant 24 : index
    %128 = vector.load %arg32[%c0_61, %c24] : memref<16x32xf32, #tpu.memory_space<vmem>>, vector<16x8xf32>
    tpu.vector_store %arg32[%c0_61, %c24], %127 {strides = array<i32>} : memref<16x32xf32, #tpu.memory_space<vmem>>, vector<16x8xf32>,
    %c0_62 = arith.constant 0 : index
    %c0_63 = arith.constant 0 : index
    %129 = vector.load %arg32[%c0_62, %c0_63] : memref<16x32xf32, #tpu.memory_space<vmem>>, vector<16x32xf32>
    %cst_64 = arith.constant dense<0.000000e+00> : vector<16x32xf32>
    %130 = tpu.matmul %129, %16, %cst_64 {dimension_numbers = #tpu.dot_dimension_numbers<[1], [0], [0], [1], [0, 0, 1, 1], [], []>} : vector<16x32xf32>, vector<32x32xf32>, vector<16x32xf32> -> vector<16x32xf32>
    %131 = vector.broadcast %17 : vector<1x32xf32> to vector<16x32xf32>
    %132 = arith.addf %130, %131 : vector<16x32xf32>
    %133 = arith.addf %11, %132 : vector<16x32xf32>
    %cst_65 = arith.constant dense<0.000000e+00> : vector<16xf32>
    %134 = vector.multi_reduction <add>, %133, %cst_65 [1] : vector<16x32xf32> to vector<16xf32>
    %135 = vector.shape_cast %134 : vector<16xf32> to vector<16x1xf32>
    %cst_66 = arith.constant 3.200000e+01 : f32
    %136 = vector.broadcast %cst_66 : f32 to vector<16x1xf32>
    %137 = arith.divf %135, %136 : vector<16x1xf32>
    %138 = vector.broadcast %137 : vector<16x1xf32> to vector<16x32xf32>
    %139 = arith.subf %133, %138 : vector<16x32xf32>
    %140 = arith.mulf %139, %139 : vector<16x32xf32>
    %cst_67 = arith.constant dense<0.000000e+00> : vector<16xf32>
    %141 = vector.multi_reduction <add>, %140, %cst_67 [1] : vector<16x32xf32> to vector<16xf32>
    %142 = vector.shape_cast %141 : vector<16xf32> to vector<16x1xf32>
    %cst_68 = arith.constant 3.200000e+01 : f32
    %143 = vector.broadcast %cst_68 : f32 to vector<16x1xf32>
    %144 = arith.divf %142, %143 : vector<16x1xf32>
    %145 = vector.broadcast %137 : vector<16x1xf32> to vector<16x32xf32>
    %146 = arith.subf %133, %145 : vector<16x32xf32>
    %cst_69 = arith.constant 9.99999974E-6 : f32
    %147 = vector.broadcast %cst_69 : f32 to vector<16x1xf32>
    %148 = arith.addf %144, %147 : vector<16x1xf32>
    %149 = math.rsqrt %148 : vector<16x1xf32>
    %150 = vector.broadcast %149 : vector<16x1xf32> to vector<16x32xf32>
    %151 = arith.mulf %146, %150 : vector<16x32xf32>
    %152 = vector.broadcast %18 : vector<1x32xf32> to vector<16x32xf32>
    %153 = arith.mulf %151, %152 : vector<16x32xf32>
    %154 = vector.broadcast %19 : vector<1x32xf32> to vector<16x32xf32>
    %155 = arith.addf %153, %154 : vector<16x32xf32>
    %cst_70 = arith.constant dense<0.000000e+00> : vector<16x128xf32>
    %156 = tpu.matmul %155, %20, %cst_70 {dimension_numbers = #tpu.dot_dimension_numbers<[1], [0], [0], [1], [0, 0, 1, 1], [], []>} : vector<16x32xf32>, vector<32x128xf32>, vector<16x128xf32> -> vector<16x128xf32>
    %157 = vector.broadcast %21 : vector<1x128xf32> to vector<16x128xf32>
    %158 = arith.addf %156, %157 : vector<16x128xf32>
    %cst_71 = arith.constant -1.702000e+00 : f32
    %159 = vector.broadcast %cst_71 : f32 to vector<16x128xf32>
    %160 = arith.mulf %159, %158 : vector<16x128xf32>
    %161 = math.exp %160 : vector<16x128xf32>
    %cst_72 = arith.constant 1.000000e+00 : f32
    %162 = vector.broadcast %cst_72 : f32 to vector<16x128xf32>
    %163 = arith.addf %162, %161 : vector<16x128xf32>
    %cst_73 = arith.constant 1.000000e+00 : f32
    %164 = vector.broadcast %cst_73 : f32 to vector<16x128xf32>
    %165 = arith.divf %164, %163 : vector<16x128xf32>
    %166 = arith.mulf %158, %165 : vector<16x128xf32>
    %cst_74 = arith.constant dense<0.000000e+00> : vector<16x32xf32>
    %167 = tpu.matmul %166, %22, %cst_74 {dimension_numbers = #tpu.dot_dimension_numbers<[1], [0], [0], [1], [0, 0, 1, 1], [], []>} : vector<16x128xf32>, vector<128x32xf32>, vector<16x32xf32> -> vector<16x32xf32>
    %168 = arith.addf %133, %167 : vector<16x32xf32>
    %169 = vector.broadcast %23 : vector<1x32xf32> to vector<16x32xf32>
    %170 = arith.addf %168, %169 : vector<16x32xf32>
    %c0_75 = arith.constant 0 : index
    %c0_76 = arith.constant 0 : index
    %171 = vector.load %arg15[%c0_75, %c0_76] : memref<1x32xf32, #tpu.memory_space<vmem>>, vector<1x32xf32>
    %c0_77 = arith.constant 0 : index
    %c0_78 = arith.constant 0 : index
    %172 = vector.load %arg16[%c0_77, %c0_78] : memref<1x32xf32, #tpu.memory_space<vmem>>, vector<1x32xf32>
    %c0_79 = arith.constant 0 : index
    %c0_80 = arith.constant 0 : index
    %173 = vector.load %arg17[%c0_79, %c0_80] : memref<32x96xf32, #tpu.memory_space<vmem>>, vector<32x96xf32>
    %c0_81 = arith.constant 0 : index
    %c0_82 = arith.constant 0 : index
    %174 = vector.load %arg18[%c0_81, %c0_82] : memref<1x96xf32, #tpu.memory_space<vmem>>, vector<1x96xf32>
    %c0_83 = arith.constant 0 : index
    %c0_84 = arith.constant 0 : index
    %175 = vector.load %arg19[%c0_83, %c0_84] : memref<32x32xf32, #tpu.memory_space<vmem>>, vector<32x32xf32>
    %c0_85 = arith.constant 0 : index
    %c0_86 = arith.constant 0 : index
    %176 = vector.load %arg20[%c0_85, %c0_86] : memref<1x32xf32, #tpu.memory_space<vmem>>, vector<1x32xf32>
    %c0_87 = arith.constant 0 : index
    %c0_88 = arith.constant 0 : index
    %177 = vector.load %arg21[%c0_87, %c0_88] : memref<1x32xf32, #tpu.memory_space<vmem>>, vector<1x32xf32>
    %c0_89 = arith.constant 0 : index
    %c0_90 = arith.constant 0 : index
    %178 = vector.load %arg22[%c0_89, %c0_90] : memref<1x32xf32, #tpu.memory_space<vmem>>, vector<1x32xf32>
    %c0_91 = arith.constant 0 : index
    %c0_92 = arith.constant 0 : index
    %179 = vector.load %arg23[%c0_91, %c0_92] : memref<32x128xf32, #tpu.memory_space<vmem>>, vector<32x128xf32>
    %c0_93 = arith.constant 0 : index
    %c0_94 = arith.constant 0 : index
    %180 = vector.load %arg24[%c0_93, %c0_94] : memref<1x128xf32, #tpu.memory_space<vmem>>, vector<1x128xf32>
    %c0_95 = arith.constant 0 : index
    %c0_96 = arith.constant 0 : index
    %181 = vector.load %arg25[%c0_95, %c0_96] : memref<128x32xf32, #tpu.memory_space<vmem>>, vector<128x32xf32>
    %c0_97 = arith.constant 0 : index
    %c0_98 = arith.constant 0 : index
    %182 = vector.load %arg26[%c0_97, %c0_98] : memref<1x32xf32, #tpu.memory_space<vmem>>, vector<1x32xf32>
    %cst_99 = arith.constant dense<0.000000e+00> : vector<16xf32>
    %183 = vector.multi_reduction <add>, %170, %cst_99 [1] : vector<16x32xf32> to vector<16xf32>
    %184 = vector.shape_cast %183 : vector<16xf32> to vector<16x1xf32>
    %cst_100 = arith.constant 3.200000e+01 : f32
    %185 = vector.broadcast %cst_100 : f32 to vector<16x1xf32>
    %186 = arith.divf %184, %185 : vector<16x1xf32>
    %187 = vector.broadcast %186 : vector<16x1xf32> to vector<16x32xf32>
    %188 = arith.subf %170, %187 : vector<16x32xf32>
    %189 = arith.mulf %188, %188 : vector<16x32xf32>
    %cst_101 = arith.constant dense<0.000000e+00> : vector<16xf32>
    %190 = vector.multi_reduction <add>, %189, %cst_101 [1] : vector<16x32xf32> to vector<16xf32>
    %191 = vector.shape_cast %190 : vector<16xf32> to vector<16x1xf32>
    %cst_102 = arith.constant 3.200000e+01 : f32
    %192 = vector.broadcast %cst_102 : f32 to vector<16x1xf32>
    %193 = arith.divf %191, %192 : vector<16x1xf32>
    %194 = vector.broadcast %186 : vector<16x1xf32> to vector<16x32xf32>
    %195 = arith.subf %170, %194 : vector<16x32xf32>
    %cst_103 = arith.constant 9.99999974E-6 : f32
    %196 = vector.broadcast %cst_103 : f32 to vector<16x1xf32>
    %197 = arith.addf %193, %196 : vector<16x1xf32>
    %198 = math.rsqrt %197 : vector<16x1xf32>
    %199 = vector.broadcast %198 : vector<16x1xf32> to vector<16x32xf32>
    %200 = arith.mulf %195, %199 : vector<16x32xf32>
    %201 = vector.broadcast %171 : vector<1x32xf32> to vector<16x32xf32>
    %202 = arith.mulf %200, %201 : vector<16x32xf32>
    %203 = vector.broadcast %172 : vector<1x32xf32> to vector<16x32xf32>
    %204 = arith.addf %202, %203 : vector<16x32xf32>
    %cst_104 = arith.constant dense<0.000000e+00> : vector<16x96xf32>
    %205 = tpu.matmul %204, %173, %cst_104 {dimension_numbers = #tpu.dot_dimension_numbers<[1], [0], [0], [1], [0, 0, 1, 1], [], []>} : vector<16x32xf32>, vector<32x96xf32>, vector<16x96xf32> -> vector<16x96xf32>
    %206 = vector.broadcast %174 : vector<1x96xf32> to vector<16x96xf32>
    %207 = arith.addf %205, %206 : vector<16x96xf32>
    %208 = vector.extract_strided_slice %207 {offsets = [0, 0], sizes = [16, 32], strides = [1, 1]} : vector<16x96xf32> to vector<16x32xf32>
    %209 = vector.shape_cast %208 : vector<16x32xf32> to vector<2x8x32xf32>
    %210 = vector.extract_strided_slice %207 {offsets = [0, 32], sizes = [16, 32], strides = [1, 1]} : vector<16x96xf32> to vector<16x32xf32>
    %211 = vector.shape_cast %210 : vector<16x32xf32> to vector<2x8x32xf32>
    %212 = vector.extract_strided_slice %207 {offsets = [0, 64], sizes = [16, 32], strides = [1, 1]} : vector<16x96xf32> to vector<16x32xf32>
    %213 = vector.shape_cast %212 : vector<16x32xf32> to vector<2x8x32xf32>
    %214 = vector.extract_strided_slice %209 {offsets = [0, 0, 0], sizes = [2, 8, 8], strides = [1, 1, 1]} : vector<2x8x32xf32> to vector<2x8x8xf32>
    %215 = vector.extract_strided_slice %211 {offsets = [0, 0, 0], sizes = [2, 8, 8], strides = [1, 1, 1]} : vector<2x8x32xf32> to vector<2x8x8xf32>
    "tpu.trace_start"() <{level = 10 : i32, message = "bqd,bkd->bqk"}> : () -> ()
    %cst_105 = arith.constant dense<0.000000e+00> : vector<2x8x8xf32>
    %216 = tpu.matmul %214, %215, %cst_105 {dimension_numbers = #tpu.dot_dimension_numbers<[2], [2], [1], [1], [0, 0, 0, 1, 1, 1], [0], [0]>} : vector<2x8x8xf32>, vector<2x8x8xf32>, vector<2x8x8xf32> -> vector<2x8x8xf32>
    "tpu.trace_stop"() : () -> ()
    %cst_106 = arith.constant 0.353553385 : f32
    %217 = vector.broadcast %cst_106 : f32 to vector<2x8x8xf32>
    %218 = arith.mulf %216, %217 : vector<2x8x8xf32>
    %219 = vector.shape_cast %5 : vector<8x8xf32> to vector<1x8x8xf32>
    %220 = vector.broadcast %219 : vector<1x8x8xf32> to vector<2x8x8xf32>
    %221 = arith.addf %218, %220 : vector<2x8x8xf32>
    %222 = vector.shape_cast %221 : vector<2x8x8xf32> to vector<16x8xf32>
    %c0_107 = arith.constant 0 : index
    %c0_108 = arith.constant 0 : index
    %223 = vector.load %arg31[%c0_107, %c0_108] : memref<64x8xf32, #tpu.memory_space<vmem>>, vector<16x8xf32>
    tpu.vector_store %arg31[%c0_107, %c0_108], %222 {strides = array<i32>} : memref<64x8xf32, #tpu.memory_space<vmem>>, vector<16x8xf32>,
    %224 = vector.extract_strided_slice %209 {offsets = [0, 0, 8], sizes = [2, 8, 8], strides = [1, 1, 1]} : vector<2x8x32xf32> to vector<2x8x8xf32>
    %225 = vector.extract_strided_slice %211 {offsets = [0, 0, 8], sizes = [2, 8, 8], strides = [1, 1, 1]} : vector<2x8x32xf32> to vector<2x8x8xf32>
    "tpu.trace_start"() <{level = 10 : i32, message = "bqd,bkd->bqk"}> : () -> ()
    %cst_109 = arith.constant dense<0.000000e+00> : vector<2x8x8xf32>
    %226 = tpu.matmul %224, %225, %cst_109 {dimension_numbers = #tpu.dot_dimension_numbers<[2], [2], [1], [1], [0, 0, 0, 1, 1, 1], [0], [0]>} : vector<2x8x8xf32>, vector<2x8x8xf32>, vector<2x8x8xf32> -> vector<2x8x8xf32>
    "tpu.trace_stop"() : () -> ()
    %cst_110 = arith.constant 0.353553385 : f32
    %227 = vector.broadcast %cst_110 : f32 to vector<2x8x8xf32>
    %228 = arith.mulf %226, %227 : vector<2x8x8xf32>
    %229 = vector.shape_cast %5 : vector<8x8xf32> to vector<1x8x8xf32>
    %230 = vector.broadcast %229 : vector<1x8x8xf32> to vector<2x8x8xf32>
    %231 = arith.addf %228, %230 : vector<2x8x8xf32>
    %232 = vector.shape_cast %231 : vector<2x8x8xf32> to vector<16x8xf32>
    %c16_111 = arith.constant 16 : index
    %c0_112 = arith.constant 0 : index
    %233 = vector.load %arg31[%c16_111, %c0_112] : memref<64x8xf32, #tpu.memory_space<vmem>>, vector<16x8xf32>
    tpu.vector_store %arg31[%c16_111, %c0_112], %232 {strides = array<i32>} : memref<64x8xf32, #tpu.memory_space<vmem>>, vector<16x8xf32>,
    %234 = vector.extract_strided_slice %209 {offsets = [0, 0, 16], sizes = [2, 8, 8], strides = [1, 1, 1]} : vector<2x8x32xf32> to vector<2x8x8xf32>
    %235 = vector.extract_strided_slice %211 {offsets = [0, 0, 16], sizes = [2, 8, 8], strides = [1, 1, 1]} : vector<2x8x32xf32> to vector<2x8x8xf32>
    "tpu.trace_start"() <{level = 10 : i32, message = "bqd,bkd->bqk"}> : () -> ()
    %cst_113 = arith.constant dense<0.000000e+00> : vector<2x8x8xf32>
    %236 = tpu.matmul %234, %235, %cst_113 {dimension_numbers = #tpu.dot_dimension_numbers<[2], [2], [1], [1], [0, 0, 0, 1, 1, 1], [0], [0]>} : vector<2x8x8xf32>, vector<2x8x8xf32>, vector<2x8x8xf32> -> vector<2x8x8xf32>
    "tpu.trace_stop"() : () -> ()
    %cst_114 = arith.constant 0.353553385 : f32
    %237 = vector.broadcast %cst_114 : f32 to vector<2x8x8xf32>
    %238 = arith.mulf %236, %237 : vector<2x8x8xf32>
    %239 = vector.shape_cast %5 : vector<8x8xf32> to vector<1x8x8xf32>
    %240 = vector.broadcast %239 : vector<1x8x8xf32> to vector<2x8x8xf32>
    %241 = arith.addf %238, %240 : vector<2x8x8xf32>
    %242 = vector.shape_cast %241 : vector<2x8x8xf32> to vector<16x8xf32>
    %c32_115 = arith.constant 32 : index
    %c0_116 = arith.constant 0 : index
    %243 = vector.load %arg31[%c32_115, %c0_116] : memref<64x8xf32, #tpu.memory_space<vmem>>, vector<16x8xf32>
    tpu.vector_store %arg31[%c32_115, %c0_116], %242 {strides = array<i32>} : memref<64x8xf32, #tpu.memory_space<vmem>>, vector<16x8xf32>,
    %244 = vector.extract_strided_slice %209 {offsets = [0, 0, 24], sizes = [2, 8, 8], strides = [1, 1, 1]} : vector<2x8x32xf32> to vector<2x8x8xf32>
    %245 = vector.extract_strided_slice %211 {offsets = [0, 0, 24], sizes = [2, 8, 8], strides = [1, 1, 1]} : vector<2x8x32xf32> to vector<2x8x8xf32>
    "tpu.trace_start"() <{level = 10 : i32, message = "bqd,bkd->bqk"}> : () -> ()
    %cst_117 = arith.constant dense<0.000000e+00> : vector<2x8x8xf32>
    %246 = tpu.matmul %244, %245, %cst_117 {dimension_numbers = #tpu.dot_dimension_numbers<[2], [2], [1], [1], [0, 0, 0, 1, 1, 1], [0], [0]>} : vector<2x8x8xf32>, vector<2x8x8xf32>, vector<2x8x8xf32> -> vector<2x8x8xf32>
    "tpu.trace_stop"() : () -> ()
    %cst_118 = arith.constant 0.353553385 : f32
    %247 = vector.broadcast %cst_118 : f32 to vector<2x8x8xf32>
    %248 = arith.mulf %246, %247 : vector<2x8x8xf32>
    %249 = vector.shape_cast %5 : vector<8x8xf32> to vector<1x8x8xf32>
    %250 = vector.broadcast %249 : vector<1x8x8xf32> to vector<2x8x8xf32>
    %251 = arith.addf %248, %250 : vector<2x8x8xf32>
    %252 = vector.shape_cast %251 : vector<2x8x8xf32> to vector<16x8xf32>
    %c48_119 = arith.constant 48 : index
    %c0_120 = arith.constant 0 : index
    %253 = vector.load %arg31[%c48_119, %c0_120] : memref<64x8xf32, #tpu.memory_space<vmem>>, vector<16x8xf32>
    tpu.vector_store %arg31[%c48_119, %c0_120], %252 {strides = array<i32>} : memref<64x8xf32, #tpu.memory_space<vmem>>, vector<16x8xf32>,
    %c0_121 = arith.constant 0 : index
    %c0_122 = arith.constant 0 : index
    %254 = vector.load %arg31[%c0_121, %c0_122] : memref<64x8xf32, #tpu.memory_space<vmem>>, vector<64x8xf32>
    %cst_123 = arith.constant dense<0xFF800000> : vector<64xf32>
    %255 = vector.multi_reduction <maximumf>, %254, %cst_123 [1] : vector<64x8xf32> to vector<64xf32>
    %256 = vector.shape_cast %255 : vector<64xf32> to vector<64x1xf32>
    %257 = vector.broadcast %256 : vector<64x1xf32> to vector<64x8xf32>
    %258 = arith.subf %254, %257 : vector<64x8xf32>
    %259 = math.exp %258 : vector<64x8xf32>
    %cst_124 = arith.constant dense<0.000000e+00> : vector<64xf32>
    %260 = vector.multi_reduction <add>, %259, %cst_124 [1] : vector<64x8xf32> to vector<64xf32>
    %261 = vector.shape_cast %260 : vector<64xf32> to vector<64x1xf32>
    %262 = vector.broadcast %261 : vector<64x1xf32> to vector<64x8xf32>
    %263 = arith.divf %259, %262 : vector<64x8xf32>
    %264 = vector.extract_strided_slice %263 {offsets = [0, 0], sizes = [16, 8], strides = [1, 1]} : vector<64x8xf32> to vector<16x8xf32>
    %265 = vector.shape_cast %264 : vector<16x8xf32> to vector<2x8x8xf32>
    %266 = vector.extract_strided_slice %213 {offsets = [0, 0, 0], sizes = [2, 8, 8], strides = [1, 1, 1]} : vector<2x8x32xf32> to vector<2x8x8xf32>
    "tpu.trace_start"() <{level = 10 : i32, message = "bqk,bkd->bqd"}> : () -> ()
    %cst_125 = arith.constant dense<0.000000e+00> : vector<2x8x8xf32>
    %267 = tpu.matmul %265, %266, %cst_125 {dimension_numbers = #tpu.dot_dimension_numbers<[2], [1], [1], [2], [0, 0, 0, 1, 1, 2], [0], [0]>} : vector<2x8x8xf32>, vector<2x8x8xf32>, vector<2x8x8xf32> -> vector<2x8x8xf32>
    "tpu.trace_stop"() : () -> ()
    %268 = vector.shape_cast %267 : vector<2x8x8xf32> to vector<16x8xf32>
    %c0_126 = arith.constant 0 : index
    %c0_127 = arith.constant 0 : index
    %269 = vector.load %arg32[%c0_126, %c0_127] : memref<16x32xf32, #tpu.memory_space<vmem>>, vector<16x8xf32>
    tpu.vector_store %arg32[%c0_126, %c0_127], %268 {strides = array<i32>} : memref<16x32xf32, #tpu.memory_space<vmem>>, vector<16x8xf32>,
    %270 = vector.extract_strided_slice %263 {offsets = [16, 0], sizes = [16, 8], strides = [1, 1]} : vector<64x8xf32> to vector<16x8xf32>
    %271 = vector.shape_cast %270 : vector<16x8xf32> to vector<2x8x8xf32>
    %272 = vector.extract_strided_slice %213 {offsets = [0, 0, 8], sizes = [2, 8, 8], strides = [1, 1, 1]} : vector<2x8x32xf32> to vector<2x8x8xf32>
    "tpu.trace_start"() <{level = 10 : i32, message = "bqk,bkd->bqd"}> : () -> ()
    %cst_128 = arith.constant dense<0.000000e+00> : vector<2x8x8xf32>
    %273 = tpu.matmul %271, %272, %cst_128 {dimension_numbers = #tpu.dot_dimension_numbers<[2], [1], [1], [2], [0, 0, 0, 1, 1, 2], [0], [0]>} : vector<2x8x8xf32>, vector<2x8x8xf32>, vector<2x8x8xf32> -> vector<2x8x8xf32>
    "tpu.trace_stop"() : () -> ()
    %274 = vector.shape_cast %273 : vector<2x8x8xf32> to vector<16x8xf32>
    %c0_129 = arith.constant 0 : index
    %c8_130 = arith.constant 8 : index
    %275 = vector.load %arg32[%c0_129, %c8_130] : memref<16x32xf32, #tpu.memory_space<vmem>>, vector<16x8xf32>
    tpu.vector_store %arg32[%c0_129, %c8_130], %274 {strides = array<i32>} : memref<16x32xf32, #tpu.memory_space<vmem>>, vector<16x8xf32>,
    %276 = vector.extract_strided_slice %263 {offsets = [32, 0], sizes = [16, 8], strides = [1, 1]} : vector<64x8xf32> to vector<16x8xf32>
    %277 = vector.shape_cast %276 : vector<16x8xf32> to vector<2x8x8xf32>
    %278 = vector.extract_strided_slice %213 {offsets = [0, 0, 16], sizes = [2, 8, 8], strides = [1, 1, 1]} : vector<2x8x32xf32> to vector<2x8x8xf32>
    "tpu.trace_start"() <{level = 10 : i32, message = "bqk,bkd->bqd"}> : () -> ()
    %cst_131 = arith.constant dense<0.000000e+00> : vector<2x8x8xf32>
    %279 = tpu.matmul %277, %278, %cst_131 {dimension_numbers = #tpu.dot_dimension_numbers<[2], [1], [1], [2], [0, 0, 0, 1, 1, 2], [0], [0]>} : vector<2x8x8xf32>, vector<2x8x8xf32>, vector<2x8x8xf32> -> vector<2x8x8xf32>
    "tpu.trace_stop"() : () -> ()
    %280 = vector.shape_cast %279 : vector<2x8x8xf32> to vector<16x8xf32>
    %c0_132 = arith.constant 0 : index
    %c16_133 = arith.constant 16 : index
    %281 = vector.load %arg32[%c0_132, %c16_133] : memref<16x32xf32, #tpu.memory_space<vmem>>, vector<16x8xf32>
    tpu.vector_store %arg32[%c0_132, %c16_133], %280 {strides = array<i32>} : memref<16x32xf32, #tpu.memory_space<vmem>>, vector<16x8xf32>,
    %282 = vector.extract_strided_slice %263 {offsets = [48, 0], sizes = [16, 8], strides = [1, 1]} : vector<64x8xf32> to vector<16x8xf32>
    %283 = vector.shape_cast %282 : vector<16x8xf32> to vector<2x8x8xf32>
    %284 = vector.extract_strided_slice %213 {offsets = [0, 0, 24], sizes = [2, 8, 8], strides = [1, 1, 1]} : vector<2x8x32xf32> to vector<2x8x8xf32>
    "tpu.trace_start"() <{level = 10 : i32, message = "bqk,bkd->bqd"}> : () -> ()
    %cst_134 = arith.constant dense<0.000000e+00> : vector<2x8x8xf32>
    %285 = tpu.matmul %283, %284, %cst_134 {dimension_numbers = #tpu.dot_dimension_numbers<[2], [1], [1], [2], [0, 0, 0, 1, 1, 2], [0], [0]>} : vector<2x8x8xf32>, vector<2x8x8xf32>, vector<2x8x8xf32> -> vector<2x8x8xf32>
    "tpu.trace_stop"() : () -> ()
    %286 = vector.shape_cast %285 : vector<2x8x8xf32> to vector<16x8xf32>
    %c0_135 = arith.constant 0 : index
    %c24_136 = arith.constant 24 : index
    %287 = vector.load %arg32[%c0_135, %c24_136] : memref<16x32xf32, #tpu.memory_space<vmem>>, vector<16x8xf32>
    tpu.vector_store %arg32[%c0_135, %c24_136], %286 {strides = array<i32>} : memref<16x32xf32, #tpu.memory_space<vmem>>, vector<16x8xf32>,
    %c0_137 = arith.constant 0 : index
    %c0_138 = arith.constant 0 : index
    %288 = vector.load %arg32[%c0_137, %c0_138] : memref<16x32xf32, #tpu.memory_space<vmem>>, vector<16x32xf32>
    %cst_139 = arith.constant dense<0.000000e+00> : vector<16x32xf32>
    %289 = tpu.matmul %288, %175, %cst_139 {dimension_numbers = #tpu.dot_dimension_numbers<[1], [0], [0], [1], [0, 0, 1, 1], [], []>} : vector<16x32xf32>, vector<32x32xf32>, vector<16x32xf32> -> vector<16x32xf32>
    %290 = vector.broadcast %176 : vector<1x32xf32> to vector<16x32xf32>
    %291 = arith.addf %289, %290 : vector<16x32xf32>
    %292 = arith.addf %170, %291 : vector<16x32xf32>
    %cst_140 = arith.constant dense<0.000000e+00> : vector<16xf32>
    %293 = vector.multi_reduction <add>, %292, %cst_140 [1] : vector<16x32xf32> to vector<16xf32>
    %294 = vector.shape_cast %293 : vector<16xf32> to vector<16x1xf32>
    %cst_141 = arith.constant 3.200000e+01 : f32
    %295 = vector.broadcast %cst_141 : f32 to vector<16x1xf32>
    %296 = arith.divf %294, %295 : vector<16x1xf32>
    %297 = vector.broadcast %296 : vector<16x1xf32> to vector<16x32xf32>
    %298 = arith.subf %292, %297 : vector<16x32xf32>
    %299 = arith.mulf %298, %298 : vector<16x32xf32>
    %cst_142 = arith.constant dense<0.000000e+00> : vector<16xf32>
    %300 = vector.multi_reduction <add>, %299, %cst_142 [1] : vector<16x32xf32> to vector<16xf32>
    %301 = vector.shape_cast %300 : vector<16xf32> to vector<16x1xf32>
    %cst_143 = arith.constant 3.200000e+01 : f32
    %302 = vector.broadcast %cst_143 : f32 to vector<16x1xf32>
    %303 = arith.divf %301, %302 : vector<16x1xf32>
    %304 = vector.broadcast %296 : vector<16x1xf32> to vector<16x32xf32>
    %305 = arith.subf %292, %304 : vector<16x32xf32>
    %cst_144 = arith.constant 9.99999974E-6 : f32
    %306 = vector.broadcast %cst_144 : f32 to vector<16x1xf32>
    %307 = arith.addf %303, %306 : vector<16x1xf32>
    %308 = math.rsqrt %307 : vector<16x1xf32>
    %309 = vector.broadcast %308 : vector<16x1xf32> to vector<16x32xf32>
    %310 = arith.mulf %305, %309 : vector<16x32xf32>
    %311 = vector.broadcast %177 : vector<1x32xf32> to vector<16x32xf32>
    %312 = arith.mulf %310, %311 : vector<16x32xf32>
    %313 = vector.broadcast %178 : vector<1x32xf32> to vector<16x32xf32>
    %314 = arith.addf %312, %313 : vector<16x32xf32>
    %cst_145 = arith.constant dense<0.000000e+00> : vector<16x128xf32>
    %315 = tpu.matmul %314, %179, %cst_145 {dimension_numbers = #tpu.dot_dimension_numbers<[1], [0], [0], [1], [0, 0, 1, 1], [], []>} : vector<16x32xf32>, vector<32x128xf32>, vector<16x128xf32> -> vector<16x128xf32>
    %316 = vector.broadcast %180 : vector<1x128xf32> to vector<16x128xf32>
    %317 = arith.addf %315, %316 : vector<16x128xf32>
    %cst_146 = arith.constant -1.702000e+00 : f32
    %318 = vector.broadcast %cst_146 : f32 to vector<16x128xf32>
    %319 = arith.mulf %318, %317 : vector<16x128xf32>
    %320 = math.exp %319 : vector<16x128xf32>
    %cst_147 = arith.constant 1.000000e+00 : f32
    %321 = vector.broadcast %cst_147 : f32 to vector<16x128xf32>
    %322 = arith.addf %321, %320 : vector<16x128xf32>
    %cst_148 = arith.constant 1.000000e+00 : f32
    %323 = vector.broadcast %cst_148 : f32 to vector<16x128xf32>
    %324 = arith.divf %323, %322 : vector<16x128xf32>
    %325 = arith.mulf %317, %324 : vector<16x128xf32>
    %cst_149 = arith.constant dense<0.000000e+00> : vector<16x32xf32>
    %326 = tpu.matmul %325, %181, %cst_149 {dimension_numbers = #tpu.dot_dimension_numbers<[1], [0], [0], [1], [0, 0, 1, 1], [], []>} : vector<16x128xf32>, vector<128x32xf32>, vector<16x32xf32> -> vector<16x32xf32>
    %327 = arith.addf %292, %326 : vector<16x32xf32>
    %328 = vector.broadcast %182 : vector<1x32xf32> to vector<16x32xf32>
    %329 = arith.addf %327, %328 : vector<16x32xf32>
    %c0_150 = arith.constant 0 : index
    %c0_151 = arith.constant 0 : index
    %330 = vector.load %arg0[%c0_150, %c0_151] : memref<2x1xi32, #tpu.memory_space<vmem>>, vector<2x1xi32>
    %331 = tpu.iota {dimensions = array<i32: 0>} : vector<2x1xi32>
    %c8_i32 = arith.constant 8 : i32
    %332 = vector.broadcast %c8_i32 : i32 to vector<2x1xi32>
    %333 = arith.muli %332, %331 : vector<2x1xi32>
    %334 = arith.addi %330, %333 : vector<2x1xi32>
    %335 = tpu.iota {dimensions = array<i32: 1>} : vector<2x16xi32>
    %336 = vector.broadcast %334 : vector<2x1xi32> to vector<2x16xi32>
    %337 = arith.cmpi eq, %335, %336 : vector<2x16xi32>
    %338 = arith.extui %337 : vector<2x16xi1> to vector<2x16xi32>
    %339 = arith.sitofp %338 : vector<2x16xi32> to vector<2x16xf32>
    %cst_152 = arith.constant dense<0.000000e+00> : vector<2x32xf32>
    %340 = tpu.matmul %339, %329, %cst_152 {dimension_numbers = #tpu.dot_dimension_numbers<[1], [0], [0], [1], [0, 0, 1, 1], [], []>} : vector<2x16xf32>, vector<16x32xf32>, vector<2x32xf32> -> vector<2x32xf32>
    %c0_153 = arith.constant 0 : index
    %c0_154 = arith.constant 0 : index
    %341 = vector.load %arg27[%c0_153, %c0_154] : memref<1x32xf32, #tpu.memory_space<vmem>>, vector<1x32xf32>
    %c0_155 = arith.constant 0 : index
    %c0_156 = arith.constant 0 : index
    %342 = vector.load %arg28[%c0_155, %c0_156] : memref<1x32xf32, #tpu.memory_space<vmem>>, vector<1x32xf32>
    %cst_157 = arith.constant dense<0.000000e+00> : vector<2xf32>
    %343 = vector.multi_reduction <add>, %340, %cst_157 [1] : vector<2x32xf32> to vector<2xf32>
    %344 = vector.shape_cast %343 : vector<2xf32> to vector<2x1xf32>
    %cst_158 = arith.constant 3.200000e+01 : f32
    %345 = vector.broadcast %cst_158 : f32 to vector<2x1xf32>
    %346 = arith.divf %344, %345 : vector<2x1xf32>
    %347 = vector.broadcast %346 : vector<2x1xf32> to vector<2x32xf32>
    %348 = arith.subf %340, %347 : vector<2x32xf32>
    %349 = arith.mulf %348, %348 : vector<2x32xf32>
    %cst_159 = arith.constant dense<0.000000e+00> : vector<2xf32>
    %350 = vector.multi_reduction <add>, %349, %cst_159 [1] : vector<2x32xf32> to vector<2xf32>
    %351 = vector.shape_cast %350 : vector<2xf32> to vector<2x1xf32>
    %cst_160 = arith.constant 3.200000e+01 : f32
    %352 = vector.broadcast %cst_160 : f32 to vector<2x1xf32>
    %353 = arith.divf %351, %352 : vector<2x1xf32>
    %354 = vector.broadcast %346 : vector<2x1xf32> to vector<2x32xf32>
    %355 = arith.subf %340, %354 : vector<2x32xf32>
    %cst_161 = arith.constant 9.99999974E-6 : f32
    %356 = vector.broadcast %cst_161 : f32 to vector<2x1xf32>
    %357 = arith.addf %353, %356 : vector<2x1xf32>
    %358 = math.rsqrt %357 : vector<2x1xf32>
    %359 = vector.broadcast %358 : vector<2x1xf32> to vector<2x32xf32>
    %360 = arith.mulf %355, %359 : vector<2x32xf32>
    %361 = vector.broadcast %341 : vector<1x32xf32> to vector<2x32xf32>
    %362 = arith.mulf %360, %361 : vector<2x32xf32>
    %363 = vector.broadcast %342 : vector<1x32xf32> to vector<2x32xf32>
    %364 = arith.addf %362, %363 : vector<2x32xf32>
    %c0_162 = arith.constant 0 : index
    %c0_163 = arith.constant 0 : index
    %365 = vector.load %arg29[%c0_162, %c0_163] : memref<32x16xf32, #tpu.memory_space<vmem>>, vector<32x16xf32>
    %cst_164 = arith.constant dense<0.000000e+00> : vector<2x16xf32>
    %366 = tpu.matmul %364, %365, %cst_164 {dimension_numbers = #tpu.dot_dimension_numbers<[1], [0], [0], [1], [0, 0, 1, 1], [], []>} : vector<2x32xf32>, vector<32x16xf32>, vector<2x16xf32> -> vector<2x16xf32>
    %c0_165 = arith.constant 0 : index
    %c0_166 = arith.constant 0 : index
    %367 = vector.load %arg30[%c0_165, %c0_166] : memref<2x16xf32, #tpu.memory_space<vmem>>, vector<2x16xf32>
    tpu.vector_store %arg30[%c0_165, %c0_166], %366 {strides = array<i32>} : memref<2x16xf32, #tpu.memory_space<vmem>>, vector<2x16xf32>,
    return
  }
}

</mosaic_0001>

<llo_original>
// kernel: text_encoder_forward.1
$region0: #{text_encoder_forward.1}
  #allocation0 [shape = 'u32[]', space=smem, size = 0x4, offset = 0x4, fixed_abs, tag = 'smem constant byte address 0x4 - core index']
  #allocation1 [shape = 'u32[144,128]{1,0:T(1,128)}', space=vmem, size = 0x12000, scoped, tag = 'internal scratch']
  #allocation2 [shape = 'f32[64,8]{1,0:T(8,128)}', space=vmem, size = 0x8000, scoped, tag = 'scratch operand']
  #allocation3 [shape = 'f32[16,32]{1,0:T(8,128)}', space=vmem, size = 0x2000, scoped, tag = 'scratch operand']
  %s0 = inlined_call_operand.smem [shape: u32[31], index: -1, kind: input, shape index: {}]
  %s1 = sld [smem:[%s0]]
  %s2 = scalar_lea.smem %s0, 1
  %s3 = sld [smem:[%s2]]
  %s4 = scalar_lea.smem %s0, 2
  %s5 = sld [smem:[%s4]]
  %s6 = scalar_lea.smem %s0, 3
  %s7 = sld [smem:[%s6]]
  %s8 = scalar_lea.smem %s0, 4
  %s9 = sld [smem:[%s8]]
  %s10 = scalar_lea.smem %s0, 5
  %s11 = sld [smem:[%s10]]
  %s12 = scalar_lea.smem %s0, 6
  %s13 = sld [smem:[%s12]]
  %s14 = scalar_lea.smem %s0, 7
  %s15 = sld [smem:[%s14]]
  %s16 = scalar_lea.smem %s0, 8
  %s17 = sld [smem:[%s16]]
  %s18 = scalar_lea.smem %s0, 9
  %s19 = sld [smem:[%s18]]
  %s20 = scalar_lea.smem %s0, 10
  %s21 = sld [smem:[%s20]]
  %s22 = scalar_lea.smem %s0, 11
  %s23 = sld [smem:[%s22]]
  %s24 = scalar_lea.smem %s0, 12
  %s25 = sld [smem:[%s24]]
  %s26 = scalar_lea.smem %s0, 13
  %s27 = sld [smem:[%s26]]
  %s28 = scalar_lea.smem %s0, 14
  %s29 = sld [smem:[%s28]]
  %s30 = scalar_lea.smem %s0, 15
  %s31 = sld [smem:[%s30]]
  %s32 = scalar_lea.smem %s0, 16
  %s33 = sld [smem:[%s32]]
  %s34 = scalar_lea.smem %s0, 17
  %s35 = sld [smem:[%s34]]
  %s36 = scalar_lea.smem %s0, 18
  %s37 = sld [smem:[%s36]]
  %s38 = scalar_lea.smem %s0, 19
  %s39 = sld [smem:[%s38]]
  %s40 = scalar_lea.smem %s0, 20
  %s41 = sld [smem:[%s40]]
  %s42 = scalar_lea.smem %s0, 21
  %s43 = sld [smem:[%s42]]
  %s44 = scalar_lea.smem %s0, 22
  %s45 = sld [smem:[%s44]]
  %s46 = scalar_lea.smem %s0, 23
  %s47 = sld [smem:[%s46]]
  %s48 = scalar_lea.smem %s0, 24
  %s49 = sld [smem:[%s48]]
  %s50 = scalar_lea.smem %s0, 25
  %s51 = sld [smem:[%s50]]
  %s52 = scalar_lea.smem %s0, 26
  %s53 = sld [smem:[%s52]]
  %s54 = scalar_lea.smem %s0, 27
  %s55 = sld [smem:[%s54]]
  %s56 = scalar_lea.smem %s0, 28
  %s57 = sld [smem:[%s56]]
  %s58 = scalar_lea.smem %s0, 29
  %s59 = sld [smem:[%s58]]
  %s60 = scalar_lea.smem %s0, 30
  %s61 = sld [smem:[%s60]]
  %s62 = sld [smem:[#allocation0]]
  $region130: #{text_encoder_forward.1} parent=0
    _
  %s64 = ssub.s32 1, %s62
  %s65 = scalar_select 0, %s64, %s62
  $region1: #{text_encoder_forward.1} parent=0
    #allocation4 [shape = 'u8[1024]{0}', space=vmem, size = 0x400, scoped, tag = 'output window, operand 0, single buffered']
    #allocation5 [shape = 's32[1]{0}', space=sflag, size = 0x4, scoped, tag = 'scoped memory for text_encoder_forward.1']
    %66 = vsyncpa [#allocation5], 0
    // Predicated region
    $region2: #{text_encoder_forward.1} parent=1 // pred_check
      _
    $region3: #{text_encoder_forward.1} parent=1 // pred_check_branch
      %68 = sbr.rel (0) target = $region5
    $region4: #{text_encoder_forward.1} parent=1 // pred_region
      _
    $region5: #{text_encoder_forward.1} parent=1 // pred_fallthru
      _
    // Predicated region
    $region6: #{text_encoder_forward.1} parent=1 // pred_check
      _
    $region7: #{text_encoder_forward.1} parent=1 // pred_check_branch
      %70 = sbr.rel (0) target = $region9
    $region8: #{text_encoder_forward.1} parent=1 // pred_region
      _
    $region9: #{text_encoder_forward.1} parent=1 // pred_fallthru
      _
    // Predicated region
    $region10: #{text_encoder_forward.1} parent=1 // pred_check
      _
    $region11: #{text_encoder_forward.1} parent=1 // pred_check_branch
      %72 = sbr.rel (0) target = $region13
    $region12: #{text_encoder_forward.1} parent=1 // pred_region
      _
    $region13: #{text_encoder_forward.1} parent=1 // pred_fallthru
      _
    // Predicated region
    $region14: #{text_encoder_forward.1} parent=1 // pred_check
      _
    $region15: #{text_encoder_forward.1} parent=1 // pred_check_branch
      %74 = sbr.rel (0) target = $region17
    $region16: #{text_encoder_forward.1} parent=1 // pred_region
      _
    $region17: #{text_encoder_forward.1} parent=1 // pred_fallthru
      _
    // Predicated region
    $region18: #{text_encoder_forward.1} parent=1 // pred_check
      _
    $region19: #{text_encoder_forward.1} parent=1 // pred_check_branch
      %76 = sbr.rel (0) target = $region21
    $region20: #{text_encoder_forward.1} parent=1 // pred_region
      _
    $region21: #{text_encoder_forward.1} parent=1 // pred_fallthru
      _
    // Predicated region
    $region22: #{text_encoder_forward.1} parent=1 // pred_check
      _
    $region23: #{text_encoder_forward.1} parent=1 // pred_check_branch
      %78 = sbr.rel (0) target = $region25
    $region24: #{text_encoder_forward.1} parent=1 // pred_region
      _
    $region25: #{text_encoder_forward.1} parent=1 // pred_fallthru
      _
    // Predicated region
    $region26: #{text_encoder_forward.1} parent=1 // pred_check
      _
    $region27: #{text_encoder_forward.1} parent=1 // pred_check_branch
      %80 = sbr.rel (0) target = $region29
    $region28: #{text_encoder_forward.1} parent=1 // pred_region
      _
    $region29: #{text_encoder_forward.1} parent=1 // pred_fallthru
      _
    // Predicated region
    $region30: #{text_encoder_forward.1} parent=1 // pred_check
      _
    $region31: #{text_encoder_forward.1} parent=1 // pred_check_branch
      %82 = sbr.rel (0) target = $region33
    $region32: #{text_encoder_forward.1} parent=1 // pred_region
      _
    $region33: #{text_encoder_forward.1} parent=1 // pred_fallthru
      _
    // Predicated region
    $region34: #{text_encoder_forward.1} parent=1 // pred_check
      _
    $region35: #{text_encoder_forward.1} parent=1 // pred_check_branch
      %84 = sbr.rel (0) target = $region37
    $region36: #{text_encoder_forward.1} parent=1 // pred_region
      _
    $region37: #{text_encoder_forward.1} parent=1 // pred_fallthru
      _
    // Predicated region
    $region38: #{text_encoder_forward.1} parent=1 // pred_check
      _
    $region39: #{text_encoder_forward.1} parent=1 // pred_check_branch
      %86 = sbr.rel (0) target = $region41
    $region40: #{text_encoder_forward.1} parent=1 // pred_region
      _
    $region41: #{text_encoder_forward.1} parent=1 // pred_fallthru
      _
    // Predicated region
    $region42: #{text_encoder_forward.1} parent=1 // pred_check
      _
    $region43: #{text_encoder_forward.1} parent=1 // pred_check_branch
      %88 = sbr.rel (0) target = $region45
    $region44: #{text_encoder_forward.1} parent=1 // pred_region
      _
    $region45: #{text_encoder_forward.1} parent=1 // pred_fallthru
      _
    // Predicated region
    $region46: #{text_encoder_forward.1} parent=1 // pred_check
      _
    $region47: #{text_encoder_forward.1} parent=1 // pred_check_branch
      %90 = sbr.rel (0) target = $region49
    $region48: #{text_encoder_forward.1} parent=1 // pred_region
      _
    $region49: #{text_encoder_forward.1} parent=1 // pred_fallthru
      _
    // Predicated region
    $region50: #{text_encoder_forward.1} parent=1 // pred_check
      _
    $region51: #{text_encoder_forward.1} parent=1 // pred_check_branch
      %92 = sbr.rel (0) target = $region53
    $region52: #{text_encoder_forward.1} parent=1 // pred_region
      _
    $region53: #{text_encoder_forward.1} parent=1 // pred_fallthru
      _
    // Predicated region
    $region54: #{text_encoder_forward.1} parent=1 // pred_check
      _
    $region55: #{text_encoder_forward.1} parent=1 // pred_check_branch
      %94 = sbr.rel (0) target = $region57
    $region56: #{text_encoder_forward.1} parent=1 // pred_region
      _
    $region57: #{text_encoder_forward.1} parent=1 // pred_fallthru
      _
    // Predicated region
    $region58: #{text_encoder_forward.1} parent=1 // pred_check
      _
    $region59: #{text_encoder_forward.1} parent=1 // pred_check_branch
      %96 = sbr.rel (0) target = $region61
    $region60: #{text_encoder_forward.1} parent=1 // pred_region
      _
    $region61: #{text_encoder_forward.1} parent=1 // pred_fallthru
      _
    // Predicated region
    $region62: #{text_encoder_forward.1} parent=1 // pred_check
      _
    $region63: #{text_encoder_forward.1} parent=1 // pred_check_branch
      %98 = sbr.rel (0) target = $region65
    $region64: #{text_encoder_forward.1} parent=1 // pred_region
      _
    $region65: #{text_encoder_forward.1} parent=1 // pred_fallthru
      _
    // Predicated region
    $region66: #{text_encoder_forward.1} parent=1 // pred_check
      _
    $region67: #{text_encoder_forward.1} parent=1 // pred_check_branch
      %100 = sbr.rel (0) target = $region69
    $region68: #{text_encoder_forward.1} parent=1 // pred_region
      _
    $region69: #{text_encoder_forward.1} parent=1 // pred_fallthru
      _
    // Predicated region
    $region70: #{text_encoder_forward.1} parent=1 // pred_check
      _
    $region71: #{text_encoder_forward.1} parent=1 // pred_check_branch
      %102 = sbr.rel (0) target = $region73
    $region72: #{text_encoder_forward.1} parent=1 // pred_region
      _
    $region73: #{text_encoder_forward.1} parent=1 // pred_fallthru
      _
    // Predicated region
    $region74: #{text_encoder_forward.1} parent=1 // pred_check
      _
    $region75: #{text_encoder_forward.1} parent=1 // pred_check_branch
      %104 = sbr.rel (0) target = $region77
    $region76: #{text_encoder_forward.1} parent=1 // pred_region
      _
    $region77: #{text_encoder_forward.1} parent=1 // pred_fallthru
      _
    // Predicated region
    $region78: #{text_encoder_forward.1} parent=1 // pred_check
      _
    $region79: #{text_encoder_forward.1} parent=1 // pred_check_branch
      %106 = sbr.rel (0) target = $region81
    $region80: #{text_encoder_forward.1} parent=1 // pred_region
      _
    $region81: #{text_encoder_forward.1} parent=1 // pred_fallthru
      _
    // Predicated region
    $region82: #{text_encoder_forward.1} parent=1 // pred_check
      _
    $region83: #{text_encoder_forward.1} parent=1 // pred_check_branch
      %108 = sbr.rel (0) target = $region85
    $region84: #{text_encoder_forward.1} parent=1 // pred_region
      _
    $region85: #{text_encoder_forward.1} parent=1 // pred_fallthru
      _
    // Predicated region
    $region86: #{text_encoder_forward.1} parent=1 // pred_check
      _
    $region87: #{text_encoder_forward.1} parent=1 // pred_check_branch
      %110 = sbr.rel (0) target = $region89
    $region88: #{text_encoder_forward.1} parent=1 // pred_region
      _
    $region89: #{text_encoder_forward.1} parent=1 // pred_fallthru
      _
    // Predicated region
    $region90: #{text_encoder_forward.1} parent=1 // pred_check
      _
    $region91: #{text_encoder_forward.1} parent=1 // pred_check_branch
      %112 = sbr.rel (0) target = $region93
    $region92: #{text_encoder_forward.1} parent=1 // pred_region
      _
    $region93: #{text_encoder_forward.1} parent=1 // pred_fallthru
      _
    // Predicated region
    $region94: #{text_encoder_forward.1} parent=1 // pred_check
      _
    $region95: #{text_encoder_forward.1} parent=1 // pred_check_branch
      %114 = sbr.rel (0) target = $region97
    $region96: #{text_encoder_forward.1} parent=1 // pred_region
      _
    $region97: #{text_encoder_forward.1} parent=1 // pred_fallthru
      _
    // Predicated region
    $region98: #{text_encoder_forward.1} parent=1 // pred_check
      _
    $region99: #{text_encoder_forward.1} parent=1 // pred_check_branch
      %116 = sbr.rel (0) target = $region101
    $region100: #{text_encoder_forward.1} parent=1 // pred_region
      _
    $region101: #{text_encoder_forward.1} parent=1 // pred_fallthru
      _
    // Predicated region
    $region102: #{text_encoder_forward.1} parent=1 // pred_check
      _
    $region103: #{text_encoder_forward.1} parent=1 // pred_check_branch
      %118 = sbr.rel (0) target = $region105
    $region104: #{text_encoder_forward.1} parent=1 // pred_region
      _
    $region105: #{text_encoder_forward.1} parent=1 // pred_fallthru
      _
    // Predicated region
    $region106: #{text_encoder_forward.1} parent=1 // pred_check
      _
    $region107: #{text_encoder_forward.1} parent=1 // pred_check_branch
      %120 = sbr.rel (0) target = $region109
    $region108: #{text_encoder_forward.1} parent=1 // pred_region
      _
    $region109: #{text_encoder_forward.1} parent=1 // pred_fallthru
      _
    // Predicated region
    $region110: #{text_encoder_forward.1} parent=1 // pred_check
      _
    $region111: #{text_encoder_forward.1} parent=1 // pred_check_branch
      %122 = sbr.rel (0) target = $region113
    $region112: #{text_encoder_forward.1} parent=1 // pred_region
      _
    $region113: #{text_encoder_forward.1} parent=1 // pred_fallthru
      _
    // Predicated region
    $region114: #{text_encoder_forward.1} parent=1 // pred_check
      _
    $region115: #{text_encoder_forward.1} parent=1 // pred_check_branch
      %124 = sbr.rel (0) target = $region117
    $region116: #{text_encoder_forward.1} parent=1 // pred_region
      _
    $region117: #{text_encoder_forward.1} parent=1 // pred_fallthru
      _
    // Predicated region
    $region118: #{text_encoder_forward.1} parent=1 // pred_check
      _
    $region119: #{text_encoder_forward.1} parent=1 // pred_check_branch
      %126 = sbr.rel (0) target = $region121
    $region120: #{text_encoder_forward.1} parent=1 // pred_region
      _
    $region121: #{text_encoder_forward.1} parent=1 // pred_fallthru
      _
    %v127 = vlaneseq
    %v128 = vshrl.u32 %v127, 7
    %v129 = vlaneseq
    %v130 = vand.u32 %v129, 127
    %vm131 = vcmp.gt.s32.totalorder %v130, %v128
    %v132 = vsel %vm131, -1e+09, 0.0
    %v133 = vld [vmem:[%s3] sm:$0xff]
    %v134 = vld [vmem:[%s3 + $0x8] sm:$0xff]
    %v135 = vld [vmem:[%s5] sm:$0xff]
    %v136 = vadd.f32 %v133, %v135
    %v137 = vadd.f32 %v134, %v135
    %v138 = vld [vmem:[%s7] sm:$0x1]
    %v139 = vld [vmem:[%s9] sm:$0x1]
    %v140 = vld [vmem:[%s11] sm:$0xff]
    %v141 = vld [vmem:[%s11 + $0x8] sm:$0xff]
    %v142 = vld [vmem:[%s11 + $0x10] sm:$0xff]
    %v143 = vld [vmem:[%s11 + $0x18] sm:$0xff]
    %v144 = vld [vmem:[%s13] sm:$0x1]
    %v145 = vld [vmem:[%s15] sm:$0xff]
    %v146 = vld [vmem:[%s15 + $0x8] sm:$0xff]
    %v147 = vld [vmem:[%s15 + $0x10] sm:$0xff]
    %v148 = vld [vmem:[%s15 + $0x18] sm:$0xff]
    %v149 = vld [vmem:[%s17] sm:$0x1]
    %v150 = vld [vmem:[%s19] sm:$0x1]
    %v151 = vld [vmem:[%s21] sm:$0x1]
    %v152 = vld [vmem:[%s23] sm:$0xff]
    %v153 = vld [vmem:[%s23 + $0x8] sm:$0xff]
    %v154 = vld [vmem:[%s23 + $0x10] sm:$0xff]
    %v155 = vld [vmem:[%s23 + $0x18] sm:$0xff]
    %v156 = vld [vmem:[%s25] sm:$0x1]
    %v157 = vld [vmem:[%s27] sm:$0xff]
    %v158 = vld [vmem:[%s27 + $0x8] sm:$0xff]
    %v159 = vld [vmem:[%s27 + $0x10] sm:$0xff]
    %v160 = vld [vmem:[%s27 + $0x18] sm:$0xff]
    %v161 = vld [vmem:[%s27 + $0x20] sm:$0xff]
    %v162 = vld [vmem:[%s27 + $0x28] sm:$0xff]
    %v163 = vld [vmem:[%s27 + $0x30] sm:$0xff]
    %v164 = vld [vmem:[%s27 + $0x38] sm:$0xff]
    %v165 = vld [vmem:[%s27 + $0x40] sm:$0xff]
    %v166 = vld [vmem:[%s27 + $0x48] sm:$0xff]
    %v167 = vld [vmem:[%s27 + $0x50] sm:$0xff]
    %v168 = vld [vmem:[%s27 + $0x58] sm:$0xff]
    %v169 = vld [vmem:[%s27 + $0x60] sm:$0xff]
    %v170 = vld [vmem:[%s27 + $0x68] sm:$0xff]
    %v171 = vld [vmem:[%s27 + $0x70] sm:$0xff]
    %v172 = vld [vmem:[%s27 + $0x78] sm:$0xff]
    %v173 = vld [vmem:[%s29] sm:$0x1]
    %vm174 = vcmask 261120
    %v175 = vsel %vm174, %v136, 0.0
    %176 = vadd.xlane.f32.xlu0 %v175
    %v177 = vpop.xlane.xlu0 %176
    %v178 = vsel %vm174, %v137, 0.0
    %179 = vadd.xlane.f32.xlu0 %v178
    %v180 = vpop.xlane.xlu0 %179
    %v181 = vrcp.pop 32.0
    %v182 = vmul.f32 %v177, %v181
    %v183 = vmul.f32 %v180, %v181
    %v184 = vsub.f32 %v136, %v182
    %v185 = vsub.f32 %v137, %v183
    %v186 = vmul.f32 %v184, %v184
    %v187 = vmul.f32 %v185, %v185
    %v188 = vsel %vm174, %v186, 0.0
    %189 = vadd.xlane.f32.xlu0 %v188
    %v190 = vpop.xlane.xlu0 %189
    %v191 = vsel %vm174, %v187, 0.0
    %192 = vadd.xlane.f32.xlu0 %v191
    %v193 = vpop.xlane.xlu0 %192
    %v194 = vmul.f32 %v190, %v181
    %v195 = vmul.f32 %v193, %v181
    %v196 = vadd.f32 %v194, 1e-05
    %v197 = vadd.f32 %v195, 1e-05
    %v198 = vrsqrt.pop %v196
    %v199 = vrsqrt.pop %v197
    %v200 = vmul.f32 %v184, %v198
    %v201 = vmul.f32 %v185, %v199
    %v203 = vlaneseq
    %v204 = vshrl.u32 %v203, 7
    %v205 = vsub.s32 0, %v204
    %v206 = vrot.slane %v138, %v205
    %v208 = vmul.f32 %v200, %v206
    %v209 = vmul.f32 %v201, %v206
    %v211 = vlaneseq
    %v212 = vshrl.u32 %v211, 7
    %v213 = vsub.s32 0, %v212
    %v214 = vrot.slane %v139, %v213
    %v216 = vadd.f32 %v208, %v214
    %v217 = vadd.f32 %v209, %v214
    %v219 = vlaneseq
    %v220 = vshrl.u32 %v219, 7
    %v221 = vsub.s32 0, %v220
    %v222 = vrot.slane %v144, %v221
    %v225 = vsel %vm174, %v216, 0
    %v228 = vsel %vm174, %v217, 0
    %230 = vmatprep.subr.mxu0 0.0
    %231 = vmatpush1.msra.mxu0 %v140
    %232 = vmatprep.subr.mxu0 0.0
    %233 = vmatpush1.msra.mxu0 %v141
    %234 = vmatprep.subr.mxu0 0.0
    %235 = vmatpush1.msra.mxu0 %v142
    %236 = vmatprep.subr.mxu0 0.0
    %237 = vmatpush1.msra.mxu0 %v143
    %238 = vmatprep.subr.mxu0 0.0
    %239 = vmatpush1.msra.mxu0 0.0
    %240 = vmatprep.subr.mxu0 0.0
    %241 = vmatpush1.msra.mxu0 0.0
    %242 = vmatprep.subr.mxu0 0.0
    %243 = vmatpush1.msra.mxu0 0.0
    %244 = vmatprep.subr.mxu0 0.0
    %245 = vmatpush1.msra.mxu0 0.0
    %246 = vmatprep.subr.mxu0 0.0
    %247 = vmatpush1.msra.mxu0 0.0
    %248 = vmatprep.subr.mxu0 0.0
    %249 = vmatpush1.msra.mxu0 0.0
    %250 = vmatprep.subr.mxu0 0.0
    %251 = vmatpush1.msra.mxu0 0.0
    %252 = vmatprep.subr.mxu0 0.0
    %253 = vmatpush1.msra.mxu0 0.0
    %254 = vmatprep.subr.mxu0 0.0
    %255 = vmatpush1.msra.mxu0 0.0
    %256 = vmatprep.subr.mxu0 0.0
    %257 = vmatpush1.msra.mxu0 0.0
    %258 = vmatprep.subr.mxu0 0.0
    %259 = vmatpush1.msra.mxu0 0.0
    %260 = vmatprep.subr.mxu0 0.0
    %261 = vmatpush1.msra.mxu0 0.0
    %262 = vmatprep.subr.mxu0 0.0
    %263 = vmatpush1.msra.mxu0 0.0
    %264 = vmatprep.subr.mxu0 0.0
    %265 = vmatpush1.msra.mxu0 0.0
    %266 = vmatprep.subr.mxu0 0.0
    %267 = vmatpush1.msra.mxu0 0.0
    %268 = vmatprep.subr.mxu0 0.0
    %269 = vmatpush1.msra.mxu0 0.0
    %270 = vmatprep.subr.mxu0 0.0
    %271 = vmatpush1.msra.mxu0 0.0
    %272 = vmatprep.subr.mxu0 0.0
    %273 = vmatpush1.msra.mxu0 0.0
    %274 = vmatprep.subr.mxu0 0.0
    %275 = vmatpush1.msra.mxu0 0.0
    %276 = vmatprep.subr.mxu0 0.0
    %277 = vmatpush1.msra.mxu0 0.0
    %278 = vmatprep.subr.mxu0 0.0
    %279 = vmatpush1.msra.mxu0 0.0
    %280 = vmatprep.subr.mxu0 0.0
    %281 = vmatpush1.msra.mxu0 0.0
    %282 = vmatprep.subr.mxu0 0.0
    %283 = vmatpush1.msra.mxu0 0.0
    %284 = vmatprep.subr.mxu0 0.0
    %285 = vmatpush1.msra.mxu0 0.0
    %286 = vmatprep.subr.mxu0 0.0
    %287 = vmatpush1.msra.mxu0 0.0
    %288 = vmatprep.subr.mxu0 0.0
    %289 = vmatpush1.msra.mxu0 0.0
    %290 = vmatprep.subr.mxu0 0.0
    %291 = vmatpush1.msra.mxu0 0.0
    %292 = vmatprep.subr.mxu0 0.0
    %293 = vmatpush1.msra.mxu0 0.0
    %294 = vmatprep.mubr.f32.mxu0 0.0
    %295 = vmatmul.mubr.f32.gmra.mrb[0].mxu0 %v225
    %v296 = vpop.f32.mrb[0].mxu0
    %v297 = vadd.f32 %v222, %v296
    %v298 = vpop.f32.mrb[0].mxu0
    %299 = vmatprep.mubr.f32.mxu0 0.0
    %300 = vmatmul.mubr.f32.gmra.mrb[0].mxu0 %v228
    %v301 = vpop.f32.mrb[0].mxu0
    %v302 = vadd.f32 %v222, %v301
    %v303 = vpop.f32.mrb[0].mxu0
    %304 = vdwg.mxu0
    %306 = vrot.lane.b32.xlu0 %v297, 96
    %v307 = vpop.permute.xlu0 %306
    %vm308 = vcmask 64512
    %v309 = vsel %vm308, %v297, 0
    %v311 = vsel %vm308, %v307, 0
    %313 = vmatprep.subr.mxu0 0.0
    %314 = vmatpush1.xpose.msra.mxu0 %v311
    %315 = vmatprep.subr.mxu0 0.0
    %316 = vmatpush1.xpose.msra.mxu0 0.0
    %317 = vmatprep.subr.mxu0 0.0
    %318 = vmatpush1.xpose.msra.mxu0 0.0
    %319 = vmatprep.subr.mxu0 0.0
    %320 = vmatpush1.xpose.msra.mxu0 0.0
    %321 = vmatprep.subr.mxu0 0.0
    %322 = vmatpush1.xpose.msra.mxu0 0.0
    %323 = vmatprep.subr.mxu0 0.0
    %324 = vmatpush1.xpose.msra.mxu0 0.0
    %325 = vmatprep.subr.mxu0 0.0
    %326 = vmatpush1.xpose.msra.mxu0 0.0
    %327 = vmatprep.subr.mxu0 0.0
    %328 = vmatpush1.xpose.msra.mxu0 0.0
    %329 = vmatprep.subr.mxu0 0.0
    %330 = vmatpush1.xpose.msra.mxu0 0.0
    %331 = vmatprep.subr.mxu0 0.0
    %332 = vmatpush1.xpose.msra.mxu0 0.0
    %333 = vmatprep.subr.mxu0 0.0
    %334 = vmatpush1.xpose.msra.mxu0 0.0
    %335 = vmatprep.subr.mxu0 0.0
    %336 = vmatpush1.xpose.msra.mxu0 0.0
    %337 = vmatprep.subr.mxu0 0.0
    %338 = vmatpush1.xpose.msra.mxu0 0.0
    %339 = vmatprep.subr.mxu0 0.0
    %340 = vmatpush1.xpose.msra.mxu0 0.0
    %341 = vmatprep.subr.mxu0 0.0
    %342 = vmatpush1.xpose.msra.mxu0 0.0
    %343 = vmatprep.subr.mxu0 0.0
    %344 = vmatpush1.xpose.msra.mxu0 0.0
    %345 = vmatprep.subr.mxu0 0.0
    %346 = vmatpush1.xpose.msra.mxu0 0.0
    %347 = vmatprep.subr.mxu0 0.0
    %348 = vmatpush1.xpose.msra.mxu0 0.0
    %349 = vmatprep.subr.mxu0 0.0
    %350 = vmatpush1.xpose.msra.mxu0 0.0
    %351 = vmatprep.subr.mxu0 0.0
    %352 = vmatpush1.xpose.msra.mxu0 0.0
    %353 = vmatprep.subr.mxu0 0.0
    %354 = vmatpush1.xpose.msra.mxu0 0.0
    %355 = vmatprep.subr.mxu0 0.0
    %356 = vmatpush1.xpose.msra.mxu0 0.0
    %357 = vmatprep.subr.mxu0 0.0
    %358 = vmatpush1.xpose.msra.mxu0 0.0
    %359 = vmatprep.subr.mxu0 0.0
    %360 = vmatpush1.xpose.msra.mxu0 0.0
    %361 = vmatprep.subr.mxu0 0.0
    %362 = vmatpush1.xpose.msra.mxu0 0.0
    %363 = vmatprep.subr.mxu0 0.0
    %364 = vmatpush1.xpose.msra.mxu0 0.0
    %365 = vmatprep.subr.mxu0 0.0
    %366 = vmatpush1.xpose.msra.mxu0 0.0
    %367 = vmatprep.subr.mxu0 0.0
    %368 = vmatpush1.xpose.msra.mxu0 0.0
    %369 = vmatprep.subr.mxu0 0.0
    %370 = vmatpush1.xpose.msra.mxu0 0.0
    %371 = vmatprep.subr.mxu0 0.0
    %372 = vmatpush1.xpose.msra.mxu0 0.0
    %373 = vmatprep.subr.mxu0 0.0
    %374 = vmatpush1.xpose.msra.mxu0 0.0
    %375 = vmatprep.subr.mxu0 0.0
    %376 = vmatpush1.xpose.msra.mxu0 0.0
    %377 = vmatprep.mubr.f32.mxu0 0.0
    %378 = vmatmul.mubr.f32.gmra.mrb[0].mxu0 %v309
    %v379 = vpop.f32.mrb[0].mxu0
    %v380 = vadd.f32 0.0, %v379
    %v381 = vpop.f32.mrb[0].mxu0
    %382 = vdwg.mxu0
    %384 = vrot.lane.b32.xlu0 %v302, 96
    %v385 = vpop.permute.xlu0 %384
    %v386 = vsel %vm308, %v302, 0
    %v388 = vsel %vm308, %v385, 0
    %390 = vmatprep.subr.mxu0 0.0
    %391 = vmatpush1.xpose.msra.mxu0 %v388
    %392 = vmatprep.subr.mxu0 0.0
    %393 = vmatpush1.xpose.msra.mxu0 0.0
    %394 = vmatprep.subr.mxu0 0.0
    %395 = vmatpush1.xpose.msra.mxu0 0.0
    %396 = vmatprep.subr.mxu0 0.0
    %397 = vmatpush1.xpose.msra.mxu0 0.0
    %398 = vmatprep.subr.mxu0 0.0
    %399 = vmatpush1.xpose.msra.mxu0 0.0
    %400 = vmatprep.subr.mxu0 0.0
    %401 = vmatpush1.xpose.msra.mxu0 0.0
    %402 = vmatprep.subr.mxu0 0.0
    %403 = vmatpush1.xpose.msra.mxu0 0.0
    %404 = vmatprep.subr.mxu0 0.0
    %405 = vmatpush1.xpose.msra.mxu0 0.0
    %406 = vmatprep.subr.mxu0 0.0
    %407 = vmatpush1.xpose.msra.mxu0 0.0
    %408 = vmatprep.subr.mxu0 0.0
    %409 = vmatpush1.xpose.msra.mxu0 0.0
    %410 = vmatprep.subr.mxu0 0.0
    %411 = vmatpush1.xpose.msra.mxu0 0.0
    %412 = vmatprep.subr.mxu0 0.0
    %413 = vmatpush1.xpose.msra.mxu0 0.0
    %414 = vmatprep.subr.mxu0 0.0
    %415 = vmatpush1.xpose.msra.mxu0 0.0
    %416 = vmatprep.subr.mxu0 0.0
    %417 = vmatpush1.xpose.msra.mxu0 0.0
    %418 = vmatprep.subr.mxu0 0.0
    %419 = vmatpush1.xpose.msra.mxu0 0.0
    %420 = vmatprep.subr.mxu0 0.0
    %421 = vmatpush1.xpose.msra.mxu0 0.0
    %422 = vmatprep.subr.mxu0 0.0
    %423 = vmatpush1.xpose.msra.mxu0 0.0
    %424 = vmatprep.subr.mxu0 0.0
    %425 = vmatpush1.xpose.msra.mxu0 0.0
    %426 = vmatprep.subr.mxu0 0.0
    %427 = vmatpush1.xpose.msra.mxu0 0.0
    %428 = vmatprep.subr.mxu0 0.0
    %429 = vmatpush1.xpose.msra.mxu0 0.0
    %430 = vmatprep.subr.mxu0 0.0
    %431 = vmatpush1.xpose.msra.mxu0 0.0
    %432 = vmatprep.subr.mxu0 0.0
    %433 = vmatpush1.xpose.msra.mxu0 0.0
    %434 = vmatprep.subr.mxu0 0.0
    %435 = vmatpush1.xpose.msra.mxu0 0.0
    %436 = vmatprep.subr.mxu0 0.0
    %437 = vmatpush1.xpose.msra.mxu0 0.0
    %438 = vmatprep.subr.mxu0 0.0
    %439 = vmatpush1.xpose.msra.mxu0 0.0
    %440 = vmatprep.subr.mxu0 0.0
    %441 = vmatpush1.xpose.msra.mxu0 0.0
    %442 = vmatprep.subr.mxu0 0.0
    %443 = vmatpush1.xpose.msra.mxu0 0.0
    %444 = vmatprep.subr.mxu0 0.0
    %445 = vmatpush1.xpose.msra.mxu0 0.0
    %446 = vmatprep.subr.mxu0 0.0
    %447 = vmatpush1.xpose.msra.mxu0 0.0
    %448 = vmatprep.subr.mxu0 0.0
    %449 = vmatpush1.xpose.msra.mxu0 0.0
    %450 = vmatprep.subr.mxu0 0.0
    %451 = vmatpush1.xpose.msra.mxu0 0.0
    %452 = vmatprep.subr.mxu0 0.0
    %453 = vmatpush1.xpose.msra.mxu0 0.0
    %454 = vmatprep.mubr.f32.mxu0 0.0
    %455 = vmatmul.mubr.f32.gmra.mrb[0].mxu0 %v386
    %v456 = vpop.f32.mrb[0].mxu0
    %v457 = vadd.f32 0.0, %v456
    %v458 = vpop.f32.mrb[0].mxu0
    %459 = vdwg.mxu0
    %v460 = vmul.f32 %v380, 0.35355338
    %v461 = vmul.f32 %v457, 0.35355338
    %v462 = vadd.f32 %v460, %v132
    %v463 = vadd.f32 %v461, %v132
    %464 = vst.msk [vmem:[#allocation2] sm:$0xff] %vm308, %v462
    %465 = vst.msk [vmem:[#allocation2 + $0x8] sm:$0xff] %vm308, %v463
    %466 = vrot.lane.b32.xlu0 %v297, 120
    %v467 = vpop.permute.xlu0 %466
    %468 = vrot.lane.b32.xlu0 %v297, 88
    %v469 = vpop.permute.xlu0 %468
    %v470 = vsel %vm308, %v467, 0
    %v472 = vsel %vm308, %v469, 0
    %474 = vmatprep.subr.mxu0 0.0
    %475 = vmatpush1.xpose.msra.mxu0 %v472
    %476 = vmatprep.subr.mxu0 0.0
    %477 = vmatpush1.xpose.msra.mxu0 0.0
    %478 = vmatprep.subr.mxu0 0.0
    %479 = vmatpush1.xpose.msra.mxu0 0.0
    %480 = vmatprep.subr.mxu0 0.0
    %481 = vmatpush1.xpose.msra.mxu0 0.0
    %482 = vmatprep.subr.mxu0 0.0
    %483 = vmatpush1.xpose.msra.mxu0 0.0
    %484 = vmatprep.subr.mxu0 0.0
    %485 = vmatpush1.xpose.msra.mxu0 0.0
    %486 = vmatprep.subr.mxu0 0.0
    %487 = vmatpush1.xpose.msra.mxu0 0.0
    %488 = vmatprep.subr.mxu0 0.0
    %489 = vmatpush1.xpose.msra.mxu0 0.0
    %490 = vmatprep.subr.mxu0 0.0
    %491 = vmatpush1.xpose.msra.mxu0 0.0
    %492 = vmatprep.subr.mxu0 0.0
    %493 = vmatpush1.xpose.msra.mxu0 0.0
    %494 = vmatprep.subr.mxu0 0.0
    %495 = vmatpush1.xpose.msra.mxu0 0.0
    %496 = vmatprep.subr.mxu0 0.0
    %497 = vmatpush1.xpose.msra.mxu0 0.0
    %498 = vmatprep.subr.mxu0 0.0
    %499 = vmatpush1.xpose.msra.mxu0 0.0
    %500 = vmatprep.subr.mxu0 0.0
    %501 = vmatpush1.xpose.msra.mxu0 0.0
    %502 = vmatprep.subr.mxu0 0.0
    %503 = vmatpush1.xpose.msra.mxu0 0.0
    %504 = vmatprep.subr.mxu0 0.0
    %505 = vmatpush1.xpose.msra.mxu0 0.0
    %506 = vmatprep.subr.mxu0 0.0
    %507 = vmatpush1.xpose.msra.mxu0 0.0
    %508 = vmatprep.subr.mxu0 0.0
    %509 = vmatpush1.xpose.msra.mxu0 0.0
    %510 = vmatprep.subr.mxu0 0.0
    %511 = vmatpush1.xpose.msra.mxu0 0.0
    %512 = vmatprep.subr.mxu0 0.0
    %513 = vmatpush1.xpose.msra.mxu0 0.0
    %514 = vmatprep.subr.mxu0 0.0
    %515 = vmatpush1.xpose.msra.mxu0 0.0
    %516 = vmatprep.subr.mxu0 0.0
    %517 = vmatpush1.xpose.msra.mxu0 0.0
    %518 = vmatprep.subr.mxu0 0.0
    %519 = vmatpush1.xpose.msra.mxu0 0.0
    %520 = vmatprep.subr.mxu0 0.0
    %521 = vmatpush1.xpose.msra.mxu0 0.0
    %522 = vmatprep.subr.mxu0 0.0
    %523 = vmatpush1.xpose.msra.mxu0 0.0
    %524 = vmatprep.subr.mxu0 0.0
    %525 = vmatpush1.xpose.msra.mxu0 0.0
    %526 = vmatprep.subr.mxu0 0.0
    %527 = vmatpush1.xpose.msra.mxu0 0.0
    %528 = vmatprep.subr.mxu0 0.0
    %529 = vmatpush1.xpose.msra.mxu0 0.0
    %530 = vmatprep.subr.mxu0 0.0
    %531 = vmatpush1.xpose.msra.mxu0 0.0
    %532 = vmatprep.subr.mxu0 0.0
    %533 = vmatpush1.xpose.msra.mxu0 0.0
    %534 = vmatprep.subr.mxu0 0.0
    %535 = vmatpush1.xpose.msra.mxu0 0.0
    %536 = vmatprep.subr.mxu0 0.0
    %537 = vmatpush1.xpose.msra.mxu0 0.0
    %538 = vmatprep.mubr.f32.mxu0 0.0
    %539 = vmatmul.mubr.f32.gmra.mrb[0].mxu0 %v470
    %v540 = vpop.f32.mrb[0].mxu0
    %v541 = vadd.f32 0.0, %v540
    %v542 = vpop.f32.mrb[0].mxu0
    %543 = vdwg.mxu0
    %544 = vrot.lane.b32.xlu0 %v302, 120
    %v545 = vpop.permute.xlu0 %544
    %546 = vrot.lane.b32.xlu0 %v302, 88
    %v547 = vpop.permute.xlu0 %546
    %v548 = vsel %vm308, %v545, 0
    %v550 = vsel %vm308, %v547, 0
    %552 = vmatprep.subr.mxu0 0.0
    %553 = vmatpush1.xpose.msra.mxu0 %v550
    %554 = vmatprep.subr.mxu0 0.0
    %555 = vmatpush1.xpose.msra.mxu0 0.0
    %556 = vmatprep.subr.mxu0 0.0
    %557 = vmatpush1.xpose.msra.mxu0 0.0
    %558 = vmatprep.subr.mxu0 0.0
    %559 = vmatpush1.xpose.msra.mxu0 0.0
    %560 = vmatprep.subr.mxu0 0.0
    %561 = vmatpush1.xpose.msra.mxu0 0.0
    %562 = vmatprep.subr.mxu0 0.0
    %563 = vmatpush1.xpose.msra.mxu0 0.0
    %564 = vmatprep.subr.mxu0 0.0
    %565 = vmatpush1.xpose.msra.mxu0 0.0
    %566 = vmatprep.subr.mxu0 0.0
    %567 = vmatpush1.xpose.msra.mxu0 0.0
    %568 = vmatprep.subr.mxu0 0.0
    %569 = vmatpush1.xpose.msra.mxu0 0.0
    %570 = vmatprep.subr.mxu0 0.0
    %571 = vmatpush1.xpose.msra.mxu0 0.0
    %572 = vmatprep.subr.mxu0 0.0
    %573 = vmatpush1.xpose.msra.mxu0 0.0
    %574 = vmatprep.subr.mxu0 0.0
    %575 = vmatpush1.xpose.msra.mxu0 0.0
    %576 = vmatprep.subr.mxu0 0.0
    %577 = vmatpush1.xpose.msra.mxu0 0.0
    %578 = vmatprep.subr.mxu0 0.0
    %579 = vmatpush1.xpose.msra.mxu0 0.0
    %580 = vmatprep.subr.mxu0 0.0
    %581 = vmatpush1.xpose.msra.mxu0 0.0
    %582 = vmatprep.subr.mxu0 0.0
    %583 = vmatpush1.xpose.msra.mxu0 0.0
    %584 = vmatprep.subr.mxu0 0.0
    %585 = vmatpush1.xpose.msra.mxu0 0.0
    %586 = vmatprep.subr.mxu0 0.0
    %587 = vmatpush1.xpose.msra.mxu0 0.0
    %588 = vmatprep.subr.mxu0 0.0
    %589 = vmatpush1.xpose.msra.mxu0 0.0
    %590 = vmatprep.subr.mxu0 0.0
    %591 = vmatpush1.xpose.msra.mxu0 0.0
    %592 = vmatprep.subr.mxu0 0.0
    %593 = vmatpush1.xpose.msra.mxu0 0.0
    %594 = vmatprep.subr.mxu0 0.0
    %595 = vmatpush1.xpose.msra.mxu0 0.0
    %596 = vmatprep.subr.mxu0 0.0
    %597 = vmatpush1.xpose.msra.mxu0 0.0
    %598 = vmatprep.subr.mxu0 0.0
    %599 = vmatpush1.xpose.msra.mxu0 0.0
    %600 = vmatprep.subr.mxu0 0.0
    %601 = vmatpush1.xpose.msra.mxu0 0.0
    %602 = vmatprep.subr.mxu0 0.0
    %603 = vmatpush1.xpose.msra.mxu0 0.0
    %604 = vmatprep.subr.mxu0 0.0
    %605 = vmatpush1.xpose.msra.mxu0 0.0
    %606 = vmatprep.subr.mxu0 0.0
    %607 = vmatpush1.xpose.msra.mxu0 0.0
    %608 = vmatprep.subr.mxu0 0.0
    %609 = vmatpush1.xpose.msra.mxu0 0.0
    %610 = vmatprep.subr.mxu0 0.0
    %611 = vmatpush1.xpose.msra.mxu0 0.0
    %612 = vmatprep.subr.mxu0 0.0
    %613 = vmatpush1.xpose.msra.mxu0 0.0
    %614 = vmatprep.subr.mxu0 0.0
    %615 = vmatpush1.xpose.msra.mxu0 0.0
    %616 = vmatprep.mubr.f32.mxu0 0.0
    %617 = vmatmul.mubr.f32.gmra.mrb[0].mxu0 %v548
    %v618 = vpop.f32.mrb[0].mxu0
    %v619 = vadd.f32 0.0, %v618
    %v620 = vpop.f32.mrb[0].mxu0
    %621 = vdwg.mxu0
    %v622 = vmul.f32 %v541, 0.35355338
    %v623 = vmul.f32 %v619, 0.35355338
    %v624 = vadd.f32 %v622, %v132
    %v625 = vadd.f32 %v623, %v132
    %626 = vst.msk [vmem:[#allocation2 + $0x10] sm:$0xff] %vm308, %v624
    %627 = vst.msk [vmem:[#allocation2 + $0x18] sm:$0xff] %vm308, %v625
    %628 = vrot.lane.b32.xlu0 %v297, 112
    %v629 = vpop.permute.xlu0 %628
    %630 = vrot.lane.b32.xlu0 %v297, 80
    %v631 = vpop.permute.xlu0 %630
    %v632 = vsel %vm308, %v629, 0
    %v634 = vsel %vm308, %v631, 0
    %636 = vmatprep.subr.mxu0 0.0
    %637 = vmatpush1.xpose.msra.mxu0 %v634
    %638 = vmatprep.subr.mxu0 0.0
    %639 = vmatpush1.xpose.msra.mxu0 0.0
    %640 = vmatprep.subr.mxu0 0.0
    %641 = vmatpush1.xpose.msra.mxu0 0.0
    %642 = vmatprep.subr.mxu0 0.0
    %643 = vmatpush1.xpose.msra.mxu0 0.0
    %644 = vmatprep.subr.mxu0 0.0
    %645 = vmatpush1.xpose.msra.mxu0 0.0
    %646 = vmatprep.subr.mxu0 0.0
    %647 = vmatpush1.xpose.msra.mxu0 0.0
    %648 = vmatprep.subr.mxu0 0.0
    %649 = vmatpush1.xpose.msra.mxu0 0.0
    %650 = vmatprep.subr.mxu0 0.0
    %651 = vmatpush1.xpose.msra.mxu0 0.0
    %652 = vmatprep.subr.mxu0 0.0
    %653 = vmatpush1.xpose.msra.mxu0 0.0
    %654 = vmatprep.subr.mxu0 0.0
    %655 = vmatpush1.xpose.msra.mxu0 0.0
    %656 = vmatprep.subr.mxu0 0.0
    %657 = vmatpush1.xpose.msra.mxu0 0.0
    %658 = vmatprep.subr.mxu0 0.0
    %659 = vmatpush1.xpose.msra.mxu0 0.0
    %660 = vmatprep.subr.mxu0 0.0
    %661 = vmatpush1.xpose.msra.mxu0 0.0
    %662 = vmatprep.subr.mxu0 0.0
    %663 = vmatpush1.xpose.msra.mxu0 0.0
    %664 = vmatprep.subr.mxu0 0.0
    %665 = vmatpush1.xpose.msra.mxu0 0.0
    %666 = vmatprep.subr.mxu0 0.0
    %667 = vmatpush1.xpose.msra.mxu0 0.0
    %668 = vmatprep.subr.mxu0 0.0
    %669 = vmatpush1.xpose.msra.mxu0 0.0
    %670 = vmatprep.subr.mxu0 0.0
    %671 = vmatpush1.xpose.msra.mxu0 0.0
    %672 = vmatprep.subr.mxu0 0.0
    %673 = vmatpush1.xpose.msra.mxu0 0.0
    %674 = vmatprep.subr.mxu0 0.0
    %675 = vmatpush1.xpose.msra.mxu0 0.0
    %676 = vmatprep.subr.mxu0 0.0
    %677 = vmatpush1.xpose.msra.mxu0 0.0
    %678 = vmatprep.subr.mxu0 0.0
    %679 = vmatpush1.xpose.msra.mxu0 0.0
    %680 = vmatprep.subr.mxu0 0.0
    %681 = vmatpush1.xpose.msra.mxu0 0.0
    %682 = vmatprep.subr.mxu0 0.0
    %683 = vmatpush1.xpose.msra.mxu0 0.0
    %684 = vmatprep.subr.mxu0 0.0
    %685 = vmatpush1.xpose.msra.mxu0 0.0
    %686 = vmatprep.subr.mxu0 0.0
    %687 = vmatpush1.xpose.msra.mxu0 0.0
    %688 = vmatprep.subr.mxu0 0.0
    %689 = vmatpush1.xpose.msra.mxu0 0.0
    %690 = vmatprep.subr.mxu0 0.0
    %691 = vmatpush1.xpose.msra.mxu0 0.0
    %692 = vmatprep.subr.mxu0 0.0
    %693 = vmatpush1.xpose.msra.mxu0 0.0
    %694 = vmatprep.subr.mxu0 0.0
    %695 = vmatpush1.xpose.msra.mxu0 0.0
    %696 = vmatprep.subr.mxu0 0.0
    %697 = vmatpush1.xpose.msra.mxu0 0.0
    %698 = vmatprep.subr.mxu0 0.0
    %699 = vmatpush1.xpose.msra.mxu0 0.0
    %700 = vmatprep.mubr.f32.mxu0 0.0
    %701 = vmatmul.mubr.f32.gmra.mrb[0].mxu0 %v632
    %v702 = vpop.f32.mrb[0].mxu0
    %v703 = vadd.f32 0.0, %v702
    %v704 = vpop.f32.mrb[0].mxu0
    %705 = vdwg.mxu0
    %706 = vrot.lane.b32.xlu0 %v302, 112
    %v707 = vpop.permute.xlu0 %706
    %708 = vrot.lane.b32.xlu0 %v302, 80
    %v709 = vpop.permute.xlu0 %708
    %v710 = vsel %vm308, %v707, 0
    %v712 = vsel %vm308, %v709, 0
    %714 = vmatprep.subr.mxu0 0.0
    %715 = vmatpush1.xpose.msra.mxu0 %v712
    %716 = vmatprep.subr.mxu0 0.0
    %717 = vmatpush1.xpose.msra.mxu0 0.0
    %718 = vmatprep.subr.mxu0 0.0
    %719 = vmatpush1.xpose.msra.mxu0 0.0
    %720 = vmatprep.subr.mxu0 0.0
    %721 = vmatpush1.xpose.msra.mxu0 0.0
    %722 = vmatprep.subr.mxu0 0.0
    %723 = vmatpush1.xpose.msra.mxu0 0.0
    %724 = vmatprep.subr.mxu0 0.0
    %725 = vmatpush1.xpose.msra.mxu0 0.0
    %726 = vmatprep.subr.mxu0 0.0
    %727 = vmatpush1.xpose.msra.mxu0 0.0
    %728 = vmatprep.subr.mxu0 0.0
    %729 = vmatpush1.xpose.msra.mxu0 0.0
    %730 = vmatprep.subr.mxu0 0.0
    %731 = vmatpush1.xpose.msra.mxu0 0.0
    %732 = vmatprep.subr.mxu0 0.0
    %733 = vmatpush1.xpose.msra.mxu0 0.0
    %734 = vmatprep.subr.mxu0 0.0
    %735 = vmatpush1.xpose.msra.mxu0 0.0
    %736 = vmatprep.subr.mxu0 0.0
    %737 = vmatpush1.xpose.msra.mxu0 0.0
    %738 = vmatprep.subr.mxu0 0.0
    %739 = vmatpush1.xpose.msra.mxu0 0.0
    %740 = vmatprep.subr.mxu0 0.0
    %741 = vmatpush1.xpose.msra.mxu0 0.0
    %742 = vmatprep.subr.mxu0 0.0
    %743 = vmatpush1.xpose.msra.mxu0 0.0
    %744 = vmatprep.subr.mxu0 0.0
    %745 = vmatpush1.xpose.msra.mxu0 0.0
    %746 = vmatprep.subr.mxu0 0.0
    %747 = vmatpush1.xpose.msra.mxu0 0.0
    %748 = vmatprep.subr.mxu0 0.0
    %749 = vmatpush1.xpose.msra.mxu0 0.0
    %750 = vmatprep.subr.mxu0 0.0
    %751 = vmatpush1.xpose.msra.mxu0 0.0
    %752 = vmatprep.subr.mxu0 0.0
    %753 = vmatpush1.xpose.msra.mxu0 0.0
    %754 = vmatprep.subr.mxu0 0.0
    %755 = vmatpush1.xpose.msra.mxu0 0.0
    %756 = vmatprep.subr.mxu0 0.0
    %757 = vmatpush1.xpose.msra.mxu0 0.0
    %758 = vmatprep.subr.mxu0 0.0
    %759 = vmatpush1.xpose.msra.mxu0 0.0
    %760 = vmatprep.subr.mxu0 0.0
    %761 = vmatpush1.xpose.msra.mxu0 0.0
    %762 = vmatprep.subr.mxu0 0.0
    %763 = vmatpush1.xpose.msra.mxu0 0.0
    %764 = vmatprep.subr.mxu0 0.0
    %765 = vmatpush1.xpose.msra.mxu0 0.0
    %766 = vmatprep.subr.mxu0 0.0
    %767 = vmatpush1.xpose.msra.mxu0 0.0
    %768 = vmatprep.subr.mxu0 0.0
    %769 = vmatpush1.xpose.msra.mxu0 0.0
    %770 = vmatprep.subr.mxu0 0.0
    %771 = vmatpush1.xpose.msra.mxu0 0.0
    %772 = vmatprep.subr.mxu0 0.0
    %773 = vmatpush1.xpose.msra.mxu0 0.0
    %774 = vmatprep.subr.mxu0 0.0
    %775 = vmatpush1.xpose.msra.mxu0 0.0
    %776 = vmatprep.subr.mxu0 0.0
    %777 = vmatpush1.xpose.msra.mxu0 0.0
    %778 = vmatprep.mubr.f32.mxu0 0.0
    %779 = vmatmul.mubr.f32.gmra.mrb[0].mxu0 %v710
    %v780 = vpop.f32.mrb[0].mxu0
    %v781 = vadd.f32 0.0, %v780
    %v782 = vpop.f32.mrb[0].mxu0
    %783 = vdwg.mxu0
    %v784 = vmul.f32 %v703, 0.35355338
    %v785 = vmul.f32 %v781, 0.35355338
    %v786 = vadd.f32 %v784, %v132
    %v787 = vadd.f32 %v785, %v132
    %788 = vst.msk [vmem:[#allocation2 + $0x20] sm:$0xff] %vm308, %v786
    %789 = vst.msk [vmem:[#allocation2 + $0x28] sm:$0xff] %vm308, %v787
    %790 = vrot.lane.b32.xlu0 %v297, 104
    %v791 = vpop.permute.xlu0 %790
    %792 = vrot.lane.b32.xlu0 %v297, 72
    %v793 = vpop.permute.xlu0 %792
    %v794 = vsel %vm308, %v791, 0
    %v796 = vsel %vm308, %v793, 0
    %798 = vmatprep.subr.mxu0 0.0
    %799 = vmatpush1.xpose.msra.mxu0 %v796
    %800 = vmatprep.subr.mxu0 0.0
    %801 = vmatpush1.xpose.msra.mxu0 0.0
    %802 = vmatprep.subr.mxu0 0.0
    %803 = vmatpush1.xpose.msra.mxu0 0.0
    %804 = vmatprep.subr.mxu0 0.0
    %805 = vmatpush1.xpose.msra.mxu0 0.0
    %806 = vmatprep.subr.mxu0 0.0
    %807 = vmatpush1.xpose.msra.mxu0 0.0
    %808 = vmatprep.subr.mxu0 0.0
    %809 = vmatpush1.xpose.msra.mxu0 0.0
    %810 = vmatprep.subr.mxu0 0.0
    %811 = vmatpush1.xpose.msra.mxu0 0.0
    %812 = vmatprep.subr.mxu0 0.0
    %813 = vmatpush1.xpose.msra.mxu0 0.0
    %814 = vmatprep.subr.mxu0 0.0
    %815 = vmatpush1.xpose.msra.mxu0 0.0
    %816 = vmatprep.subr.mxu0 0.0
    %817 = vmatpush1.xpose.msra.mxu0 0.0
    %818 = vmatprep.subr.mxu0 0.0
    %819 = vmatpush1.xpose.msra.mxu0 0.0
    %820 = vmatprep.subr.mxu0 0.0
    %821 = vmatpush1.xpose.msra.mxu0 0.0
    %822 = vmatprep.subr.mxu0 0.0
    %823 = vmatpush1.xpose.msra.mxu0 0.0
    %824 = vmatprep.subr.mxu0 0.0
    %825 = vmatpush1.xpose.msra.mxu0 0.0
    %826 = vmatprep.subr.mxu0 0.0
    %827 = vmatpush1.xpose.msra.mxu0 0.0
    %828 = vmatprep.subr.mxu0 0.0
    %829 = vmatpush1.xpose.msra.mxu0 0.0
    %830 = vmatprep.subr.mxu0 0.0
    %831 = vmatpush1.xpose.msra.mxu0 0.0
    %832 = vmatprep.subr.mxu0 0.0
    %833 = vmatpush1.xpose.msra.mxu0 0.0
    %834 = vmatprep.subr.mxu0 0.0
    %835 = vmatpush1.xpose.msra.mxu0 0.0
    %836 = vmatprep.subr.mxu0 0.0
    %837 = vmatpush1.xpose.msra.mxu0 0.0
    %838 = vmatprep.subr.mxu0 0.0
    %839 = vmatpush1.xpose.msra.mxu0 0.0
    %840 = vmatprep.subr.mxu0 0.0
    %841 = vmatpush1.xpose.msra.mxu0 0.0
    %842 = vmatprep.subr.mxu0 0.0
    %843 = vmatpush1.xpose.msra.mxu0 0.0
    %844 = vmatprep.subr.mxu0 0.0
    %845 = vmatpush1.xpose.msra.mxu0 0.0
    %846 = vmatprep.subr.mxu0 0.0
    %847 = vmatpush1.xpose.msra.mxu0 0.0
    %848 = vmatprep.subr.mxu0 0.0
    %849 = vmatpush1.xpose.msra.mxu0 0.0
    %850 = vmatprep.subr.mxu0 0.0
    %851 = vmatpush1.xpose.msra.mxu0 0.0
    %852 = vmatprep.subr.mxu0 0.0
    %853 = vmatpush1.xpose.msra.mxu0 0.0
    %854 = vmatprep.subr.mxu0 0.0
    %855 = vmatpush1.xpose.msra.mxu0 0.0
    %856 = vmatprep.subr.mxu0 0.0
    %857 = vmatpush1.xpose.msra.mxu0 0.0
    %858 = vmatprep.subr.mxu0 0.0
    %859 = vmatpush1.xpose.msra.mxu0 0.0
    %860 = vmatprep.subr.mxu0 0.0
    %861 = vmatpush1.xpose.msra.mxu0 0.0
    %862 = vmatprep.mubr.f32.mxu0 0.0
    %863 = vmatmul.mubr.f32.gmra.mrb[0].mxu0 %v794
    %v864 = vpop.f32.mrb[0].mxu0
    %v865 = vadd.f32 0.0, %v864
    %v866 = vpop.f32.mrb[0].mxu0
    %867 = vdwg.mxu0
    %868 = vrot.lane.b32.xlu0 %v302, 104
    %v869 = vpop.permute.xlu0 %868
    %870 = vrot.lane.b32.xlu0 %v302, 72
    %v871 = vpop.permute.xlu0 %870
    %v872 = vsel %vm308, %v869, 0
    %v874 = vsel %vm308, %v871, 0
    %876 = vmatprep.subr.mxu0 0.0
    %877 = vmatpush1.xpose.msra.mxu0 %v874
    %878 = vmatprep.subr.mxu0 0.0
    %879 = vmatpush1.xpose.msra.mxu0 0.0
    %880 = vmatprep.subr.mxu0 0.0
    %881 = vmatpush1.xpose.msra.mxu0 0.0
    %882 = vmatprep.subr.mxu0 0.0
    %883 = vmatpush1.xpose.msra.mxu0 0.0
    %884 = vmatprep.subr.mxu0 0.0
    %885 = vmatpush1.xpose.msra.mxu0 0.0
    %886 = vmatprep.subr.mxu0 0.0
    %887 = vmatpush1.xpose.msra.mxu0 0.0
    %888 = vmatprep.subr.mxu0 0.0
    %889 = vmatpush1.xpose.msra.mxu0 0.0
    %890 = vmatprep.subr.mxu0 0.0
    %891 = vmatpush1.xpose.msra.mxu0 0.0
    %892 = vmatprep.subr.mxu0 0.0
    %893 = vmatpush1.xpose.msra.mxu0 0.0
    %894 = vmatprep.subr.mxu0 0.0
    %895 = vmatpush1.xpose.msra.mxu0 0.0
    %896 = vmatprep.subr.mxu0 0.0
    %897 = vmatpush1.xpose.msra.mxu0 0.0
    %898 = vmatprep.subr.mxu0 0.0
    %899 = vmatpush1.xpose.msra.mxu0 0.0
    %900 = vmatprep.subr.mxu0 0.0
    %901 = vmatpush1.xpose.msra.mxu0 0.0
    %902 = vmatprep.subr.mxu0 0.0
    %903 = vmatpush1.xpose.msra.mxu0 0.0
    %904 = vmatprep.subr.mxu0 0.0
    %905 = vmatpush1.xpose.msra.mxu0 0.0
    %906 = vmatprep.subr.mxu0 0.0
    %907 = vmatpush1.xpose.msra.mxu0 0.0
    %908 = vmatprep.subr.mxu0 0.0
    %909 = vmatpush1.xpose.msra.mxu0 0.0
    %910 = vmatprep.subr.mxu0 0.0
    %911 = vmatpush1.xpose.msra.mxu0 0.0
    %912 = vmatprep.subr.mxu0 0.0
    %913 = vmatpush1.xpose.msra.mxu0 0.0
    %914 = vmatprep.subr.mxu0 0.0
    %915 = vmatpush1.xpose.msra.mxu0 0.0
    %916 = vmatprep.subr.mxu0 0.0
    %917 = vmatpush1.xpose.msra.mxu0 0.0
    %918 = vmatprep.subr.mxu0 0.0
    %919 = vmatpush1.xpose.msra.mxu0 0.0
    %920 = vmatprep.subr.mxu0 0.0
    %921 = vmatpush1.xpose.msra.mxu0 0.0
    %922 = vmatprep.subr.mxu0 0.0
    %923 = vmatpush1.xpose.msra.mxu0 0.0
    %924 = vmatprep.subr.mxu0 0.0
    %925 = vmatpush1.xpose.msra.mxu0 0.0
    %926 = vmatprep.subr.mxu0 0.0
    %927 = vmatpush1.xpose.msra.mxu0 0.0
    %928 = vmatprep.subr.mxu0 0.0
    %929 = vmatpush1.xpose.msra.mxu0 0.0
    %930 = vmatprep.subr.mxu0 0.0
    %931 = vmatpush1.xpose.msra.mxu0 0.0
    %932 = vmatprep.subr.mxu0 0.0
    %933 = vmatpush1.xpose.msra.mxu0 0.0
    %934 = vmatprep.subr.mxu0 0.0
    %935 = vmatpush1.xpose.msra.mxu0 0.0
    %936 = vmatprep.subr.mxu0 0.0
    %937 = vmatpush1.xpose.msra.mxu0 0.0
    %938 = vmatprep.subr.mxu0 0.0
    %939 = vmatpush1.xpose.msra.mxu0 0.0
    %940 = vmatprep.mubr.f32.mxu0 0.0
    %941 = vmatmul.mubr.f32.gmra.mrb[0].mxu0 %v872
    %v942 = vpop.f32.mrb[0].mxu0
    %v943 = vadd.f32 0.0, %v942
    %v944 = vpop.f32.mrb[0].mxu0
    %945 = vdwg.mxu0
    %v946 = vmul.f32 %v865, 0.35355338
    %v947 = vmul.f32 %v943, 0.35355338
    %v948 = vadd.f32 %v946, %v132
    %v949 = vadd.f32 %v947, %v132
    %950 = vst.msk [vmem:[#allocation2 + $0x30] sm:$0xff] %vm308, %v948
    %951 = vst.msk [vmem:[#allocation2 + $0x38] sm:$0xff] %vm308, %v949
    %v952 = vld [vmem:[#allocation2] sm:$0xff]
    %v953 = vld [vmem:[#allocation2 + $0x8] sm:$0xff]
    %v954 = vld [vmem:[#allocation2 + $0x10] sm:$0xff]
    %v955 = vld [vmem:[#allocation2 + $0x18] sm:$0xff]
    %v956 = vld [vmem:[#allocation2 + $0x20] sm:$0xff]
    %v957 = vld [vmem:[#allocation2 + $0x28] sm:$0xff]
    %v958 = vld [vmem:[#allocation2 + $0x30] sm:$0xff]
    %v959 = vld [vmem:[#allocation2 + $0x38] sm:$0xff]
    %v960 = vsel %vm308, %v952, -inf
    %961 = vmax.xlane.f32.xlu0 %v960
    %v962 = vpop.xlane.xlu0 %961
    %v963 = vsel %vm308, %v953, -inf
    %964 = vmax.xlane.f32.xlu0 %v963
    %v965 = vpop.xlane.xlu0 %964
    %v966 = vsel %vm308, %v954, -inf
    %967 = vmax.xlane.f32.xlu0 %v966
    %v968 = vpop.xlane.xlu0 %967
    %v969 = vsel %vm308, %v955, -inf
    %970 = vmax.xlane.f32.xlu0 %v969
    %v971 = vpop.xlane.xlu0 %970
    %v972 = vsel %vm308, %v956, -inf
    %973 = vmax.xlane.f32.xlu0 %v972
    %v974 = vpop.xlane.xlu0 %973
    %v975 = vsel %vm308, %v957, -inf
    %976 = vmax.xlane.f32.xlu0 %v975
    %v977 = vpop.xlane.xlu0 %976
    %v978 = vsel %vm308, %v958, -inf
    %979 = vmax.xlane.f32.xlu0 %v978
    %v980 = vpop.xlane.xlu0 %979
    %v981 = vsel %vm308, %v959, -inf
    %982 = vmax.xlane.f32.xlu0 %v981
    %v983 = vpop.xlane.xlu0 %982
    %v984 = vsub.f32 %v952, %v962
    %v985 = vsub.f32 %v953, %v965
    %v986 = vsub.f32 %v954, %v968
    %v987 = vsub.f32 %v955, %v971
    %v988 = vsub.f32 %v956, %v974
    %v989 = vsub.f32 %v957, %v977
    %v990 = vsub.f32 %v958, %v980
    %v991 = vsub.f32 %v959, %v983
    %v992 = vmul.f32 %v984, 1.442695
    %v993 = vpow.pop %v992
    %v994 = vmul.f32 %v985, 1.442695
    %v995 = vpow.pop %v994
    %v996 = vmul.f32 %v986, 1.442695
    %v997 = vpow.pop %v996
    %v998 = vmul.f32 %v987, 1.442695
    %v999 = vpow.pop %v998
    %v1000 = vmul.f32 %v988, 1.442695
    %v1001 = vpow.pop %v1000
    %v1002 = vmul.f32 %v989, 1.442695
    %v1003 = vpow.pop %v1002
    %v1004 = vmul.f32 %v990, 1.442695
    %v1005 = vpow.pop %v1004
    %v1006 = vmul.f32 %v991, 1.442695
    %v1007 = vpow.pop %v1006
    %v1008 = vsel %vm308, %v993, 0.0
    %1009 = vadd.xlane.f32.xlu0 %v1008
    %v1010 = vpop.xlane.xlu0 %1009
    %v1011 = vsel %vm308, %v995, 0.0
    %1012 = vadd.xlane.f32.xlu0 %v1011
    %v1013 = vpop.xlane.xlu0 %1012
    %v1014 = vsel %vm308, %v997, 0.0
    %1015 = vadd.xlane.f32.xlu0 %v1014
    %v1016 = vpop.xlane.xlu0 %1015
    %v1017 = vsel %vm308, %v999, 0.0
    %1018 = vadd.xlane.f32.xlu0 %v1017
    %v1019 = vpop.xlane.xlu0 %1018
    %v1020 = vsel %vm308, %v1001, 0.0
    %1021 = vadd.xlane.f32.xlu0 %v1020
    %v1022 = vpop.xlane.xlu0 %1021
    %v1023 = vsel %vm308, %v1003, 0.0
    %1024 = vadd.xlane.f32.xlu0 %v1023
    %v1025 = vpop.xlane.xlu0 %1024
    %v1026 = vsel %vm308, %v1005, 0.0
    %1027 = vadd.xlane.f32.xlu0 %v1026
    %v1028 = vpop.xlane.xlu0 %1027
    %v1029 = vsel %vm308, %v1007, 0.0
    %1030 = vadd.xlane.f32.xlu0 %v1029
    %v1031 = vpop.xlane.xlu0 %1030
    %v1032 = vrcp.pop %v1010
    %v1033 = vmul.f32 %v993, %v1032
    %v1034 = vrcp.pop %v1013
    %v1035 = vmul.f32 %v995, %v1034
    %v1036 = vrcp.pop %v1016
    %v1037 = vmul.f32 %v997, %v1036
    %v1038 = vrcp.pop %v1019
    %v1039 = vmul.f32 %v999, %v1038
    %v1040 = vrcp.pop %v1022
    %v1041 = vmul.f32 %v1001, %v1040
    %v1042 = vrcp.pop %v1025
    %v1043 = vmul.f32 %v1003, %v1042
    %v1044 = vrcp.pop %v1028
    %v1045 = vmul.f32 %v1005, %v1044
    %v1046 = vrcp.pop %v1031
    %v1047 = vmul.f32 %v1007, %v1046
    %1048 = vrot.lane.b32.xlu0 %v297, 64
    %v1049 = vpop.permute.xlu0 %1048
    %v1052 = vsel %vm308, %v1033, 0
    %1054 = vmatprep.subr.mxu0 0.0
    %1055 = vmatpush1.msra.mxu0 %v1049
    %1056 = vmatprep.subr.mxu0 0.0
    %1057 = vmatpush1.msra.mxu0 0.0
    %1058 = vmatprep.subr.mxu0 0.0
    %1059 = vmatpush1.msra.mxu0 0.0
    %1060 = vmatprep.subr.mxu0 0.0
    %1061 = vmatpush1.msra.mxu0 0.0
    %1062 = vmatprep.subr.mxu0 0.0
    %1063 = vmatpush1.msra.mxu0 0.0
    %1064 = vmatprep.subr.mxu0 0.0
    %1065 = vmatpush1.msra.mxu0 0.0
    %1066 = vmatprep.subr.mxu0 0.0
    %1067 = vmatpush1.msra.mxu0 0.0
    %1068 = vmatprep.subr.mxu0 0.0
    %1069 = vmatpush1.msra.mxu0 0.0
    %1070 = vmatprep.subr.mxu0 0.0
    %1071 = vmatpush1.msra.mxu0 0.0
    %1072 = vmatprep.subr.mxu0 0.0
    %1073 = vmatpush1.msra.mxu0 0.0
    %1074 = vmatprep.subr.mxu0 0.0
    %1075 = vmatpush1.msra.mxu0 0.0
    %1076 = vmatprep.subr.mxu0 0.0
    %1077 = vmatpush1.msra.mxu0 0.0
    %1078 = vmatprep.subr.mxu0 0.0
    %1079 = vmatpush1.msra.mxu0 0.0
    %1080 = vmatprep.subr.mxu0 0.0
    %1081 = vmatpush1.msra.mxu0 0.0
    %1082 = vmatprep.subr.mxu0 0.0
    %1083 = vmatpush1.msra.mxu0 0.0
    %1084 = vmatprep.subr.mxu0 0.0
    %1085 = vmatpush1.msra.mxu0 0.0
    %1086 = vmatprep.subr.mxu0 0.0
    %1087 = vmatpush1.msra.mxu0 0.0
    %1088 = vmatprep.subr.mxu0 0.0
    %1089 = vmatpush1.msra.mxu0 0.0
    %1090 = vmatprep.subr.mxu0 0.0
    %1091 = vmatpush1.msra.mxu0 0.0
    %1092 = vmatprep.subr.mxu0 0.0
    %1093 = vmatpush1.msra.mxu0 0.0
    %1094 = vmatprep.subr.mxu0 0.0
    %1095 = vmatpush1.msra.mxu0 0.0
    %1096 = vmatprep.subr.mxu0 0.0
    %1097 = vmatpush1.msra.mxu0 0.0
    %1098 = vmatprep.subr.mxu0 0.0
    %1099 = vmatpush1.msra.mxu0 0.0
    %1100 = vmatprep.subr.mxu0 0.0
    %1101 = vmatpush1.msra.mxu0 0.0
    %1102 = vmatprep.subr.mxu0 0.0
    %1103 = vmatpush1.msra.mxu0 0.0
    %1104 = vmatprep.subr.mxu0 0.0
    %1105 = vmatpush1.msra.mxu0 0.0
    %1106 = vmatprep.subr.mxu0 0.0
    %1107 = vmatpush1.msra.mxu0 0.0
    %1108 = vmatprep.subr.mxu0 0.0
    %1109 = vmatpush1.msra.mxu0 0.0
    %1110 = vmatprep.subr.mxu0 0.0
    %1111 = vmatpush1.msra.mxu0 0.0
    %1112 = vmatprep.subr.mxu0 0.0
    %1113 = vmatpush1.msra.mxu0 0.0
    %1114 = vmatprep.subr.mxu0 0.0
    %1115 = vmatpush1.msra.mxu0 0.0
    %1116 = vmatprep.subr.mxu0 0.0
    %1117 = vmatpush1.msra.mxu0 0.0
    %1118 = vmatprep.mubr.f32.mxu0 0.0
    %1119 = vmatmul.mubr.f32.gmra.mrb[0].mxu0 %v1052
    %v1120 = vpop.f32.mrb[0].mxu0
    %v1121 = vadd.f32 0.0, %v1120
    %v1122 = vpop.f32.mrb[0].mxu0
    %1123 = vdwg.mxu0
    %1124 = vrot.lane.b32.xlu0 %v302, 64
    %v1125 = vpop.permute.xlu0 %1124
    %v1128 = vsel %vm308, %v1035, 0
    %1130 = vmatprep.subr.mxu0 0.0
    %1131 = vmatpush1.msra.mxu0 %v1125
    %1132 = vmatprep.subr.mxu0 0.0
    %1133 = vmatpush1.msra.mxu0 0.0
    %1134 = vmatprep.subr.mxu0 0.0
    %1135 = vmatpush1.msra.mxu0 0.0
    %1136 = vmatprep.subr.mxu0 0.0
    %1137 = vmatpush1.msra.mxu0 0.0
    %1138 = vmatprep.subr.mxu0 0.0
    %1139 = vmatpush1.msra.mxu0 0.0
    %1140 = vmatprep.subr.mxu0 0.0
    %1141 = vmatpush1.msra.mxu0 0.0
    %1142 = vmatprep.subr.mxu0 0.0
    %1143 = vmatpush1.msra.mxu0 0.0
    %1144 = vmatprep.subr.mxu0 0.0
    %1145 = vmatpush1.msra.mxu0 0.0
    %1146 = vmatprep.subr.mxu0 0.0
    %1147 = vmatpush1.msra.mxu0 0.0
    %1148 = vmatprep.subr.mxu0 0.0
    %1149 = vmatpush1.msra.mxu0 0.0
    %1150 = vmatprep.subr.mxu0 0.0
    %1151 = vmatpush1.msra.mxu0 0.0
    %1152 = vmatprep.subr.mxu0 0.0
    %1153 = vmatpush1.msra.mxu0 0.0
    %1154 = vmatprep.subr.mxu0 0.0
    %1155 = vmatpush1.msra.mxu0 0.0
    %1156 = vmatprep.subr.mxu0 0.0
    %1157 = vmatpush1.msra.mxu0 0.0
    %1158 = vmatprep.subr.mxu0 0.0
    %1159 = vmatpush1.msra.mxu0 0.0
    %1160 = vmatprep.subr.mxu0 0.0
    %1161 = vmatpush1.msra.mxu0 0.0
    %1162 = vmatprep.subr.mxu0 0.0
    %1163 = vmatpush1.msra.mxu0 0.0
    %1164 = vmatprep.subr.mxu0 0.0
    %1165 = vmatpush1.msra.mxu0 0.0
    %1166 = vmatprep.subr.mxu0 0.0
    %1167 = vmatpush1.msra.mxu0 0.0
    %1168 = vmatprep.subr.mxu0 0.0
    %1169 = vmatpush1.msra.mxu0 0.0
    %1170 = vmatprep.subr.mxu0 0.0
    %1171 = vmatpush1.msra.mxu0 0.0
    %1172 = vmatprep.subr.mxu0 0.0
    %1173 = vmatpush1.msra.mxu0 0.0
    %1174 = vmatprep.subr.mxu0 0.0
    %1175 = vmatpush1.msra.mxu0 0.0
    %1176 = vmatprep.subr.mxu0 0.0
    %1177 = vmatpush1.msra.mxu0 0.0
    %1178 = vmatprep.subr.mxu0 0.0
    %1179 = vmatpush1.msra.mxu0 0.0
    %1180 = vmatprep.subr.mxu0 0.0
    %1181 = vmatpush1.msra.mxu0 0.0
    %1182 = vmatprep.subr.mxu0 0.0
    %1183 = vmatpush1.msra.mxu0 0.0
    %1184 = vmatprep.subr.mxu0 0.0
    %1185 = vmatpush1.msra.mxu0 0.0
    %1186 = vmatprep.subr.mxu0 0.0
    %1187 = vmatpush1.msra.mxu0 0.0
    %1188 = vmatprep.subr.mxu0 0.0
    %1189 = vmatpush1.msra.mxu0 0.0
    %1190 = vmatprep.subr.mxu0 0.0
    %1191 = vmatpush1.msra.mxu0 0.0
    %1192 = vmatprep.subr.mxu0 0.0
    %1193 = vmatpush1.msra.mxu0 0.0
    %1194 = vmatprep.mubr.f32.mxu0 0.0
    %1195 = vmatmul.mubr.f32.gmra.mrb[0].mxu0 %v1128
    %v1196 = vpop.f32.mrb[0].mxu0
    %v1197 = vadd.f32 0.0, %v1196
    %v1198 = vpop.f32.mrb[0].mxu0
    %1199 = vdwg.mxu0
    %1200 = vst.msk [vmem:[#allocation3] sm:$0xff] %vm308, %v1121
    %1201 = vst.msk [vmem:[#allocation3 + $0x8] sm:$0xff] %vm308, %v1197
    %1202 = vrot.lane.b32.xlu0 %v297, 56
    %v1203 = vpop.permute.xlu0 %1202
    %v1206 = vsel %vm308, %v1037, 0
    %1208 = vmatprep.subr.mxu0 0.0
    %1209 = vmatpush1.msra.mxu0 %v1203
    %1210 = vmatprep.subr.mxu0 0.0
    %1211 = vmatpush1.msra.mxu0 0.0
    %1212 = vmatprep.subr.mxu0 0.0
    %1213 = vmatpush1.msra.mxu0 0.0
    %1214 = vmatprep.subr.mxu0 0.0
    %1215 = vmatpush1.msra.mxu0 0.0
    %1216 = vmatprep.subr.mxu0 0.0
    %1217 = vmatpush1.msra.mxu0 0.0
    %1218 = vmatprep.subr.mxu0 0.0
    %1219 = vmatpush1.msra.mxu0 0.0
    %1220 = vmatprep.subr.mxu0 0.0
    %1221 = vmatpush1.msra.mxu0 0.0
    %1222 = vmatprep.subr.mxu0 0.0
    %1223 = vmatpush1.msra.mxu0 0.0
    %1224 = vmatprep.subr.mxu0 0.0
    %1225 = vmatpush1.msra.mxu0 0.0
    %1226 = vmatprep.subr.mxu0 0.0
    %1227 = vmatpush1.msra.mxu0 0.0
    %1228 = vmatprep.subr.mxu0 0.0
    %1229 = vmatpush1.msra.mxu0 0.0
    %1230 = vmatprep.subr.mxu0 0.0
    %1231 = vmatpush1.msra.mxu0 0.0
    %1232 = vmatprep.subr.mxu0 0.0
    %1233 = vmatpush1.msra.mxu0 0.0
    %1234 = vmatprep.subr.mxu0 0.0
    %1235 = vmatpush1.msra.mxu0 0.0
    %1236 = vmatprep.subr.mxu0 0.0
    %1237 = vmatpush1.msra.mxu0 0.0
    %1238 = vmatprep.subr.mxu0 0.0
    %1239 = vmatpush1.msra.mxu0 0.0
    %1240 = vmatprep.subr.mxu0 0.0
    %1241 = vmatpush1.msra.mxu0 0.0
    %1242 = vmatprep.subr.mxu0 0.0
    %1243 = vmatpush1.msra.mxu0 0.0
    %1244 = vmatprep.subr.mxu0 0.0
    %1245 = vmatpush1.msra.mxu0 0.0
    %1246 = vmatprep.subr.mxu0 0.0
    %1247 = vmatpush1.msra.mxu0 0.0
    %1248 = vmatprep.subr.mxu0 0.0
    %1249 = vmatpush1.msra.mxu0 0.0
    %1250 = vmatprep.subr.mxu0 0.0
    %1251 = vmatpush1.msra.mxu0 0.0
    %1252 = vmatprep.subr.mxu0 0.0
    %1253 = vmatpush1.msra.mxu0 0.0
    %1254 = vmatprep.subr.mxu0 0.0
    %1255 = vmatpush1.msra.mxu0 0.0
    %1256 = vmatprep.subr.mxu0 0.0
    %1257 = vmatpush1.msra.mxu0 0.0
    %1258 = vmatprep.subr.mxu0 0.0
    %1259 = vmatpush1.msra.mxu0 0.0
    %1260 = vmatprep.subr.mxu0 0.0
    %1261 = vmatpush1.msra.mxu0 0.0
    %1262 = vmatprep.subr.mxu0 0.0
    %1263 = vmatpush1.msra.mxu0 0.0
    %1264 = vmatprep.subr.mxu0 0.0
    %1265 = vmatpush1.msra.mxu0 0.0
    %1266 = vmatprep.subr.mxu0 0.0
    %1267 = vmatpush1.msra.mxu0 0.0
    %1268 = vmatprep.subr.mxu0 0.0
    %1269 = vmatpush1.msra.mxu0 0.0
    %1270 = vmatprep.subr.mxu0 0.0
    %1271 = vmatpush1.msra.mxu0 0.0
    %1272 = vmatprep.mubr.f32.mxu0 0.0
    %1273 = vmatmul.mubr.f32.gmra.mrb[0].mxu0 %v1206
    %v1274 = vpop.f32.mrb[0].mxu0
    %v1275 = vadd.f32 0.0, %v1274
    %v1276 = vpop.f32.mrb[0].mxu0
    %1277 = vdwg.mxu0
    %1278 = vrot.lane.b32.xlu0 %v302, 56
    %v1279 = vpop.permute.xlu0 %1278
    %v1282 = vsel %vm308, %v1039, 0
    %1284 = vmatprep.subr.mxu0 0.0
    %1285 = vmatpush1.msra.mxu0 %v1279
    %1286 = vmatprep.subr.mxu0 0.0
    %1287 = vmatpush1.msra.mxu0 0.0
    %1288 = vmatprep.subr.mxu0 0.0
    %1289 = vmatpush1.msra.mxu0 0.0
    %1290 = vmatprep.subr.mxu0 0.0
    %1291 = vmatpush1.msra.mxu0 0.0
    %1292 = vmatprep.subr.mxu0 0.0
    %1293 = vmatpush1.msra.mxu0 0.0
    %1294 = vmatprep.subr.mxu0 0.0
    %1295 = vmatpush1.msra.mxu0 0.0
    %1296 = vmatprep.subr.mxu0 0.0
    %1297 = vmatpush1.msra.mxu0 0.0
    %1298 = vmatprep.subr.mxu0 0.0
    %1299 = vmatpush1.msra.mxu0 0.0
    %1300 = vmatprep.subr.mxu0 0.0
    %1301 = vmatpush1.msra.mxu0 0.0
    %1302 = vmatprep.subr.mxu0 0.0
    %1303 = vmatpush1.msra.mxu0 0.0
    %1304 = vmatprep.subr.mxu0 0.0
    %1305 = vmatpush1.msra.mxu0 0.0
    %1306 = vmatprep.subr.mxu0 0.0
    %1307 = vmatpush1.msra.mxu0 0.0
    %1308 = vmatprep.subr.mxu0 0.0
    %1309 = vmatpush1.msra.mxu0 0.0
    %1310 = vmatprep.subr.mxu0 0.0
    %1311 = vmatpush1.msra.mxu0 0.0
    %1312 = vmatprep.subr.mxu0 0.0
    %1313 = vmatpush1.msra.mxu0 0.0
    %1314 = vmatprep.subr.mxu0 0.0
    %1315 = vmatpush1.msra.mxu0 0.0
    %1316 = vmatprep.subr.mxu0 0.0
    %1317 = vmatpush1.msra.mxu0 0.0
    %1318 = vmatprep.subr.mxu0 0.0
    %1319 = vmatpush1.msra.mxu0 0.0
    %1320 = vmatprep.subr.mxu0 0.0
    %1321 = vmatpush1.msra.mxu0 0.0
    %1322 = vmatprep.subr.mxu0 0.0
    %1323 = vmatpush1.msra.mxu0 0.0
    %1324 = vmatprep.subr.mxu0 0.0
    %1325 = vmatpush1.msra.mxu0 0.0
    %1326 = vmatprep.subr.mxu0 0.0
    %1327 = vmatpush1.msra.mxu0 0.0
    %1328 = vmatprep.subr.mxu0 0.0
    %1329 = vmatpush1.msra.mxu0 0.0
    %1330 = vmatprep.subr.mxu0 0.0
    %1331 = vmatpush1.msra.mxu0 0.0
    %1332 = vmatprep.subr.mxu0 0.0
    %1333 = vmatpush1.msra.mxu0 0.0
    %1334 = vmatprep.subr.mxu0 0.0
    %1335 = vmatpush1.msra.mxu0 0.0
    %1336 = vmatprep.subr.mxu0 0.0
    %1337 = vmatpush1.msra.mxu0 0.0
    %1338 = vmatprep.subr.mxu0 0.0
    %1339 = vmatpush1.msra.mxu0 0.0
    %1340 = vmatprep.subr.mxu0 0.0
    %1341 = vmatpush1.msra.mxu0 0.0
    %1342 = vmatprep.subr.mxu0 0.0
    %1343 = vmatpush1.msra.mxu0 0.0
    %1344 = vmatprep.subr.mxu0 0.0
    %1345 = vmatpush1.msra.mxu0 0.0
    %1346 = vmatprep.subr.mxu0 0.0
    %1347 = vmatpush1.msra.mxu0 0.0
    %1348 = vmatprep.mubr.f32.mxu0 0.0
    %1349 = vmatmul.mubr.f32.gmra.mrb[0].mxu0 %v1282
    %v1350 = vpop.f32.mrb[0].mxu0
    %v1351 = vadd.f32 0.0, %v1350
    %v1352 = vpop.f32.mrb[0].mxu0
    %1353 = vdwg.mxu0
    %1356 = vrot.lane.b32.xlu0 %v1275, 8
    %v1357 = vpop.permute.xlu0 %1356
    %1358 = vrot.lane.b32.xlu0 %v1351, 8
    %v1359 = vpop.permute.xlu0 %1358
    %vm1362 = vcmask 130112
    %1363 = vst.msk [vmem:[#allocation3] sm:$0xff] %vm1362, %v1357
    %1364 = vst.msk [vmem:[#allocation3 + $0x8] sm:$0xff] %vm1362, %v1359
    %1365 = vrot.lane.b32.xlu0 %v297, 48
    %v1366 = vpop.permute.xlu0 %1365
    %v1369 = vsel %vm308, %v1041, 0
    %1371 = vmatprep.subr.mxu0 0.0
    %1372 = vmatpush1.msra.mxu0 %v1366
    %1373 = vmatprep.subr.mxu0 0.0
    %1374 = vmatpush1.msra.mxu0 0.0
    %1375 = vmatprep.subr.mxu0 0.0
    %1376 = vmatpush1.msra.mxu0 0.0
    %1377 = vmatprep.subr.mxu0 0.0
    %1378 = vmatpush1.msra.mxu0 0.0
    %1379 = vmatprep.subr.mxu0 0.0
    %1380 = vmatpush1.msra.mxu0 0.0
    %1381 = vmatprep.subr.mxu0 0.0
    %1382 = vmatpush1.msra.mxu0 0.0
    %1383 = vmatprep.subr.mxu0 0.0
    %1384 = vmatpush1.msra.mxu0 0.0
    %1385 = vmatprep.subr.mxu0 0.0
    %1386 = vmatpush1.msra.mxu0 0.0
    %1387 = vmatprep.subr.mxu0 0.0
    %1388 = vmatpush1.msra.mxu0 0.0
    %1389 = vmatprep.subr.mxu0 0.0
    %1390 = vmatpush1.msra.mxu0 0.0
    %1391 = vmatprep.subr.mxu0 0.0
    %1392 = vmatpush1.msra.mxu0 0.0
    %1393 = vmatprep.subr.mxu0 0.0
    %1394 = vmatpush1.msra.mxu0 0.0
    %1395 = vmatprep.subr.mxu0 0.0
    %1396 = vmatpush1.msra.mxu0 0.0
    %1397 = vmatprep.subr.mxu0 0.0
    %1398 = vmatpush1.msra.mxu0 0.0
    %1399 = vmatprep.subr.mxu0 0.0
    %1400 = vmatpush1.msra.mxu0 0.0
    %1401 = vmatprep.subr.mxu0 0.0
    %1402 = vmatpush1.msra.mxu0 0.0
    %1403 = vmatprep.subr.mxu0 0.0
    %1404 = vmatpush1.msra.mxu0 0.0
    %1405 = vmatprep.subr.mxu0 0.0
    %1406 = vmatpush1.msra.mxu0 0.0
    %1407 = vmatprep.subr.mxu0 0.0
    %1408 = vmatpush1.msra.mxu0 0.0
    %1409 = vmatprep.subr.mxu0 0.0
    %1410 = vmatpush1.msra.mxu0 0.0
    %1411 = vmatprep.subr.mxu0 0.0
    %1412 = vmatpush1.msra.mxu0 0.0
    %1413 = vmatprep.subr.mxu0 0.0
    %1414 = vmatpush1.msra.mxu0 0.0
    %1415 = vmatprep.subr.mxu0 0.0
    %1416 = vmatpush1.msra.mxu0 0.0
    %1417 = vmatprep.subr.mxu0 0.0
    %1418 = vmatpush1.msra.mxu0 0.0
    %1419 = vmatprep.subr.mxu0 0.0
    %1420 = vmatpush1.msra.mxu0 0.0
    %1421 = vmatprep.subr.mxu0 0.0
    %1422 = vmatpush1.msra.mxu0 0.0
    %1423 = vmatprep.subr.mxu0 0.0
    %1424 = vmatpush1.msra.mxu0 0.0
    %1425 = vmatprep.subr.mxu0 0.0
    %1426 = vmatpush1.msra.mxu0 0.0
    %1427 = vmatprep.subr.mxu0 0.0
    %1428 = vmatpush1.msra.mxu0 0.0
    %1429 = vmatprep.subr.mxu0 0.0
    %1430 = vmatpush1.msra.mxu0 0.0
    %1431 = vmatprep.subr.mxu0 0.0
    %1432 = vmatpush1.msra.mxu0 0.0
    %1433 = vmatprep.subr.mxu0 0.0
    %1434 = vmatpush1.msra.mxu0 0.0
    %1435 = vmatprep.mubr.f32.mxu0 0.0
    %1436 = vmatmul.mubr.f32.gmra.mrb[0].mxu0 %v1369
    %v1437 = vpop.f32.mrb[0].mxu0
    %v1438 = vadd.f32 0.0, %v1437
    %v1439 = vpop.f32.mrb[0].mxu0
    %1440 = vdwg.mxu0
    %1441 = vrot.lane.b32.xlu0 %v302, 48
    %v1442 = vpop.permute.xlu0 %1441
    %v1445 = vsel %vm308, %v1043, 0
    %1447 = vmatprep.subr.mxu0 0.0
    %1448 = vmatpush1.msra.mxu0 %v1442
    %1449 = vmatprep.subr.mxu0 0.0
    %1450 = vmatpush1.msra.mxu0 0.0
    %1451 = vmatprep.subr.mxu0 0.0
    %1452 = vmatpush1.msra.mxu0 0.0
    %1453 = vmatprep.subr.mxu0 0.0
    %1454 = vmatpush1.msra.mxu0 0.0
    %1455 = vmatprep.subr.mxu0 0.0
    %1456 = vmatpush1.msra.mxu0 0.0
    %1457 = vmatprep.subr.mxu0 0.0
    %1458 = vmatpush1.msra.mxu0 0.0
    %1459 = vmatprep.subr.mxu0 0.0
    %1460 = vmatpush1.msra.mxu0 0.0
    %1461 = vmatprep.subr.mxu0 0.0
    %1462 = vmatpush1.msra.mxu0 0.0
    %1463 = vmatprep.subr.mxu0 0.0
    %1464 = vmatpush1.msra.mxu0 0.0
    %1465 = vmatprep.subr.mxu0 0.0
    %1466 = vmatpush1.msra.mxu0 0.0
    %1467 = vmatprep.subr.mxu0 0.0
    %1468 = vmatpush1.msra.mxu0 0.0
    %1469 = vmatprep.subr.mxu0 0.0
    %1470 = vmatpush1.msra.mxu0 0.0
    %1471 = vmatprep.subr.mxu0 0.0
    %1472 = vmatpush1.msra.mxu0 0.0
    %1473 = vmatprep.subr.mxu0 0.0
    %1474 = vmatpush1.msra.mxu0 0.0
    %1475 = vmatprep.subr.mxu0 0.0
    %1476 = vmatpush1.msra.mxu0 0.0
    %1477 = vmatprep.subr.mxu0 0.0
    %1478 = vmatpush1.msra.mxu0 0.0
    %1479 = vmatprep.subr.mxu0 0.0
    %1480 = vmatpush1.msra.mxu0 0.0
    %1481 = vmatprep.subr.mxu0 0.0
    %1482 = vmatpush1.msra.mxu0 0.0
    %1483 = vmatprep.subr.mxu0 0.0
    %1484 = vmatpush1.msra.mxu0 0.0
    %1485 = vmatprep.subr.mxu0 0.0
    %1486 = vmatpush1.msra.mxu0 0.0
    %1487 = vmatprep.subr.mxu0 0.0
    %1488 = vmatpush1.msra.mxu0 0.0
    %1489 = vmatprep.subr.mxu0 0.0
    %1490 = vmatpush1.msra.mxu0 0.0
    %1491 = vmatprep.subr.mxu0 0.0
    %1492 = vmatpush1.msra.mxu0 0.0
    %1493 = vmatprep.subr.mxu0 0.0
    %1494 = vmatpush1.msra.mxu0 0.0
    %1495 = vmatprep.subr.mxu0 0.0
    %1496 = vmatpush1.msra.mxu0 0.0
    %1497 = vmatprep.subr.mxu0 0.0
    %1498 = vmatpush1.msra.mxu0 0.0
    %1499 = vmatprep.subr.mxu0 0.0
    %1500 = vmatpush1.msra.mxu0 0.0
    %1501 = vmatprep.subr.mxu0 0.0
    %1502 = vmatpush1.msra.mxu0 0.0
    %1503 = vmatprep.subr.mxu0 0.0
    %1504 = vmatpush1.msra.mxu0 0.0
    %1505 = vmatprep.subr.mxu0 0.0
    %1506 = vmatpush1.msra.mxu0 0.0
    %1507 = vmatprep.subr.mxu0 0.0
    %1508 = vmatpush1.msra.mxu0 0.0
    %1509 = vmatprep.subr.mxu0 0.0
    %1510 = vmatpush1.msra.mxu0 0.0
    %1511 = vmatprep.mubr.f32.mxu0 0.0
    %1512 = vmatmul.mubr.f32.gmra.mrb[0].mxu0 %v1445
    %v1513 = vpop.f32.mrb[0].mxu0
    %v1514 = vadd.f32 0.0, %v1513
    %v1515 = vpop.f32.mrb[0].mxu0
    %1516 = vdwg.mxu0
    %1519 = vrot.lane.b32.xlu0 %v1438, 16
    %v1520 = vpop.permute.xlu0 %1519
    %1521 = vrot.lane.b32.xlu0 %v1514, 16
    %v1522 = vpop.permute.xlu0 %1521
    %vm1525 = vcmask 195712
    %1526 = vst.msk [vmem:[#allocation3] sm:$0xff] %vm1525, %v1520
    %1527 = vst.msk [vmem:[#allocation3 + $0x8] sm:$0xff] %vm1525, %v1522
    %1528 = vrot.lane.b32.xlu0 %v297, 40
    %v1529 = vpop.permute.xlu0 %1528
    %v1532 = vsel %vm308, %v1045, 0
    %1534 = vmatprep.subr.mxu0 0.0
    %1535 = vmatpush1.msra.mxu0 %v1529
    %1536 = vmatprep.subr.mxu0 0.0
    %1537 = vmatpush1.msra.mxu0 0.0
    %1538 = vmatprep.subr.mxu0 0.0
    %1539 = vmatpush1.msra.mxu0 0.0
    %1540 = vmatprep.subr.mxu0 0.0
    %1541 = vmatpush1.msra.mxu0 0.0
    %1542 = vmatprep.subr.mxu0 0.0
    %1543 = vmatpush1.msra.mxu0 0.0
    %1544 = vmatprep.subr.mxu0 0.0
    %1545 = vmatpush1.msra.mxu0 0.0
    %1546 = vmatprep.subr.mxu0 0.0
    %1547 = vmatpush1.msra.mxu0 0.0
    %1548 = vmatprep.subr.mxu0 0.0
    %1549 = vmatpush1.msra.mxu0 0.0
    %1550 = vmatprep.subr.mxu0 0.0
    %1551 = vmatpush1.msra.mxu0 0.0
    %1552 = vmatprep.subr.mxu0 0.0
    %1553 = vmatpush1.msra.mxu0 0.0
    %1554 = vmatprep.subr.mxu0 0.0
    %1555 = vmatpush1.msra.mxu0 0.0
    %1556 = vmatprep.subr.mxu0 0.0
    %1557 = vmatpush1.msra.mxu0 0.0
    %1558 = vmatprep.subr.mxu0 0.0
    %1559 = vmatpush1.msra.mxu0 0.0
    %1560 = vmatprep.subr.mxu0 0.0
    %1561 = vmatpush1.msra.mxu0 0.0
    %1562 = vmatprep.subr.mxu0 0.0
    %1563 = vmatpush1.msra.mxu0 0.0
    %1564 = vmatprep.subr.mxu0 0.0
    %1565 = vmatpush1.msra.mxu0 0.0
    %1566 = vmatprep.subr.mxu0 0.0
    %1567 = vmatpush1.msra.mxu0 0.0
    %1568 = vmatprep.subr.mxu0 0.0
    %1569 = vmatpush1.msra.mxu0 0.0
    %1570 = vmatprep.subr.mxu0 0.0
    %1571 = vmatpush1.msra.mxu0 0.0
    %1572 = vmatprep.subr.mxu0 0.0
    %1573 = vmatpush1.msra.mxu0 0.0
    %1574 = vmatprep.subr.mxu0 0.0
    %1575 = vmatpush1.msra.mxu0 0.0
    %1576 = vmatprep.subr.mxu0 0.0
    %1577 = vmatpush1.msra.mxu0 0.0
    %1578 = vmatprep.subr.mxu0 0.0
    %1579 = vmatpush1.msra.mxu0 0.0
    %1580 = vmatprep.subr.mxu0 0.0
    %1581 = vmatpush1.msra.mxu0 0.0
    %1582 = vmatprep.subr.mxu0 0.0
    %1583 = vmatpush1.msra.mxu0 0.0
    %1584 = vmatprep.subr.mxu0 0.0
    %1585 = vmatpush1.msra.mxu0 0.0
    %1586 = vmatprep.subr.mxu0 0.0
    %1587 = vmatpush1.msra.mxu0 0.0
    %1588 = vmatprep.subr.mxu0 0.0
    %1589 = vmatpush1.msra.mxu0 0.0
    %1590 = vmatprep.subr.mxu0 0.0
    %1591 = vmatpush1.msra.mxu0 0.0
    %1592 = vmatprep.subr.mxu0 0.0
    %1593 = vmatpush1.msra.mxu0 0.0
    %1594 = vmatprep.subr.mxu0 0.0
    %1595 = vmatpush1.msra.mxu0 0.0
    %1596 = vmatprep.subr.mxu0 0.0
    %1597 = vmatpush1.msra.mxu0 0.0
    %1598 = vmatprep.mubr.f32.mxu0 0.0
    %1599 = vmatmul.mubr.f32.gmra.mrb[0].mxu0 %v1532
    %v1600 = vpop.f32.mrb[0].mxu0
    %v1601 = vadd.f32 0.0, %v1600
    %v1602 = vpop.f32.mrb[0].mxu0
    %1603 = vdwg.mxu0
    %1604 = vrot.lane.b32.xlu0 %v302, 40
    %v1605 = vpop.permute.xlu0 %1604
    %v1608 = vsel %vm308, %v1047, 0
    %1610 = vmatprep.subr.mxu0 0.0
    %1611 = vmatpush1.msra.mxu0 %v1605
    %1612 = vmatprep.subr.mxu0 0.0
    %1613 = vmatpush1.msra.mxu0 0.0
    %1614 = vmatprep.subr.mxu0 0.0
    %1615 = vmatpush1.msra.mxu0 0.0
    %1616 = vmatprep.subr.mxu0 0.0
    %1617 = vmatpush1.msra.mxu0 0.0
    %1618 = vmatprep.subr.mxu0 0.0
    %1619 = vmatpush1.msra.mxu0 0.0
    %1620 = vmatprep.subr.mxu0 0.0
    %1621 = vmatpush1.msra.mxu0 0.0
    %1622 = vmatprep.subr.mxu0 0.0
    %1623 = vmatpush1.msra.mxu0 0.0
    %1624 = vmatprep.subr.mxu0 0.0
    %1625 = vmatpush1.msra.mxu0 0.0
    %1626 = vmatprep.subr.mxu0 0.0
    %1627 = vmatpush1.msra.mxu0 0.0
    %1628 = vmatprep.subr.mxu0 0.0
    %1629 = vmatpush1.msra.mxu0 0.0
    %1630 = vmatprep.subr.mxu0 0.0
    %1631 = vmatpush1.msra.mxu0 0.0
    %1632 = vmatprep.subr.mxu0 0.0
    %1633 = vmatpush1.msra.mxu0 0.0
    %1634 = vmatprep.subr.mxu0 0.0
    %1635 = vmatpush1.msra.mxu0 0.0
    %1636 = vmatprep.subr.mxu0 0.0
    %1637 = vmatpush1.msra.mxu0 0.0
    %1638 = vmatprep.subr.mxu0 0.0
    %1639 = vmatpush1.msra.mxu0 0.0
    %1640 = vmatprep.subr.mxu0 0.0
    %1641 = vmatpush1.msra.mxu0 0.0
    %1642 = vmatprep.subr.mxu0 0.0
    %1643 = vmatpush1.msra.mxu0 0.0
    %1644 = vmatprep.subr.mxu0 0.0
    %1645 = vmatpush1.msra.mxu0 0.0
    %1646 = vmatprep.subr.mxu0 0.0
    %1647 = vmatpush1.msra.mxu0 0.0
    %1648 = vmatprep.subr.mxu0 0.0
    %1649 = vmatpush1.msra.mxu0 0.0
    %1650 = vmatprep.subr.mxu0 0.0
    %1651 = vmatpush1.msra.mxu0 0.0
    %1652 = vmatprep.subr.mxu0 0.0
    %1653 = vmatpush1.msra.mxu0 0.0
    %1654 = vmatprep.subr.mxu0 0.0
    %1655 = vmatpush1.msra.mxu0 0.0
    %1656 = vmatprep.subr.mxu0 0.0
    %1657 = vmatpush1.msra.mxu0 0.0
    %1658 = vmatprep.subr.mxu0 0.0
    %1659 = vmatpush1.msra.mxu0 0.0
    %1660 = vmatprep.subr.mxu0 0.0
    %1661 = vmatpush1.msra.mxu0 0.0
    %1662 = vmatprep.subr.mxu0 0.0
    %1663 = vmatpush1.msra.mxu0 0.0
    %1664 = vmatprep.subr.mxu0 0.0
    %1665 = vmatpush1.msra.mxu0 0.0
    %1666 = vmatprep.subr.mxu0 0.0
    %1667 = vmatpush1.msra.mxu0 0.0
    %1668 = vmatprep.subr.mxu0 0.0
    %1669 = vmatpush1.msra.mxu0 0.0
    %1670 = vmatprep.subr.mxu0 0.0
    %1671 = vmatpush1.msra.mxu0 0.0
    %1672 = vmatprep.subr.mxu0 0.0
    %1673 = vmatpush1.msra.mxu0 0.0
    %1674 = vmatprep.mubr.f32.mxu0 0.0
    %1675 = vmatmul.mubr.f32.gmra.mrb[0].mxu0 %v1608
    %v1676 = vpop.f32.mrb[0].mxu0
    %v1677 = vadd.f32 0.0, %v1676
    %v1678 = vpop.f32.mrb[0].mxu0
    %1679 = vdwg.mxu0
    %1682 = vrot.lane.b32.xlu0 %v1601, 24
    %v1683 = vpop.permute.xlu0 %1682
    %1684 = vrot.lane.b32.xlu0 %v1677, 24
    %v1685 = vpop.permute.xlu0 %1684
    %vm1688 = vcmask 261312
    %1689 = vst.msk [vmem:[#allocation3] sm:$0xff] %vm1688, %v1683
    %1690 = vst.msk [vmem:[#allocation3 + $0x8] sm:$0xff] %vm1688, %v1685
    %v1691 = vld [vmem:[#allocation3] sm:$0xff]
    %v1692 = vld [vmem:[#allocation3 + $0x8] sm:$0xff]
    %v1694 = vlaneseq
    %v1695 = vshrl.u32 %v1694, 7
    %v1696 = vsub.s32 0, %v1695
    %v1697 = vrot.slane %v149, %v1696
    %v1700 = vsel %vm174, %v1691, 0
    %v1703 = vsel %vm174, %v1692, 0
    %1705 = vmatprep.subr.mxu0 0.0
    %1706 = vmatpush1.msra.mxu0 %v145
    %1707 = vmatprep.subr.mxu0 0.0
    %1708 = vmatpush1.msra.mxu0 %v146
    %1709 = vmatprep.subr.mxu0 0.0
    %1710 = vmatpush1.msra.mxu0 %v147
    %1711 = vmatprep.subr.mxu0 0.0
    %1712 = vmatpush1.msra.mxu0 %v148
    %1713 = vmatprep.subr.mxu0 0.0
    %1714 = vmatpush1.msra.mxu0 0.0
    %1715 = vmatprep.subr.mxu0 0.0
    %1716 = vmatpush1.msra.mxu0 0.0
    %1717 = vmatprep.subr.mxu0 0.0
    %1718 = vmatpush1.msra.mxu0 0.0
    %1719 = vmatprep.subr.mxu0 0.0
    %1720 = vmatpush1.msra.mxu0 0.0
    %1721 = vmatprep.subr.mxu0 0.0
    %1722 = vmatpush1.msra.mxu0 0.0
    %1723 = vmatprep.subr.mxu0 0.0
    %1724 = vmatpush1.msra.mxu0 0.0
    %1725 = vmatprep.subr.mxu0 0.0
    %1726 = vmatpush1.msra.mxu0 0.0
    %1727 = vmatprep.subr.mxu0 0.0
    %1728 = vmatpush1.msra.mxu0 0.0
    %1729 = vmatprep.subr.mxu0 0.0
    %1730 = vmatpush1.msra.mxu0 0.0
    %1731 = vmatprep.subr.mxu0 0.0
    %1732 = vmatpush1.msra.mxu0 0.0
    %1733 = vmatprep.subr.mxu0 0.0
    %1734 = vmatpush1.msra.mxu0 0.0
    %1735 = vmatprep.subr.mxu0 0.0
    %1736 = vmatpush1.msra.mxu0 0.0
    %1737 = vmatprep.subr.mxu0 0.0
    %1738 = vmatpush1.msra.mxu0 0.0
    %1739 = vmatprep.subr.mxu0 0.0
    %1740 = vmatpush1.msra.mxu0 0.0
    %1741 = vmatprep.subr.mxu0 0.0
    %1742 = vmatpush1.msra.mxu0 0.0
    %1743 = vmatprep.subr.mxu0 0.0
    %1744 = vmatpush1.msra.mxu0 0.0
    %1745 = vmatprep.subr.mxu0 0.0
    %1746 = vmatpush1.msra.mxu0 0.0
    %1747 = vmatprep.subr.mxu0 0.0
    %1748 = vmatpush1.msra.mxu0 0.0
    %1749 = vmatprep.subr.mxu0 0.0
    %1750 = vmatpush1.msra.mxu0 0.0
    %1751 = vmatprep.subr.mxu0 0.0
    %1752 = vmatpush1.msra.mxu0 0.0
    %1753 = vmatprep.subr.mxu0 0.0
    %1754 = vmatpush1.msra.mxu0 0.0
    %1755 = vmatprep.subr.mxu0 0.0
    %1756 = vmatpush1.msra.mxu0 0.0
    %1757 = vmatprep.subr.mxu0 0.0
    %1758 = vmatpush1.msra.mxu0 0.0
    %1759 = vmatprep.subr.mxu0 0.0
    %1760 = vmatpush1.msra.mxu0 0.0
    %1761 = vmatprep.subr.mxu0 0.0
    %1762 = vmatpush1.msra.mxu0 0.0
    %1763 = vmatprep.subr.mxu0 0.0
    %1764 = vmatpush1.msra.mxu0 0.0
    %1765 = vmatprep.subr.mxu0 0.0
    %1766 = vmatpush1.msra.mxu0 0.0
    %1767 = vmatprep.subr.mxu0 0.0
    %1768 = vmatpush1.msra.mxu0 0.0
    %1769 = vmatprep.mubr.f32.mxu0 0.0
    %1770 = vmatmul.mubr.f32.gmra.mrb[0].mxu0 %v1700
    %v1771 = vpop.f32.mrb[0].mxu0
    %v1772 = vadd.f32 %v1697, %v1771
    %v1773 = vpop.f32.mrb[0].mxu0
    %1774 = vmatprep.mubr.f32.mxu0 0.0
    %1775 = vmatmul.mubr.f32.gmra.mrb[0].mxu0 %v1703
    %v1776 = vpop.f32.mrb[0].mxu0
    %v1777 = vadd.f32 %v1697, %v1776
    %v1778 = vpop.f32.mrb[0].mxu0
    %1779 = vdwg.mxu0
    %v1780 = vadd.f32 %v136, %v1772
    %v1781 = vadd.f32 %v137, %v1777
    %v1782 = vsel %vm174, %v1780, 0.0
    %1783 = vadd.xlane.f32.xlu0 %v1782
    %v1784 = vpop.xlane.xlu0 %1783
    %v1785 = vsel %vm174, %v1781, 0.0
    %1786 = vadd.xlane.f32.xlu0 %v1785
    %v1787 = vpop.xlane.xlu0 %1786
    %v1788 = vmul.f32 %v1784, %v181
    %v1789 = vmul.f32 %v1787, %v181
    %v1790 = vsub.f32 %v1780, %v1788
    %v1791 = vsub.f32 %v1781, %v1789
    %v1792 = vmul.f32 %v1790, %v1790
    %v1793 = vmul.f32 %v1791, %v1791
    %v1794 = vsel %vm174, %v1792, 0.0
    %1795 = vadd.xlane.f32.xlu0 %v1794
    %v1796 = vpop.xlane.xlu0 %1795
    %v1797 = vsel %vm174, %v1793, 0.0
    %1798 = vadd.xlane.f32.xlu0 %v1797
    %v1799 = vpop.xlane.xlu0 %1798
    %v1800 = vmul.f32 %v1796, %v181
    %v1801 = vmul.f32 %v1799, %v181
    %v1802 = vadd.f32 %v1800, 1e-05
    %v1803 = vadd.f32 %v1801, 1e-05
    %v1804 = vrsqrt.pop %v1802
    %v1805 = vrsqrt.pop %v1803
    %v1806 = vmul.f32 %v1790, %v1804
    %v1807 = vmul.f32 %v1791, %v1805
    %v1809 = vlaneseq
    %v1810 = vshrl.u32 %v1809, 7
    %v1811 = vsub.s32 0, %v1810
    %v1812 = vrot.slane %v150, %v1811
    %v1814 = vmul.f32 %v1806, %v1812
    %v1815 = vmul.f32 %v1807, %v1812
    %v1817 = vlaneseq
    %v1818 = vshrl.u32 %v1817, 7
    %v1819 = vsub.s32 0, %v1818
    %v1820 = vrot.slane %v151, %v1819
    %v1822 = vadd.f32 %v1814, %v1820
    %v1823 = vadd.f32 %v1815, %v1820
    %v1825 = vlaneseq
    %v1826 = vshrl.u32 %v1825, 7
    %v1827 = vsub.s32 0, %v1826
    %v1828 = vrot.slane %v156, %v1827
    %v1831 = vsel %vm174, %v1822, 0
    %v1834 = vsel %vm174, %v1823, 0
    %1836 = vmatprep.subr.mxu0 0.0
    %1837 = vmatpush1.msra.mxu0 %v152
    %1838 = vmatprep.subr.mxu0 0.0
    %1839 = vmatpush1.msra.mxu0 %v153
    %1840 = vmatprep.subr.mxu0 0.0
    %1841 = vmatpush1.msra.mxu0 %v154
    %1842 = vmatprep.subr.mxu0 0.0
    %1843 = vmatpush1.msra.mxu0 %v155
    %1844 = vmatprep.subr.mxu0 0.0
    %1845 = vmatpush1.msra.mxu0 0.0
    %1846 = vmatprep.subr.mxu0 0.0
    %1847 = vmatpush1.msra.mxu0 0.0
    %1848 = vmatprep.subr.mxu0 0.0
    %1849 = vmatpush1.msra.mxu0 0.0
    %1850 = vmatprep.subr.mxu0 0.0
    %1851 = vmatpush1.msra.mxu0 0.0
    %1852 = vmatprep.subr.mxu0 0.0
    %1853 = vmatpush1.msra.mxu0 0.0
    %1854 = vmatprep.subr.mxu0 0.0
    %1855 = vmatpush1.msra.mxu0 0.0
    %1856 = vmatprep.subr.mxu0 0.0
    %1857 = vmatpush1.msra.mxu0 0.0
    %1858 = vmatprep.subr.mxu0 0.0
    %1859 = vmatpush1.msra.mxu0 0.0
    %1860 = vmatprep.subr.mxu0 0.0
    %1861 = vmatpush1.msra.mxu0 0.0
    %1862 = vmatprep.subr.mxu0 0.0
    %1863 = vmatpush1.msra.mxu0 0.0
    %1864 = vmatprep.subr.mxu0 0.0
    %1865 = vmatpush1.msra.mxu0 0.0
    %1866 = vmatprep.subr.mxu0 0.0
    %1867 = vmatpush1.msra.mxu0 0.0
    %1868 = vmatprep.subr.mxu0 0.0
    %1869 = vmatpush1.msra.mxu0 0.0
    %1870 = vmatprep.subr.mxu0 0.0
    %1871 = vmatpush1.msra.mxu0 0.0
    %1872 = vmatprep.subr.mxu0 0.0
    %1873 = vmatpush1.msra.mxu0 0.0
    %1874 = vmatprep.subr.mxu0 0.0
    %1875 = vmatpush1.msra.mxu0 0.0
    %1876 = vmatprep.subr.mxu0 0.0
    %1877 = vmatpush1.msra.mxu0 0.0
    %1878 = vmatprep.subr.mxu0 0.0
    %1879 = vmatpush1.msra.mxu0 0.0
    %1880 = vmatprep.subr.mxu0 0.0
    %1881 = vmatpush1.msra.mxu0 0.0
    %1882 = vmatprep.subr.mxu0 0.0
    %1883 = vmatpush1.msra.mxu0 0.0
    %1884 = vmatprep.subr.mxu0 0.0
    %1885 = vmatpush1.msra.mxu0 0.0
    %1886 = vmatprep.subr.mxu0 0.0
    %1887 = vmatpush1.msra.mxu0 0.0
    %1888 = vmatprep.subr.mxu0 0.0
    %1889 = vmatpush1.msra.mxu0 0.0
    %1890 = vmatprep.subr.mxu0 0.0
    %1891 = vmatpush1.msra.mxu0 0.0
    %1892 = vmatprep.subr.mxu0 0.0
    %1893 = vmatpush1.msra.mxu0 0.0
    %1894 = vmatprep.subr.mxu0 0.0
    %1895 = vmatpush1.msra.mxu0 0.0
    %1896 = vmatprep.subr.mxu0 0.0
    %1897 = vmatpush1.msra.mxu0 0.0
    %1898 = vmatprep.subr.mxu0 0.0
    %1899 = vmatpush1.msra.mxu0 0.0
    %1900 = vmatprep.mubr.f32.mxu0 0.0
    %1901 = vmatmul.mubr.f32.gmra.mrb[0].mxu0 %v1831
    %v1902 = vpop.f32.mrb[0].mxu0
    %v1903 = vadd.f32 %v1828, %v1902
    %v1904 = vpop.f32.mrb[0].mxu0
    %1905 = vmatprep.mubr.f32.mxu0 0.0
    %1906 = vmatmul.mubr.f32.gmra.mrb[0].mxu0 %v1834
    %v1907 = vpop.f32.mrb[0].mxu0
    %v1908 = vadd.f32 %v1828, %v1907
    %v1909 = vpop.f32.mrb[0].mxu0
    %1910 = vdwg.mxu0
    %v1911 = vmul.f32 %v1903, -1.702
    %v1912 = vmul.f32 %v1908, -1.702
    %v1913 = vmul.f32 %v1911, 1.442695
    %v1914 = vpow.pop %v1913
    %v1915 = vmul.f32 %v1912, 1.442695
    %v1916 = vpow.pop %v1915
    %v1917 = vadd.f32 %v1914, 1.0
    %v1918 = vadd.f32 %v1916, 1.0
    %v1919 = vrcp.pop %v1917
    %v1920 = vmul.f32 1.0, %v1919
    %v1921 = vrcp.pop %v1918
    %v1922 = vmul.f32 1.0, %v1921
    %v1923 = vmul.f32 %v1903, %v1920
    %v1924 = vmul.f32 %v1908, %v1922
    %1925 = vmatprep.subr.mxu0 0.0
    %1926 = vmatpush1.msra.mxu0 %v157
    %1927 = vmatprep.subr.mxu0 0.0
    %1928 = vmatpush1.msra.mxu0 %v158
    %1929 = vmatprep.subr.mxu0 0.0
    %1930 = vmatpush1.msra.mxu0 %v159
    %1931 = vmatprep.subr.mxu0 0.0
    %1932 = vmatpush1.msra.mxu0 %v160
    %1933 = vmatprep.subr.mxu0 0.0
    %1934 = vmatpush1.msra.mxu0 %v161
    %1935 = vmatprep.subr.mxu0 0.0
    %1936 = vmatpush1.msra.mxu0 %v162
    %1937 = vmatprep.subr.mxu0 0.0
    %1938 = vmatpush1.msra.mxu0 %v163
    %1939 = vmatprep.subr.mxu0 0.0
    %1940 = vmatpush1.msra.mxu0 %v164
    %1941 = vmatprep.subr.mxu0 0.0
    %1942 = vmatpush1.msra.mxu0 %v165
    %1943 = vmatprep.subr.mxu0 0.0
    %1944 = vmatpush1.msra.mxu0 %v166
    %1945 = vmatprep.subr.mxu0 0.0
    %1946 = vmatpush1.msra.mxu0 %v167
    %1947 = vmatprep.subr.mxu0 0.0
    %1948 = vmatpush1.msra.mxu0 %v168
    %1949 = vmatprep.subr.mxu0 0.0
    %1950 = vmatpush1.msra.mxu0 %v169
    %1951 = vmatprep.subr.mxu0 0.0
    %1952 = vmatpush1.msra.mxu0 %v170
    %1953 = vmatprep.subr.mxu0 0.0
    %1954 = vmatpush1.msra.mxu0 %v171
    %1955 = vmatprep.subr.mxu0 0.0
    %1956 = vmatpush1.msra.mxu0 %v172
    %1957 = vmatprep.subr.mxu0 0.0
    %1958 = vmatpush1.msra.mxu0 0.0
    %1959 = vmatprep.subr.mxu0 0.0
    %1960 = vmatpush1.msra.mxu0 0.0
    %1961 = vmatprep.subr.mxu0 0.0
    %1962 = vmatpush1.msra.mxu0 0.0
    %1963 = vmatprep.subr.mxu0 0.0
    %1964 = vmatpush1.msra.mxu0 0.0
    %1965 = vmatprep.subr.mxu0 0.0
    %1966 = vmatpush1.msra.mxu0 0.0
    %1967 = vmatprep.subr.mxu0 0.0
    %1968 = vmatpush1.msra.mxu0 0.0
    %1969 = vmatprep.subr.mxu0 0.0
    %1970 = vmatpush1.msra.mxu0 0.0
    %1971 = vmatprep.subr.mxu0 0.0
    %1972 = vmatpush1.msra.mxu0 0.0
    %1973 = vmatprep.subr.mxu0 0.0
    %1974 = vmatpush1.msra.mxu0 0.0
    %1975 = vmatprep.subr.mxu0 0.0
    %1976 = vmatpush1.msra.mxu0 0.0
    %1977 = vmatprep.subr.mxu0 0.0
    %1978 = vmatpush1.msra.mxu0 0.0
    %1979 = vmatprep.subr.mxu0 0.0
    %1980 = vmatpush1.msra.mxu0 0.0
    %1981 = vmatprep.subr.mxu0 0.0
    %1982 = vmatpush1.msra.mxu0 0.0
    %1983 = vmatprep.subr.mxu0 0.0
    %1984 = vmatpush1.msra.mxu0 0.0
    %1985 = vmatprep.subr.mxu0 0.0
    %1986 = vmatpush1.msra.mxu0 0.0
    %1987 = vmatprep.subr.mxu0 0.0
    %1988 = vmatpush1.msra.mxu0 0.0
    %1989 = vmatprep.mubr.f32.mxu0 0.0
    %1990 = vmatmul.mubr.f32.gmra.mrb[0].mxu0 %v1923
    %v1991 = vpop.f32.mrb[0].mxu0
    %v1992 = vadd.f32 0.0, %v1991
    %v1993 = vpop.f32.mrb[0].mxu0
    %1994 = vmatprep.mubr.f32.mxu0 0.0
    %1995 = vmatmul.mubr.f32.gmra.mrb[0].mxu0 %v1924
    %v1996 = vpop.f32.mrb[0].mxu0
    %v1997 = vadd.f32 0.0, %v1996
    %v1998 = vpop.f32.mrb[0].mxu0
    %1999 = vdwg.mxu0
    %v2000 = vadd.f32 %v1780, %v1992
    %v2001 = vadd.f32 %v1781, %v1997
    %v2003 = vlaneseq
    %v2004 = vshrl.u32 %v2003, 7
    %v2005 = vsub.s32 0, %v2004
    %v2006 = vrot.slane %v173, %v2005
    %v2008 = vadd.f32 %v2000, %v2006
    %v2009 = vadd.f32 %v2001, %v2006
    %v2010 = vld [vmem:[%s31] sm:$0x1]
    %v2011 = vld [vmem:[%s33] sm:$0x1]
    %v2012 = vld [vmem:[%s35] sm:$0xff]
    %v2013 = vld [vmem:[%s35 + $0x8] sm:$0xff]
    %v2014 = vld [vmem:[%s35 + $0x10] sm:$0xff]
    %v2015 = vld [vmem:[%s35 + $0x18] sm:$0xff]
    %v2016 = vld [vmem:[%s37] sm:$0x1]
    %v2017 = vld [vmem:[%s39] sm:$0xff]
    %v2018 = vld [vmem:[%s39 + $0x8] sm:$0xff]
    %v2019 = vld [vmem:[%s39 + $0x10] sm:$0xff]
    %v2020 = vld [vmem:[%s39 + $0x18] sm:$0xff]
    %v2021 = vld [vmem:[%s41] sm:$0x1]
    %v2022 = vld [vmem:[%s43] sm:$0x1]
    %v2023 = vld [vmem:[%s45] sm:$0x1]
    %v2024 = vld [vmem:[%s47] sm:$0xff]
    %v2025 = vld [vmem:[%s47 + $0x8] sm:$0xff]
    %v2026 = vld [vmem:[%s47 + $0x10] sm:$0xff]
    %v2027 = vld [vmem:[%s47 + $0x18] sm:$0xff]
    %v2028 = vld [vmem:[%s49] sm:$0x1]
    %v2029 = vld [vmem:[%s51] sm:$0xff]
    %v2030 = vld [vmem:[%s51 + $0x8] sm:$0xff]
    %v2031 = vld [vmem:[%s51 + $0x10] sm:$0xff]
    %v2032 = vld [vmem:[%s51 + $0x18] sm:$0xff]
    %v2033 = vld [vmem:[%s51 + $0x20] sm:$0xff]
    %v2034 = vld [vmem:[%s51 + $0x28] sm:$0xff]
    %v2035 = vld [vmem:[%s51 + $0x30] sm:$0xff]
    %v2036 = vld [vmem:[%s51 + $0x38] sm:$0xff]
    %v2037 = vld [vmem:[%s51 + $0x40] sm:$0xff]
    %v2038 = vld [vmem:[%s51 + $0x48] sm:$0xff]
    %v2039 = vld [vmem:[%s51 + $0x50] sm:$0xff]
    %v2040 = vld [vmem:[%s51 + $0x58] sm:$0xff]
    %v2041 = vld [vmem:[%s51 + $0x60] sm:$0xff]
    %v2042 = vld [vmem:[%s51 + $0x68] sm:$0xff]
    %v2043 = vld [vmem:[%s51 + $0x70] sm:$0xff]
    %v2044 = vld [vmem:[%s51 + $0x78] sm:$0xff]
    %v2045 = vld [vmem:[%s53] sm:$0x1]
    %v2046 = vsel %vm174, %v2008, 0.0
    %2047 = vadd.xlane.f32.xlu0 %v2046
    %v2048 = vpop.xlane.xlu0 %2047
    %v2049 = vsel %vm174, %v2009, 0.0
    %2050 = vadd.xlane.f32.xlu0 %v2049
    %v2051 = vpop.xlane.xlu0 %2050
    %v2052 = vmul.f32 %v2048, %v181
    %v2053 = vmul.f32 %v2051, %v181
    %v2054 = vsub.f32 %v2008, %v2052
    %v2055 = vsub.f32 %v2009, %v2053
    %v2056 = vmul.f32 %v2054, %v2054
    %v2057 = vmul.f32 %v2055, %v2055
    %v2058 = vsel %vm174, %v2056, 0.0
    %2059 = vadd.xlane.f32.xlu0 %v2058
    %v2060 = vpop.xlane.xlu0 %2059
    %v2061 = vsel %vm174, %v2057, 0.0
    %2062 = vadd.xlane.f32.xlu0 %v2061
    %v2063 = vpop.xlane.xlu0 %2062
    %v2064 = vmul.f32 %v2060, %v181
    %v2065 = vmul.f32 %v2063, %v181
    %v2066 = vadd.f32 %v2064, 1e-05
    %v2067 = vadd.f32 %v2065, 1e-05
    %v2068 = vrsqrt.pop %v2066
    %v2069 = vrsqrt.pop %v2067
    %v2070 = vmul.f32 %v2054, %v2068
    %v2071 = vmul.f32 %v2055, %v2069
    %v2073 = vlaneseq
    %v2074 = vshrl.u32 %v2073, 7
    %v2075 = vsub.s32 0, %v2074
    %v2076 = vrot.slane %v2010, %v2075
    %v2078 = vmul.f32 %v2070, %v2076
    %v2079 = vmul.f32 %v2071, %v2076
    %v2081 = vlaneseq
    %v2082 = vshrl.u32 %v2081, 7
    %v2083 = vsub.s32 0, %v2082
    %v2084 = vrot.slane %v2011, %v2083
    %v2086 = vadd.f32 %v2078, %v2084
    %v2087 = vadd.f32 %v2079, %v2084
    %v2089 = vlaneseq
    %v2090 = vshrl.u32 %v2089, 7
    %v2091 = vsub.s32 0, %v2090
    %v2092 = vrot.slane %v2016, %v2091
    %v2095 = vsel %vm174, %v2086, 0
    %v2098 = vsel %vm174, %v2087, 0
    %2100 = vmatprep.subr.mxu0 0.0
    %2101 = vmatpush1.msra.mxu0 %v2012
    %2102 = vmatprep.subr.mxu0 0.0
    %2103 = vmatpush1.msra.mxu0 %v2013
    %2104 = vmatprep.subr.mxu0 0.0
    %2105 = vmatpush1.msra.mxu0 %v2014
    %2106 = vmatprep.subr.mxu0 0.0
    %2107 = vmatpush1.msra.mxu0 %v2015
    %2108 = vmatprep.subr.mxu0 0.0
    %2109 = vmatpush1.msra.mxu0 0.0
    %2110 = vmatprep.subr.mxu0 0.0
    %2111 = vmatpush1.msra.mxu0 0.0
    %2112 = vmatprep.subr.mxu0 0.0
    %2113 = vmatpush1.msra.mxu0 0.0
    %2114 = vmatprep.subr.mxu0 0.0
    %2115 = vmatpush1.msra.mxu0 0.0
    %2116 = vmatprep.subr.mxu0 0.0
    %2117 = vmatpush1.msra.mxu0 0.0
    %2118 = vmatprep.subr.mxu0 0.0
    %2119 = vmatpush1.msra.mxu0 0.0
    %2120 = vmatprep.subr.mxu0 0.0
    %2121 = vmatpush1.msra.mxu0 0.0
    %2122 = vmatprep.subr.mxu0 0.0
    %2123 = vmatpush1.msra.mxu0 0.0
    %2124 = vmatprep.subr.mxu0 0.0
    %2125 = vmatpush1.msra.mxu0 0.0
    %2126 = vmatprep.subr.mxu0 0.0
    %2127 = vmatpush1.msra.mxu0 0.0
    %2128 = vmatprep.subr.mxu0 0.0
    %2129 = vmatpush1.msra.mxu0 0.0
    %2130 = vmatprep.subr.mxu0 0.0
    %2131 = vmatpush1.msra.mxu0 0.0
    %2132 = vmatprep.subr.mxu0 0.0
    %2133 = vmatpush1.msra.mxu0 0.0
    %2134 = vmatprep.subr.mxu0 0.0
    %2135 = vmatpush1.msra.mxu0 0.0
    %2136 = vmatprep.subr.mxu0 0.0
    %2137 = vmatpush1.msra.mxu0 0.0
    %2138 = vmatprep.subr.mxu0 0.0
    %2139 = vmatpush1.msra.mxu0 0.0
    %2140 = vmatprep.subr.mxu0 0.0
    %2141 = vmatpush1.msra.mxu0 0.0
    %2142 = vmatprep.subr.mxu0 0.0
    %2143 = vmatpush1.msra.mxu0 0.0
    %2144 = vmatprep.subr.mxu0 0.0
    %2145 = vmatpush1.msra.mxu0 0.0
    %2146 = vmatprep.subr.mxu0 0.0
    %2147 = vmatpush1.msra.mxu0 0.0
    %2148 = vmatprep.subr.mxu0 0.0
    %2149 = vmatpush1.msra.mxu0 0.0
    %2150 = vmatprep.subr.mxu0 0.0
    %2151 = vmatpush1.msra.mxu0 0.0
    %2152 = vmatprep.subr.mxu0 0.0
    %2153 = vmatpush1.msra.mxu0 0.0
    %2154 = vmatprep.subr.mxu0 0.0
    %2155 = vmatpush1.msra.mxu0 0.0
    %2156 = vmatprep.subr.mxu0 0.0
    %2157 = vmatpush1.msra.mxu0 0.0
    %2158 = vmatprep.subr.mxu0 0.0
    %2159 = vmatpush1.msra.mxu0 0.0
    %2160 = vmatprep.subr.mxu0 0.0
    %2161 = vmatpush1.msra.mxu0 0.0
    %2162 = vmatprep.subr.mxu0 0.0
    %2163 = vmatpush1.msra.mxu0 0.0
    %2164 = vmatprep.mubr.f32.mxu0 0.0
    %2165 = vmatmul.mubr.f32.gmra.mrb[0].mxu0 %v2095
    %v2166 = vpop.f32.mrb[0].mxu0
    %v2167 = vadd.f32 %v2092, %v2166
    %v2168 = vpop.f32.mrb[0].mxu0
    %2169 = vmatprep.mubr.f32.mxu0 0.0
    %2170 = vmatmul.mubr.f32.gmra.mrb[0].mxu0 %v2098
    %v2171 = vpop.f32.mrb[0].mxu0
    %v2172 = vadd.f32 %v2092, %v2171
    %v2173 = vpop.f32.mrb[0].mxu0
    %2174 = vdwg.mxu0
    %2176 = vrot.lane.b32.xlu0 %v2167, 96
    %v2177 = vpop.permute.xlu0 %2176
    %v2178 = vsel %vm308, %v2167, 0
    %v2180 = vsel %vm308, %v2177, 0
    %2182 = vmatprep.subr.mxu0 0.0
    %2183 = vmatpush1.xpose.msra.mxu0 %v2180
    %2184 = vmatprep.subr.mxu0 0.0
    %2185 = vmatpush1.xpose.msra.mxu0 0.0
    %2186 = vmatprep.subr.mxu0 0.0
    %2187 = vmatpush1.xpose.msra.mxu0 0.0
    %2188 = vmatprep.subr.mxu0 0.0
    %2189 = vmatpush1.xpose.msra.mxu0 0.0
    %2190 = vmatprep.subr.mxu0 0.0
    %2191 = vmatpush1.xpose.msra.mxu0 0.0
    %2192 = vmatprep.subr.mxu0 0.0
    %2193 = vmatpush1.xpose.msra.mxu0 0.0
    %2194 = vmatprep.subr.mxu0 0.0
    %2195 = vmatpush1.xpose.msra.mxu0 0.0
    %2196 = vmatprep.subr.mxu0 0.0
    %2197 = vmatpush1.xpose.msra.mxu0 0.0
    %2198 = vmatprep.subr.mxu0 0.0
    %2199 = vmatpush1.xpose.msra.mxu0 0.0
    %2200 = vmatprep.subr.mxu0 0.0
    %2201 = vmatpush1.xpose.msra.mxu0 0.0
    %2202 = vmatprep.subr.mxu0 0.0
    %2203 = vmatpush1.xpose.msra.mxu0 0.0
    %2204 = vmatprep.subr.mxu0 0.0
    %2205 = vmatpush1.xpose.msra.mxu0 0.0
    %2206 = vmatprep.subr.mxu0 0.0
    %2207 = vmatpush1.xpose.msra.mxu0 0.0
    %2208 = vmatprep.subr.mxu0 0.0
    %2209 = vmatpush1.xpose.msra.mxu0 0.0
    %2210 = vmatprep.subr.mxu0 0.0
    %2211 = vmatpush1.xpose.msra.mxu0 0.0
    %2212 = vmatprep.subr.mxu0 0.0
    %2213 = vmatpush1.xpose.msra.mxu0 0.0
    %2214 = vmatprep.subr.mxu0 0.0
    %2215 = vmatpush1.xpose.msra.mxu0 0.0
    %2216 = vmatprep.subr.mxu0 0.0
    %2217 = vmatpush1.xpose.msra.mxu0 0.0
    %2218 = vmatprep.subr.mxu0 0.0
    %2219 = vmatpush1.xpose.msra.mxu0 0.0
    %2220 = vmatprep.subr.mxu0 0.0
    %2221 = vmatpush1.xpose.msra.mxu0 0.0
    %2222 = vmatprep.subr.mxu0 0.0
    %2223 = vmatpush1.xpose.msra.mxu0 0.0
    %2224 = vmatprep.subr.mxu0 0.0
    %2225 = vmatpush1.xpose.msra.mxu0 0.0
    %2226 = vmatprep.subr.mxu0 0.0
    %2227 = vmatpush1.xpose.msra.mxu0 0.0
    %2228 = vmatprep.subr.mxu0 0.0
    %2229 = vmatpush1.xpose.msra.mxu0 0.0
    %2230 = vmatprep.subr.mxu0 0.0
    %2231 = vmatpush1.xpose.msra.mxu0 0.0
    %2232 = vmatprep.subr.mxu0 0.0
    %2233 = vmatpush1.xpose.msra.mxu0 0.0
    %2234 = vmatprep.subr.mxu0 0.0
    %2235 = vmatpush1.xpose.msra.mxu0 0.0
    %2236 = vmatprep.subr.mxu0 0.0
    %2237 = vmatpush1.xpose.msra.mxu0 0.0
    %2238 = vmatprep.subr.mxu0 0.0
    %2239 = vmatpush1.xpose.msra.mxu0 0.0
    %2240 = vmatprep.subr.mxu0 0.0
    %2241 = vmatpush1.xpose.msra.mxu0 0.0
    %2242 = vmatprep.subr.mxu0 0.0
    %2243 = vmatpush1.xpose.msra.mxu0 0.0
    %2244 = vmatprep.subr.mxu0 0.0
    %2245 = vmatpush1.xpose.msra.mxu0 0.0
    %2246 = vmatprep.mubr.f32.mxu0 0.0
    %2247 = vmatmul.mubr.f32.gmra.mrb[0].mxu0 %v2178
    %v2248 = vpop.f32.mrb[0].mxu0
    %v2249 = vadd.f32 0.0, %v2248
    %v2250 = vpop.f32.mrb[0].mxu0
    %2251 = vdwg.mxu0
    %2253 = vrot.lane.b32.xlu0 %v2172, 96
    %v2254 = vpop.permute.xlu0 %2253
    %v2255 = vsel %vm308, %v2172, 0
    %v2257 = vsel %vm308, %v2254, 0
    %2259 = vmatprep.subr.mxu0 0.0
    %2260 = vmatpush1.xpose.msra.mxu0 %v2257
    %2261 = vmatprep.subr.mxu0 0.0
    %2262 = vmatpush1.xpose.msra.mxu0 0.0
    %2263 = vmatprep.subr.mxu0 0.0
    %2264 = vmatpush1.xpose.msra.mxu0 0.0
    %2265 = vmatprep.subr.mxu0 0.0
    %2266 = vmatpush1.xpose.msra.mxu0 0.0
    %2267 = vmatprep.subr.mxu0 0.0
    %2268 = vmatpush1.xpose.msra.mxu0 0.0
    %2269 = vmatprep.subr.mxu0 0.0
    %2270 = vmatpush1.xpose.msra.mxu0 0.0
    %2271 = vmatprep.subr.mxu0 0.0
    %2272 = vmatpush1.xpose.msra.mxu0 0.0
    %2273 = vmatprep.subr.mxu0 0.0
    %2274 = vmatpush1.xpose.msra.mxu0 0.0
    %2275 = vmatprep.subr.mxu0 0.0
    %2276 = vmatpush1.xpose.msra.mxu0 0.0
    %2277 = vmatprep.subr.mxu0 0.0
    %2278 = vmatpush1.xpose.msra.mxu0 0.0
    %2279 = vmatprep.subr.mxu0 0.0
    %2280 = vmatpush1.xpose.msra.mxu0 0.0
    %2281 = vmatprep.subr.mxu0 0.0
    %2282 = vmatpush1.xpose.msra.mxu0 0.0
    %2283 = vmatprep.subr.mxu0 0.0
    %2284 = vmatpush1.xpose.msra.mxu0 0.0
    %2285 = vmatprep.subr.mxu0 0.0
    %2286 = vmatpush1.xpose.msra.mxu0 0.0
    %2287 = vmatprep.subr.mxu0 0.0
    %2288 = vmatpush1.xpose.msra.mxu0 0.0
    %2289 = vmatprep.subr.mxu0 0.0
    %2290 = vmatpush1.xpose.msra.mxu0 0.0
    %2291 = vmatprep.subr.mxu0 0.0
    %2292 = vmatpush1.xpose.msra.mxu0 0.0
    %2293 = vmatprep.subr.mxu0 0.0
    %2294 = vmatpush1.xpose.msra.mxu0 0.0
    %2295 = vmatprep.subr.mxu0 0.0
    %2296 = vmatpush1.xpose.msra.mxu0 0.0
    %2297 = vmatprep.subr.mxu0 0.0
    %2298 = vmatpush1.xpose.msra.mxu0 0.0
    %2299 = vmatprep.subr.mxu0 0.0
    %2300 = vmatpush1.xpose.msra.mxu0 0.0
    %2301 = vmatprep.subr.mxu0 0.0
    %2302 = vmatpush1.xpose.msra.mxu0 0.0
    %2303 = vmatprep.subr.mxu0 0.0
    %2304 = vmatpush1.xpose.msra.mxu0 0.0
    %2305 = vmatprep.subr.mxu0 0.0
    %2306 = vmatpush1.xpose.msra.mxu0 0.0
    %2307 = vmatprep.subr.mxu0 0.0
    %2308 = vmatpush1.xpose.msra.mxu0 0.0
    %2309 = vmatprep.subr.mxu0 0.0
    %2310 = vmatpush1.xpose.msra.mxu0 0.0
    %2311 = vmatprep.subr.mxu0 0.0
    %2312 = vmatpush1.xpose.msra.mxu0 0.0
    %2313 = vmatprep.subr.mxu0 0.0
    %2314 = vmatpush1.xpose.msra.mxu0 0.0
    %2315 = vmatprep.subr.mxu0 0.0
    %2316 = vmatpush1.xpose.msra.mxu0 0.0
    %2317 = vmatprep.subr.mxu0 0.0
    %2318 = vmatpush1.xpose.msra.mxu0 0.0
    %2319 = vmatprep.subr.mxu0 0.0
    %2320 = vmatpush1.xpose.msra.mxu0 0.0
    %2321 = vmatprep.subr.mxu0 0.0
    %2322 = vmatpush1.xpose.msra.mxu0 0.0
    %2323 = vmatprep.mubr.f32.mxu0 0.0
    %2324 = vmatmul.mubr.f32.gmra.mrb[0].mxu0 %v2255
    %v2325 = vpop.f32.mrb[0].mxu0
    %v2326 = vadd.f32 0.0, %v2325
    %v2327 = vpop.f32.mrb[0].mxu0
    %2328 = vdwg.mxu0
    %v2329 = vmul.f32 %v2249, 0.35355338
    %v2330 = vmul.f32 %v2326, 0.35355338
    %v2331 = vadd.f32 %v2329, %v132
    %v2332 = vadd.f32 %v2330, %v132
    %2333 = vst.msk [vmem:[#allocation2] sm:$0xff] %vm308, %v2331
    %2334 = vst.msk [vmem:[#allocation2 + $0x8] sm:$0xff] %vm308, %v2332
    %2335 = vrot.lane.b32.xlu0 %v2167, 120
    %v2336 = vpop.permute.xlu0 %2335
    %2337 = vrot.lane.b32.xlu0 %v2167, 88
    %v2338 = vpop.permute.xlu0 %2337
    %v2339 = vsel %vm308, %v2336, 0
    %v2341 = vsel %vm308, %v2338, 0
    %2343 = vmatprep.subr.mxu0 0.0
    %2344 = vmatpush1.xpose.msra.mxu0 %v2341
    %2345 = vmatprep.subr.mxu0 0.0
    %2346 = vmatpush1.xpose.msra.mxu0 0.0
    %2347 = vmatprep.subr.mxu0 0.0
    %2348 = vmatpush1.xpose.msra.mxu0 0.0
    %2349 = vmatprep.subr.mxu0 0.0
    %2350 = vmatpush1.xpose.msra.mxu0 0.0
    %2351 = vmatprep.subr.mxu0 0.0
    %2352 = vmatpush1.xpose.msra.mxu0 0.0
    %2353 = vmatprep.subr.mxu0 0.0
    %2354 = vmatpush1.xpose.msra.mxu0 0.0
    %2355 = vmatprep.subr.mxu0 0.0
    %2356 = vmatpush1.xpose.msra.mxu0 0.0
    %2357 = vmatprep.subr.mxu0 0.0
    %2358 = vmatpush1.xpose.msra.mxu0 0.0
    %2359 = vmatprep.subr.mxu0 0.0
    %2360 = vmatpush1.xpose.msra.mxu0 0.0
    %2361 = vmatprep.subr.mxu0 0.0
    %2362 = vmatpush1.xpose.msra.mxu0 0.0
    %2363 = vmatprep.subr.mxu0 0.0
    %2364 = vmatpush1.xpose.msra.mxu0 0.0
    %2365 = vmatprep.subr.mxu0 0.0
    %2366 = vmatpush1.xpose.msra.mxu0 0.0
    %2367 = vmatprep.subr.mxu0 0.0
    %2368 = vmatpush1.xpose.msra.mxu0 0.0
    %2369 = vmatprep.subr.mxu0 0.0
    %2370 = vmatpush1.xpose.msra.mxu0 0.0
    %2371 = vmatprep.subr.mxu0 0.0
    %2372 = vmatpush1.xpose.msra.mxu0 0.0
    %2373 = vmatprep.subr.mxu0 0.0
    %2374 = vmatpush1.xpose.msra.mxu0 0.0
    %2375 = vmatprep.subr.mxu0 0.0
    %2376 = vmatpush1.xpose.msra.mxu0 0.0
    %2377 = vmatprep.subr.mxu0 0.0
    %2378 = vmatpush1.xpose.msra.mxu0 0.0
    %2379 = vmatprep.subr.mxu0 0.0
    %2380 = vmatpush1.xpose.msra.mxu0 0.0
    %2381 = vmatprep.subr.mxu0 0.0
    %2382 = vmatpush1.xpose.msra.mxu0 0.0
    %2383 = vmatprep.subr.mxu0 0.0
    %2384 = vmatpush1.xpose.msra.mxu0 0.0
    %2385 = vmatprep.subr.mxu0 0.0
    %2386 = vmatpush1.xpose.msra.mxu0 0.0
    %2387 = vmatprep.subr.mxu0 0.0
    %2388 = vmatpush1.xpose.msra.mxu0 0.0
    %2389 = vmatprep.subr.mxu0 0.0
    %2390 = vmatpush1.xpose.msra.mxu0 0.0
    %2391 = vmatprep.subr.mxu0 0.0
    %2392 = vmatpush1.xpose.msra.mxu0 0.0
    %2393 = vmatprep.subr.mxu0 0.0
    %2394 = vmatpush1.xpose.msra.mxu0 0.0
    %2395 = vmatprep.subr.mxu0 0.0
    %2396 = vmatpush1.xpose.msra.mxu0 0.0
    %2397 = vmatprep.subr.mxu0 0.0
    %2398 = vmatpush1.xpose.msra.mxu0 0.0
    %2399 = vmatprep.subr.mxu0 0.0
    %2400 = vmatpush1.xpose.msra.mxu0 0.0
    %2401 = vmatprep.subr.mxu0 0.0
    %2402 = vmatpush1.xpose.msra.mxu0 0.0
    %2403 = vmatprep.subr.mxu0 0.0
    %2404 = vmatpush1.xpose.msra.mxu0 0.0
    %2405 = vmatprep.subr.mxu0 0.0
    %2406 = vmatpush1.xpose.msra.mxu0 0.0
    %2407 = vmatprep.mubr.f32.mxu0 0.0
    %2408 = vmatmul.mubr.f32.gmra.mrb[0].mxu0 %v2339
    %v2409 = vpop.f32.mrb[0].mxu0
    %v2410 = vadd.f32 0.0, %v2409
    %v2411 = vpop.f32.mrb[0].mxu0
    %2412 = vdwg.mxu0
    %2413 = vrot.lane.b32.xlu0 %v2172, 120
    %v2414 = vpop.permute.xlu0 %2413
    %2415 = vrot.lane.b32.xlu0 %v2172, 88
    %v2416 = vpop.permute.xlu0 %2415
    %v2417 = vsel %vm308, %v2414, 0
    %v2419 = vsel %vm308, %v2416, 0
    %2421 = vmatprep.subr.mxu0 0.0
    %2422 = vmatpush1.xpose.msra.mxu0 %v2419
    %2423 = vmatprep.subr.mxu0 0.0
    %2424 = vmatpush1.xpose.msra.mxu0 0.0
    %2425 = vmatprep.subr.mxu0 0.0
    %2426 = vmatpush1.xpose.msra.mxu0 0.0
    %2427 = vmatprep.subr.mxu0 0.0
    %2428 = vmatpush1.xpose.msra.mxu0 0.0
    %2429 = vmatprep.subr.mxu0 0.0
    %2430 = vmatpush1.xpose.msra.mxu0 0.0
    %2431 = vmatprep.subr.mxu0 0.0
    %2432 = vmatpush1.xpose.msra.mxu0 0.0
    %2433 = vmatprep.subr.mxu0 0.0
    %2434 = vmatpush1.xpose.msra.mxu0 0.0
    %2435 = vmatprep.subr.mxu0 0.0
    %2436 = vmatpush1.xpose.msra.mxu0 0.0
    %2437 = vmatprep.subr.mxu0 0.0
    %2438 = vmatpush1.xpose.msra.mxu0 0.0
    %2439 = vmatprep.subr.mxu0 0.0
    %2440 = vmatpush1.xpose.msra.mxu0 0.0
    %2441 = vmatprep.subr.mxu0 0.0
    %2442 = vmatpush1.xpose.msra.mxu0 0.0
    %2443 = vmatprep.subr.mxu0 0.0
    %2444 = vmatpush1.xpose.msra.mxu0 0.0
    %2445 = vmatprep.subr.mxu0 0.0
    %2446 = vmatpush1.xpose.msra.mxu0 0.0
    %2447 = vmatprep.subr.mxu0 0.0
    %2448 = vmatpush1.xpose.msra.mxu0 0.0
    %2449 = vmatprep.subr.mxu0 0.0
    %2450 = vmatpush1.xpose.msra.mxu0 0.0
    %2451 = vmatprep.subr.mxu0 0.0
    %2452 = vmatpush1.xpose.msra.mxu0 0.0
    %2453 = vmatprep.subr.mxu0 0.0
    %2454 = vmatpush1.xpose.msra.mxu0 0.0
    %2455 = vmatprep.subr.mxu0 0.0
    %2456 = vmatpush1.xpose.msra.mxu0 0.0
    %2457 = vmatprep.subr.mxu0 0.0
    %2458 = vmatpush1.xpose.msra.mxu0 0.0
    %2459 = vmatprep.subr.mxu0 0.0
    %2460 = vmatpush1.xpose.msra.mxu0 0.0
    %2461 = vmatprep.subr.mxu0 0.0
    %2462 = vmatpush1.xpose.msra.mxu0 0.0
    %2463 = vmatprep.subr.mxu0 0.0
    %2464 = vmatpush1.xpose.msra.mxu0 0.0
    %2465 = vmatprep.subr.mxu0 0.0
    %2466 = vmatpush1.xpose.msra.mxu0 0.0
    %2467 = vmatprep.subr.mxu0 0.0
    %2468 = vmatpush1.xpose.msra.mxu0 0.0
    %2469 = vmatprep.subr.mxu0 0.0
    %2470 = vmatpush1.xpose.msra.mxu0 0.0
    %2471 = vmatprep.subr.mxu0 0.0
    %2472 = vmatpush1.xpose.msra.mxu0 0.0
    %2473 = vmatprep.subr.mxu0 0.0
    %2474 = vmatpush1.xpose.msra.mxu0 0.0
    %2475 = vmatprep.subr.mxu0 0.0
    %2476 = vmatpush1.xpose.msra.mxu0 0.0
    %2477 = vmatprep.subr.mxu0 0.0
    %2478 = vmatpush1.xpose.msra.mxu0 0.0
    %2479 = vmatprep.subr.mxu0 0.0
    %2480 = vmatpush1.xpose.msra.mxu0 0.0
    %2481 = vmatprep.subr.mxu0 0.0
    %2482 = vmatpush1.xpose.msra.mxu0 0.0
    %2483 = vmatprep.subr.mxu0 0.0
    %2484 = vmatpush1.xpose.msra.mxu0 0.0
    %2485 = vmatprep.mubr.f32.mxu0 0.0
    %2486 = vmatmul.mubr.f32.gmra.mrb[0].mxu0 %v2417
    %v2487 = vpop.f32.mrb[0].mxu0
    %v2488 = vadd.f32 0.0, %v2487
    %v2489 = vpop.f32.mrb[0].mxu0
    %2490 = vdwg.mxu0
    %v2491 = vmul.f32 %v2410, 0.35355338
    %v2492 = vmul.f32 %v2488, 0.35355338
    %v2493 = vadd.f32 %v2491, %v132
    %v2494 = vadd.f32 %v2492, %v132
    %2495 = vst.msk [vmem:[#allocation2 + $0x10] sm:$0xff] %vm308, %v2493
    %2496 = vst.msk [vmem:[#allocation2 + $0x18] sm:$0xff] %vm308, %v2494
    %2497 = vrot.lane.b32.xlu0 %v2167, 112
    %v2498 = vpop.permute.xlu0 %2497
    %2499 = vrot.lane.b32.xlu0 %v2167, 80
    %v2500 = vpop.permute.xlu0 %2499
    %v2501 = vsel %vm308, %v2498, 0
    %v2503 = vsel %vm308, %v2500, 0
    %2505 = vmatprep.subr.mxu0 0.0
    %2506 = vmatpush1.xpose.msra.mxu0 %v2503
    %2507 = vmatprep.subr.mxu0 0.0
    %2508 = vmatpush1.xpose.msra.mxu0 0.0
    %2509 = vmatprep.subr.mxu0 0.0
    %2510 = vmatpush1.xpose.msra.mxu0 0.0
    %2511 = vmatprep.subr.mxu0 0.0
    %2512 = vmatpush1.xpose.msra.mxu0 0.0
    %2513 = vmatprep.subr.mxu0 0.0
    %2514 = vmatpush1.xpose.msra.mxu0 0.0
    %2515 = vmatprep.subr.mxu0 0.0
    %2516 = vmatpush1.xpose.msra.mxu0 0.0
    %2517 = vmatprep.subr.mxu0 0.0
    %2518 = vmatpush1.xpose.msra.mxu0 0.0
    %2519 = vmatprep.subr.mxu0 0.0
    %2520 = vmatpush1.xpose.msra.mxu0 0.0
    %2521 = vmatprep.subr.mxu0 0.0
    %2522 = vmatpush1.xpose.msra.mxu0 0.0
    %2523 = vmatprep.subr.mxu0 0.0
    %2524 = vmatpush1.xpose.msra.mxu0 0.0
    %2525 = vmatprep.subr.mxu0 0.0
    %2526 = vmatpush1.xpose.msra.mxu0 0.0
    %2527 = vmatprep.subr.mxu0 0.0
    %2528 = vmatpush1.xpose.msra.mxu0 0.0
    %2529 = vmatprep.subr.mxu0 0.0
    %2530 = vmatpush1.xpose.msra.mxu0 0.0
    %2531 = vmatprep.subr.mxu0 0.0
    %2532 = vmatpush1.xpose.msra.mxu0 0.0
    %2533 = vmatprep.subr.mxu0 0.0
    %2534 = vmatpush1.xpose.msra.mxu0 0.0
    %2535 = vmatprep.subr.mxu0 0.0
    %2536 = vmatpush1.xpose.msra.mxu0 0.0
    %2537 = vmatprep.subr.mxu0 0.0
    %2538 = vmatpush1.xpose.msra.mxu0 0.0
    %2539 = vmatprep.subr.mxu0 0.0
    %2540 = vmatpush1.xpose.msra.mxu0 0.0
    %2541 = vmatprep.subr.mxu0 0.0
    %2542 = vmatpush1.xpose.msra.mxu0 0.0
    %2543 = vmatprep.subr.mxu0 0.0
    %2544 = vmatpush1.xpose.msra.mxu0 0.0
    %2545 = vmatprep.subr.mxu0 0.0
    %2546 = vmatpush1.xpose.msra.mxu0 0.0
    %2547 = vmatprep.subr.mxu0 0.0
    %2548 = vmatpush1.xpose.msra.mxu0 0.0
    %2549 = vmatprep.subr.mxu0 0.0
    %2550 = vmatpush1.xpose.msra.mxu0 0.0
    %2551 = vmatprep.subr.mxu0 0.0
    %2552 = vmatpush1.xpose.msra.mxu0 0.0
    %2553 = vmatprep.subr.mxu0 0.0
    %2554 = vmatpush1.xpose.msra.mxu0 0.0
    %2555 = vmatprep.subr.mxu0 0.0
    %2556 = vmatpush1.xpose.msra.mxu0 0.0
    %2557 = vmatprep.subr.mxu0 0.0
    %2558 = vmatpush1.xpose.msra.mxu0 0.0
    %2559 = vmatprep.subr.mxu0 0.0
    %2560 = vmatpush1.xpose.msra.mxu0 0.0
    %2561 = vmatprep.subr.mxu0 0.0
    %2562 = vmatpush1.xpose.msra.mxu0 0.0
    %2563 = vmatprep.subr.mxu0 0.0
    %2564 = vmatpush1.xpose.msra.mxu0 0.0
    %2565 = vmatprep.subr.mxu0 0.0
    %2566 = vmatpush1.xpose.msra.mxu0 0.0
    %2567 = vmatprep.subr.mxu0 0.0
    %2568 = vmatpush1.xpose.msra.mxu0 0.0
    %2569 = vmatprep.mubr.f32.mxu0 0.0
    %2570 = vmatmul.mubr.f32.gmra.mrb[0].mxu0 %v2501
    %v2571 = vpop.f32.mrb[0].mxu0
    %v2572 = vadd.f32 0.0, %v2571
    %v2573 = vpop.f32.mrb[0].mxu0
    %2574 = vdwg.mxu0
    %2575 = vrot.lane.b32.xlu0 %v2172, 112
    %v2576 = vpop.permute.xlu0 %2575
    %2577 = vrot.lane.b32.xlu0 %v2172, 80
    %v2578 = vpop.permute.xlu0 %2577
    %v2579 = vsel %vm308, %v2576, 0
    %v2581 = vsel %vm308, %v2578, 0
    %2583 = vmatprep.subr.mxu0 0.0
    %2584 = vmatpush1.xpose.msra.mxu0 %v2581
    %2585 = vmatprep.subr.mxu0 0.0
    %2586 = vmatpush1.xpose.msra.mxu0 0.0
    %2587 = vmatprep.subr.mxu0 0.0
    %2588 = vmatpush1.xpose.msra.mxu0 0.0
    %2589 = vmatprep.subr.mxu0 0.0
    %2590 = vmatpush1.xpose.msra.mxu0 0.0
    %2591 = vmatprep.subr.mxu0 0.0
    %2592 = vmatpush1.xpose.msra.mxu0 0.0
    %2593 = vmatprep.subr.mxu0 0.0
    %2594 = vmatpush1.xpose.msra.mxu0 0.0
    %2595 = vmatprep.subr.mxu0 0.0
    %2596 = vmatpush1.xpose.msra.mxu0 0.0
    %2597 = vmatprep.subr.mxu0 0.0
    %2598 = vmatpush1.xpose.msra.mxu0 0.0
    %2599 = vmatprep.subr.mxu0 0.0
    %2600 = vmatpush1.xpose.msra.mxu0 0.0
    %2601 = vmatprep.subr.mxu0 0.0
    %2602 = vmatpush1.xpose.msra.mxu0 0.0
    %2603 = vmatprep.subr.mxu0 0.0
    %2604 = vmatpush1.xpose.msra.mxu0 0.0
    %2605 = vmatprep.subr.mxu0 0.0
    %2606 = vmatpush1.xpose.msra.mxu0 0.0
    %2607 = vmatprep.subr.mxu0 0.0
    %2608 = vmatpush1.xpose.msra.mxu0 0.0
    %2609 = vmatprep.subr.mxu0 0.0
    %2610 = vmatpush1.xpose.msra.mxu0 0.0
    %2611 = vmatprep.subr.mxu0 0.0
    %2612 = vmatpush1.xpose.msra.mxu0 0.0
    %2613 = vmatprep.subr.mxu0 0.0
    %2614 = vmatpush1.xpose.msra.mxu0 0.0
    %2615 = vmatprep.subr.mxu0 0.0
    %2616 = vmatpush1.xpose.msra.mxu0 0.0
    %2617 = vmatprep.subr.mxu0 0.0
    %2618 = vmatpush1.xpose.msra.mxu0 0.0
    %2619 = vmatprep.subr.mxu0 0.0
    %2620 = vmatpush1.xpose.msra.mxu0 0.0
    %2621 = vmatprep.subr.mxu0 0.0
    %2622 = vmatpush1.xpose.msra.mxu0 0.0
    %2623 = vmatprep.subr.mxu0 0.0
    %2624 = vmatpush1.xpose.msra.mxu0 0.0
    %2625 = vmatprep.subr.mxu0 0.0
    %2626 = vmatpush1.xpose.msra.mxu0 0.0
    %2627 = vmatprep.subr.mxu0 0.0
    %2628 = vmatpush1.xpose.msra.mxu0 0.0
    %2629 = vmatprep.subr.mxu0 0.0
    %2630 = vmatpush1.xpose.msra.mxu0 0.0
    %2631 = vmatprep.subr.mxu0 0.0
    %2632 = vmatpush1.xpose.msra.mxu0 0.0
    %2633 = vmatprep.subr.mxu0 0.0
    %2634 = vmatpush1.xpose.msra.mxu0 0.0
    %2635 = vmatprep.subr.mxu0 0.0
    %2636 = vmatpush1.xpose.msra.mxu0 0.0
    %2637 = vmatprep.subr.mxu0 0.0
    %2638 = vmatpush1.xpose.msra.mxu0 0.0
    %2639 = vmatprep.subr.mxu0 0.0
    %2640 = vmatpush1.xpose.msra.mxu0 0.0
    %2641 = vmatprep.subr.mxu0 0.0
    %2642 = vmatpush1.xpose.msra.mxu0 0.0
    %2643 = vmatprep.subr.mxu0 0.0
    %2644 = vmatpush1.xpose.msra.mxu0 0.0
    %2645 = vmatprep.subr.mxu0 0.0
    %2646 = vmatpush1.xpose.msra.mxu0 0.0
    %2647 = vmatprep.mubr.f32.mxu0 0.0
    %2648 = vmatmul.mubr.f32.gmra.mrb[0].mxu0 %v2579
    %v2649 = vpop.f32.mrb[0].mxu0
    %v2650 = vadd.f32 0.0, %v2649
    %v2651 = vpop.f32.mrb[0].mxu0
    %2652 = vdwg.mxu0
    %v2653 = vmul.f32 %v2572, 0.35355338
    %v2654 = vmul.f32 %v2650, 0.35355338
    %v2655 = vadd.f32 %v2653, %v132
    %v2656 = vadd.f32 %v2654, %v132
    %2657 = vst.msk [vmem:[#allocation2 + $0x20] sm:$0xff] %vm308, %v2655
    %2658 = vst.msk [vmem:[#allocation2 + $0x28] sm:$0xff] %vm308, %v2656
    %2659 = vrot.lane.b32.xlu0 %v2167, 104
    %v2660 = vpop.permute.xlu0 %2659
    %2661 = vrot.lane.b32.xlu0 %v2167, 72
    %v2662 = vpop.permute.xlu0 %2661
    %v2663 = vsel %vm308, %v2660, 0
    %v2665 = vsel %vm308, %v2662, 0
    %2667 = vmatprep.subr.mxu0 0.0
    %2668 = vmatpush1.xpose.msra.mxu0 %v2665
    %2669 = vmatprep.subr.mxu0 0.0
    %2670 = vmatpush1.xpose.msra.mxu0 0.0
    %2671 = vmatprep.subr.mxu0 0.0
    %2672 = vmatpush1.xpose.msra.mxu0 0.0
    %2673 = vmatprep.subr.mxu0 0.0
    %2674 = vmatpush1.xpose.msra.mxu0 0.0
    %2675 = vmatprep.subr.mxu0 0.0
    %2676 = vmatpush1.xpose.msra.mxu0 0.0
    %2677 = vmatprep.subr.mxu0 0.0
    %2678 = vmatpush1.xpose.msra.mxu0 0.0
    %2679 = vmatprep.subr.mxu0 0.0
    %2680 = vmatpush1.xpose.msra.mxu0 0.0
    %2681 = vmatprep.subr.mxu0 0.0
    %2682 = vmatpush1.xpose.msra.mxu0 0.0
    %2683 = vmatprep.subr.mxu0 0.0
    %2684 = vmatpush1.xpose.msra.mxu0 0.0
    %2685 = vmatprep.subr.mxu0 0.0
    %2686 = vmatpush1.xpose.msra.mxu0 0.0
    %2687 = vmatprep.subr.mxu0 0.0
    %2688 = vmatpush1.xpose.msra.mxu0 0.0
    %2689 = vmatprep.subr.mxu0 0.0
    %2690 = vmatpush1.xpose.msra.mxu0 0.0
    %2691 = vmatprep.subr.mxu0 0.0
    %2692 = vmatpush1.xpose.msra.mxu0 0.0
    %2693 = vmatprep.subr.mxu0 0.0
    %2694 = vmatpush1.xpose.msra.mxu0 0.0
    %2695 = vmatprep.subr.mxu0 0.0
    %2696 = vmatpush1.xpose.msra.mxu0 0.0
    %2697 = vmatprep.subr.mxu0 0.0
    %2698 = vmatpush1.xpose.msra.mxu0 0.0
    %2699 = vmatprep.subr.mxu0 0.0
    %2700 = vmatpush1.xpose.msra.mxu0 0.0
    %2701 = vmatprep.subr.mxu0 0.0
    %2702 = vmatpush1.xpose.msra.mxu0 0.0
    %2703 = vmatprep.subr.mxu0 0.0
    %2704 = vmatpush1.xpose.msra.mxu0 0.0
    %2705 = vmatprep.subr.mxu0 0.0
    %2706 = vmatpush1.xpose.msra.mxu0 0.0
    %2707 = vmatprep.subr.mxu0 0.0
    %2708 = vmatpush1.xpose.msra.mxu0 0.0
    %2709 = vmatprep.subr.mxu0 0.0
    %2710 = vmatpush1.xpose.msra.mxu0 0.0
    %2711 = vmatprep.subr.mxu0 0.0
    %2712 = vmatpush1.xpose.msra.mxu0 0.0
    %2713 = vmatprep.subr.mxu0 0.0
    %2714 = vmatpush1.xpose.msra.mxu0 0.0
    %2715 = vmatprep.subr.mxu0 0.0
    %2716 = vmatpush1.xpose.msra.mxu0 0.0
    %2717 = vmatprep.subr.mxu0 0.0
    %2718 = vmatpush1.xpose.msra.mxu0 0.0
    %2719 = vmatprep.subr.mxu0 0.0
    %2720 = vmatpush1.xpose.msra.mxu0 0.0
    %2721 = vmatprep.subr.mxu0 0.0
    %2722 = vmatpush1.xpose.msra.mxu0 0.0
    %2723 = vmatprep.subr.mxu0 0.0
    %2724 = vmatpush1.xpose.msra.mxu0 0.0
    %2725 = vmatprep.subr.mxu0 0.0
    %2726 = vmatpush1.xpose.msra.mxu0 0.0
    %2727 = vmatprep.subr.mxu0 0.0
    %2728 = vmatpush1.xpose.msra.mxu0 0.0
    %2729 = vmatprep.subr.mxu0 0.0
    %2730 = vmatpush1.xpose.msra.mxu0 0.0
    %2731 = vmatprep.mubr.f32.mxu0 0.0
    %2732 = vmatmul.mubr.f32.gmra.mrb[0].mxu0 %v2663
    %v2733 = vpop.f32.mrb[0].mxu0
    %v2734 = vadd.f32 0.0, %v2733
    %v2735 = vpop.f32.mrb[0].mxu0
    %2736 = vdwg.mxu0
    %2737 = vrot.lane.b32.xlu0 %v2172, 104
    %v2738 = vpop.permute.xlu0 %2737
    %2739 = vrot.lane.b32.xlu0 %v2172, 72
    %v2740 = vpop.permute.xlu0 %2739
    %v2741 = vsel %vm308, %v2738, 0
    %v2743 = vsel %vm308, %v2740, 0
    %2745 = vmatprep.subr.mxu0 0.0
    %2746 = vmatpush1.xpose.msra.mxu0 %v2743
    %2747 = vmatprep.subr.mxu0 0.0
    %2748 = vmatpush1.xpose.msra.mxu0 0.0
    %2749 = vmatprep.subr.mxu0 0.0
    %2750 = vmatpush1.xpose.msra.mxu0 0.0
    %2751 = vmatprep.subr.mxu0 0.0
    %2752 = vmatpush1.xpose.msra.mxu0 0.0
    %2753 = vmatprep.subr.mxu0 0.0
    %2754 = vmatpush1.xpose.msra.mxu0 0.0
    %2755 = vmatprep.subr.mxu0 0.0
    %2756 = vmatpush1.xpose.msra.mxu0 0.0
    %2757 = vmatprep.subr.mxu0 0.0
    %2758 = vmatpush1.xpose.msra.mxu0 0.0
    %2759 = vmatprep.subr.mxu0 0.0
    %2760 = vmatpush1.xpose.msra.mxu0 0.0
    %2761 = vmatprep.subr.mxu0 0.0
    %2762 = vmatpush1.xpose.msra.mxu0 0.0
    %2763 = vmatprep.subr.mxu0 0.0
    %2764 = vmatpush1.xpose.msra.mxu0 0.0
    %2765 = vmatprep.subr.mxu0 0.0
    %2766 = vmatpush1.xpose.msra.mxu0 0.0
    %2767 = vmatprep.subr.mxu0 0.0
    %2768 = vmatpush1.xpose.msra.mxu0 0.0
    %2769 = vmatprep.subr.mxu0 0.0
    %2770 = vmatpush1.xpose.msra.mxu0 0.0
    %2771 = vmatprep.subr.mxu0 0.0
    %2772 = vmatpush1.xpose.msra.mxu0 0.0
    %2773 = vmatprep.subr.mxu0 0.0
    %2774 = vmatpush1.xpose.msra.mxu0 0.0
    %2775 = vmatprep.subr.mxu0 0.0
    %2776 = vmatpush1.xpose.msra.mxu0 0.0
    %2777 = vmatprep.subr.mxu0 0.0
    %2778 = vmatpush1.xpose.msra.mxu0 0.0
    %2779 = vmatprep.subr.mxu0 0.0
    %2780 = vmatpush1.xpose.msra.mxu0 0.0
    %2781 = vmatprep.subr.mxu0 0.0
    %2782 = vmatpush1.xpose.msra.mxu0 0.0
    %2783 = vmatprep.subr.mxu0 0.0
    %2784 = vmatpush1.xpose.msra.mxu0 0.0
    %2785 = vmatprep.subr.mxu0 0.0
    %2786 = vmatpush1.xpose.msra.mxu0 0.0
    %2787 = vmatprep.subr.mxu0 0.0
    %2788 = vmatpush1.xpose.msra.mxu0 0.0
    %2789 = vmatprep.subr.mxu0 0.0
    %2790 = vmatpush1.xpose.msra.mxu0 0.0
    %2791 = vmatprep.subr.mxu0 0.0
    %2792 = vmatpush1.xpose.msra.mxu0 0.0
    %2793 = vmatprep.subr.mxu0 0.0
    %2794 = vmatpush1.xpose.msra.mxu0 0.0
    %2795 = vmatprep.subr.mxu0 0.0
    %2796 = vmatpush1.xpose.msra.mxu0 0.0
    %2797 = vmatprep.subr.mxu0 0.0
    %2798 = vmatpush1.xpose.msra.mxu0 0.0
    %2799 = vmatprep.subr.mxu0 0.0
    %2800 = vmatpush1.xpose.msra.mxu0 0.0
    %2801 = vmatprep.subr.mxu0 0.0
    %2802 = vmatpush1.xpose.msra.mxu0 0.0
    %2803 = vmatprep.subr.mxu0 0.0
    %2804 = vmatpush1.xpose.msra.mxu0 0.0
    %2805 = vmatprep.subr.mxu0 0.0
    %2806 = vmatpush1.xpose.msra.mxu0 0.0
    %2807 = vmatprep.subr.mxu0 0.0
    %2808 = vmatpush1.xpose.msra.mxu0 0.0
    %2809 = vmatprep.mubr.f32.mxu0 0.0
    %2810 = vmatmul.mubr.f32.gmra.mrb[0].mxu0 %v2741
    %v2811 = vpop.f32.mrb[0].mxu0
    %v2812 = vadd.f32 0.0, %v2811
    %v2813 = vpop.f32.mrb[0].mxu0
    %2814 = vdwg.mxu0
    %v2815 = vmul.f32 %v2734, 0.35355338
    %v2816 = vmul.f32 %v2812, 0.35355338
    %v2817 = vadd.f32 %v2815, %v132
    %v2818 = vadd.f32 %v2816, %v132
    %2819 = vst.msk [vmem:[#allocation2 + $0x30] sm:$0xff] %vm308, %v2817
    %2820 = vst.msk [vmem:[#allocation2 + $0x38] sm:$0xff] %vm308, %v2818
    %v2821 = vld [vmem:[#allocation2] sm:$0xff]
    %v2822 = vld [vmem:[#allocation2 + $0x8] sm:$0xff]
    %v2823 = vld [vmem:[#allocation2 + $0x10] sm:$0xff]
    %v2824 = vld [vmem:[#allocation2 + $0x18] sm:$0xff]
    %v2825 = vld [vmem:[#allocation2 + $0x20] sm:$0xff]
    %v2826 = vld [vmem:[#allocation2 + $0x28] sm:$0xff]
    %v2827 = vld [vmem:[#allocation2 + $0x30] sm:$0xff]
    %v2828 = vld [vmem:[#allocation2 + $0x38] sm:$0xff]
    %v2829 = vsel %vm308, %v2821, -inf
    %2830 = vmax.xlane.f32.xlu0 %v2829
    %v2831 = vpop.xlane.xlu0 %2830
    %v2832 = vsel %vm308, %v2822, -inf
    %2833 = vmax.xlane.f32.xlu0 %v2832
    %v2834 = vpop.xlane.xlu0 %2833
    %v2835 = vsel %vm308, %v2823, -inf
    %2836 = vmax.xlane.f32.xlu0 %v2835
    %v2837 = vpop.xlane.xlu0 %2836
    %v2838 = vsel %vm308, %v2824, -inf
    %2839 = vmax.xlane.f32.xlu0 %v2838
    %v2840 = vpop.xlane.xlu0 %2839
    %v2841 = vsel %vm308, %v2825, -inf
    %2842 = vmax.xlane.f32.xlu0 %v2841
    %v2843 = vpop.xlane.xlu0 %2842
    %v2844 = vsel %vm308, %v2826, -inf
    %2845 = vmax.xlane.f32.xlu0 %v2844
    %v2846 = vpop.xlane.xlu0 %2845
    %v2847 = vsel %vm308, %v2827, -inf
    %2848 = vmax.xlane.f32.xlu0 %v2847
    %v2849 = vpop.xlane.xlu0 %2848
    %v2850 = vsel %vm308, %v2828, -inf
    %2851 = vmax.xlane.f32.xlu0 %v2850
    %v2852 = vpop.xlane.xlu0 %2851
    %v2853 = vsub.f32 %v2821, %v2831
    %v2854 = vsub.f32 %v2822, %v2834
    %v2855 = vsub.f32 %v2823, %v2837
    %v2856 = vsub.f32 %v2824, %v2840
    %v2857 = vsub.f32 %v2825, %v2843
    %v2858 = vsub.f32 %v2826, %v2846
    %v2859 = vsub.f32 %v2827, %v2849
    %v2860 = vsub.f32 %v2828, %v2852
    %v2861 = vmul.f32 %v2853, 1.442695
    %v2862 = vpow.pop %v2861
    %v2863 = vmul.f32 %v2854, 1.442695
    %v2864 = vpow.pop %v2863
    %v2865 = vmul.f32 %v2855, 1.442695
    %v2866 = vpow.pop %v2865
    %v2867 = vmul.f32 %v2856, 1.442695
    %v2868 = vpow.pop %v2867
    %v2869 = vmul.f32 %v2857, 1.442695
    %v2870 = vpow.pop %v2869
    %v2871 = vmul.f32 %v2858, 1.442695
    %v2872 = vpow.pop %v2871
    %v2873 = vmul.f32 %v2859, 1.442695
    %v2874 = vpow.pop %v2873
    %v2875 = vmul.f32 %v2860, 1.442695
    %v2876 = vpow.pop %v2875
    %v2877 = vsel %vm308, %v2862, 0.0
    %2878 = vadd.xlane.f32.xlu0 %v2877
    %v2879 = vpop.xlane.xlu0 %2878
    %v2880 = vsel %vm308, %v2864, 0.0
    %2881 = vadd.xlane.f32.xlu0 %v2880
    %v2882 = vpop.xlane.xlu0 %2881
    %v2883 = vsel %vm308, %v2866, 0.0
    %2884 = vadd.xlane.f32.xlu0 %v2883
    %v2885 = vpop.xlane.xlu0 %2884
    %v2886 = vsel %vm308, %v2868, 0.0
    %2887 = vadd.xlane.f32.xlu0 %v2886
    %v2888 = vpop.xlane.xlu0 %2887
    %v2889 = vsel %vm308, %v2870, 0.0
    %2890 = vadd.xlane.f32.xlu0 %v2889
    %v2891 = vpop.xlane.xlu0 %2890
    %v2892 = vsel %vm308, %v2872, 0.0
    %2893 = vadd.xlane.f32.xlu0 %v2892
    %v2894 = vpop.xlane.xlu0 %2893
    %v2895 = vsel %vm308, %v2874, 0.0
    %2896 = vadd.xlane.f32.xlu0 %v2895
    %v2897 = vpop.xlane.xlu0 %2896
    %v2898 = vsel %vm308, %v2876, 0.0
    %2899 = vadd.xlane.f32.xlu0 %v2898
    %v2900 = vpop.xlane.xlu0 %2899
    %v2901 = vrcp.pop %v2879
    %v2902 = vmul.f32 %v2862, %v2901
    %v2903 = vrcp.pop %v2882
    %v2904 = vmul.f32 %v2864, %v2903
    %v2905 = vrcp.pop %v2885
    %v2906 = vmul.f32 %v2866, %v2905
    %v2907 = vrcp.pop %v2888
    %v2908 = vmul.f32 %v2868, %v2907
    %v2909 = vrcp.pop %v2891
    %v2910 = vmul.f32 %v2870, %v2909
    %v2911 = vrcp.pop %v2894
    %v2912 = vmul.f32 %v2872, %v2911
    %v2913 = vrcp.pop %v2897
    %v2914 = vmul.f32 %v2874, %v2913
    %v2915 = vrcp.pop %v2900
    %v2916 = vmul.f32 %v2876, %v2915
    %2917 = vrot.lane.b32.xlu0 %v2167, 64
    %v2918 = vpop.permute.xlu0 %2917
    %v2921 = vsel %vm308, %v2902, 0
    %2923 = vmatprep.subr.mxu0 0.0
    %2924 = vmatpush1.msra.mxu0 %v2918
    %2925 = vmatprep.subr.mxu0 0.0
    %2926 = vmatpush1.msra.mxu0 0.0
    %2927 = vmatprep.subr.mxu0 0.0
    %2928 = vmatpush1.msra.mxu0 0.0
    %2929 = vmatprep.subr.mxu0 0.0
    %2930 = vmatpush1.msra.mxu0 0.0
    %2931 = vmatprep.subr.mxu0 0.0
    %2932 = vmatpush1.msra.mxu0 0.0
    %2933 = vmatprep.subr.mxu0 0.0
    %2934 = vmatpush1.msra.mxu0 0.0
    %2935 = vmatprep.subr.mxu0 0.0
    %2936 = vmatpush1.msra.mxu0 0.0
    %2937 = vmatprep.subr.mxu0 0.0
    %2938 = vmatpush1.msra.mxu0 0.0
    %2939 = vmatprep.subr.mxu0 0.0
    %2940 = vmatpush1.msra.mxu0 0.0
    %2941 = vmatprep.subr.mxu0 0.0
    %2942 = vmatpush1.msra.mxu0 0.0
    %2943 = vmatprep.subr.mxu0 0.0
    %2944 = vmatpush1.msra.mxu0 0.0
    %2945 = vmatprep.subr.mxu0 0.0
    %2946 = vmatpush1.msra.mxu0 0.0
    %2947 = vmatprep.subr.mxu0 0.0
    %2948 = vmatpush1.msra.mxu0 0.0
    %2949 = vmatprep.subr.mxu0 0.0
    %2950 = vmatpush1.msra.mxu0 0.0
    %2951 = vmatprep.subr.mxu0 0.0
    %2952 = vmatpush1.msra.mxu0 0.0
    %2953 = vmatprep.subr.mxu0 0.0
    %2954 = vmatpush1.msra.mxu0 0.0
    %2955 = vmatprep.subr.mxu0 0.0
    %2956 = vmatpush1.msra.mxu0 0.0
    %2957 = vmatprep.subr.mxu0 0.0
    %2958 = vmatpush1.msra.mxu0 0.0
    %2959 = vmatprep.subr.mxu0 0.0
    %2960 = vmatpush1.msra.mxu0 0.0
    %2961 = vmatprep.subr.mxu0 0.0
    %2962 = vmatpush1.msra.mxu0 0.0
    %2963 = vmatprep.subr.mxu0 0.0
    %2964 = vmatpush1.msra.mxu0 0.0
    %2965 = vmatprep.subr.mxu0 0.0
    %2966 = vmatpush1.msra.mxu0 0.0
    %2967 = vmatprep.subr.mxu0 0.0
    %2968 = vmatpush1.msra.mxu0 0.0
    %2969 = vmatprep.subr.mxu0 0.0
    %2970 = vmatpush1.msra.mxu0 0.0
    %2971 = vmatprep.subr.mxu0 0.0
    %2972 = vmatpush1.msra.mxu0 0.0
    %2973 = vmatprep.subr.mxu0 0.0
    %2974 = vmatpush1.msra.mxu0 0.0
    %2975 = vmatprep.subr.mxu0 0.0
    %2976 = vmatpush1.msra.mxu0 0.0
    %2977 = vmatprep.subr.mxu0 0.0
    %2978 = vmatpush1.msra.mxu0 0.0
    %2979 = vmatprep.subr.mxu0 0.0
    %2980 = vmatpush1.msra.mxu0 0.0
    %2981 = vmatprep.subr.mxu0 0.0
    %2982 = vmatpush1.msra.mxu0 0.0
    %2983 = vmatprep.subr.mxu0 0.0
    %2984 = vmatpush1.msra.mxu0 0.0
    %2985 = vmatprep.subr.mxu0 0.0
    %2986 = vmatpush1.msra.mxu0 0.0
    %2987 = vmatprep.mubr.f32.mxu0 0.0
    %2988 = vmatmul.mubr.f32.gmra.mrb[0].mxu0 %v2921
    %v2989 = vpop.f32.mrb[0].mxu0
    %v2990 = vadd.f32 0.0, %v2989
    %v2991 = vpop.f32.mrb[0].mxu0
    %2992 = vdwg.mxu0
    %2993 = vrot.lane.b32.xlu0 %v2172, 64
    %v2994 = vpop.permute.xlu0 %2993
    %v2997 = vsel %vm308, %v2904, 0
    %2999 = vmatprep.subr.mxu0 0.0
    %3000 = vmatpush1.msra.mxu0 %v2994
    %3001 = vmatprep.subr.mxu0 0.0
    %3002 = vmatpush1.msra.mxu0 0.0
    %3003 = vmatprep.subr.mxu0 0.0
    %3004 = vmatpush1.msra.mxu0 0.0
    %3005 = vmatprep.subr.mxu0 0.0
    %3006 = vmatpush1.msra.mxu0 0.0
    %3007 = vmatprep.subr.mxu0 0.0
    %3008 = vmatpush1.msra.mxu0 0.0
    %3009 = vmatprep.subr.mxu0 0.0
    %3010 = vmatpush1.msra.mxu0 0.0
    %3011 = vmatprep.subr.mxu0 0.0
    %3012 = vmatpush1.msra.mxu0 0.0
    %3013 = vmatprep.subr.mxu0 0.0
    %3014 = vmatpush1.msra.mxu0 0.0
    %3015 = vmatprep.subr.mxu0 0.0
    %3016 = vmatpush1.msra.mxu0 0.0
    %3017 = vmatprep.subr.mxu0 0.0
    %3018 = vmatpush1.msra.mxu0 0.0
    %3019 = vmatprep.subr.mxu0 0.0
    %3020 = vmatpush1.msra.mxu0 0.0
    %3021 = vmatprep.subr.mxu0 0.0
    %3022 = vmatpush1.msra.mxu0 0.0
    %3023 = vmatprep.subr.mxu0 0.0
    %3024 = vmatpush1.msra.mxu0 0.0
    %3025 = vmatprep.subr.mxu0 0.0
    %3026 = vmatpush1.msra.mxu0 0.0
    %3027 = vmatprep.subr.mxu0 0.0
    %3028 = vmatpush1.msra.mxu0 0.0
    %3029 = vmatprep.subr.mxu0 0.0
    %3030 = vmatpush1.msra.mxu0 0.0
    %3031 = vmatprep.subr.mxu0 0.0
    %3032 = vmatpush1.msra.mxu0 0.0
    %3033 = vmatprep.subr.mxu0 0.0
    %3034 = vmatpush1.msra.mxu0 0.0
    %3035 = vmatprep.subr.mxu0 0.0
    %3036 = vmatpush1.msra.mxu0 0.0
    %3037 = vmatprep.subr.mxu0 0.0
    %3038 = vmatpush1.msra.mxu0 0.0
    %3039 = vmatprep.subr.mxu0 0.0
    %3040 = vmatpush1.msra.mxu0 0.0
    %3041 = vmatprep.subr.mxu0 0.0
    %3042 = vmatpush1.msra.mxu0 0.0
    %3043 = vmatprep.subr.mxu0 0.0
    %3044 = vmatpush1.msra.mxu0 0.0
    %3045 = vmatprep.subr.mxu0 0.0
    %3046 = vmatpush1.msra.mxu0 0.0
    %3047 = vmatprep.subr.mxu0 0.0
    %3048 = vmatpush1.msra.mxu0 0.0
    %3049 = vmatprep.subr.mxu0 0.0
    %3050 = vmatpush1.msra.mxu0 0.0
    %3051 = vmatprep.subr.mxu0 0.0
    %3052 = vmatpush1.msra.mxu0 0.0
    %3053 = vmatprep.subr.mxu0 0.0
    %3054 = vmatpush1.msra.mxu0 0.0
    %3055 = vmatprep.subr.mxu0 0.0
    %3056 = vmatpush1.msra.mxu0 0.0
    %3057 = vmatprep.subr.mxu0 0.0
    %3058 = vmatpush1.msra.mxu0 0.0
    %3059 = vmatprep.subr.mxu0 0.0
    %3060 = vmatpush1.msra.mxu0 0.0
    %3061 = vmatprep.subr.mxu0 0.0
    %3062 = vmatpush1.msra.mxu0 0.0
    %3063 = vmatprep.mubr.f32.mxu0 0.0
    %3064 = vmatmul.mubr.f32.gmra.mrb[0].mxu0 %v2997
    %v3065 = vpop.f32.mrb[0].mxu0
    %v3066 = vadd.f32 0.0, %v3065
    %v3067 = vpop.f32.mrb[0].mxu0
    %3068 = vdwg.mxu0
    %3069 = vst.msk [vmem:[#allocation3] sm:$0xff] %vm308, %v2990
    %3070 = vst.msk [vmem:[#allocation3 + $0x8] sm:$0xff] %vm308, %v3066
    %3071 = vrot.lane.b32.xlu0 %v2167, 56
    %v3072 = vpop.permute.xlu0 %3071
    %v3075 = vsel %vm308, %v2906, 0
    %3077 = vmatprep.subr.mxu0 0.0
    %3078 = vmatpush1.msra.mxu0 %v3072
    %3079 = vmatprep.subr.mxu0 0.0
    %3080 = vmatpush1.msra.mxu0 0.0
    %3081 = vmatprep.subr.mxu0 0.0
    %3082 = vmatpush1.msra.mxu0 0.0
    %3083 = vmatprep.subr.mxu0 0.0
    %3084 = vmatpush1.msra.mxu0 0.0
    %3085 = vmatprep.subr.mxu0 0.0
    %3086 = vmatpush1.msra.mxu0 0.0
    %3087 = vmatprep.subr.mxu0 0.0
    %3088 = vmatpush1.msra.mxu0 0.0
    %3089 = vmatprep.subr.mxu0 0.0
    %3090 = vmatpush1.msra.mxu0 0.0
    %3091 = vmatprep.subr.mxu0 0.0
    %3092 = vmatpush1.msra.mxu0 0.0
    %3093 = vmatprep.subr.mxu0 0.0
    %3094 = vmatpush1.msra.mxu0 0.0
    %3095 = vmatprep.subr.mxu0 0.0
    %3096 = vmatpush1.msra.mxu0 0.0
    %3097 = vmatprep.subr.mxu0 0.0
    %3098 = vmatpush1.msra.mxu0 0.0
    %3099 = vmatprep.subr.mxu0 0.0
    %3100 = vmatpush1.msra.mxu0 0.0
    %3101 = vmatprep.subr.mxu0 0.0
    %3102 = vmatpush1.msra.mxu0 0.0
    %3103 = vmatprep.subr.mxu0 0.0
    %3104 = vmatpush1.msra.mxu0 0.0
    %3105 = vmatprep.subr.mxu0 0.0
    %3106 = vmatpush1.msra.mxu0 0.0
    %3107 = vmatprep.subr.mxu0 0.0
    %3108 = vmatpush1.msra.mxu0 0.0
    %3109 = vmatprep.subr.mxu0 0.0
    %3110 = vmatpush1.msra.mxu0 0.0
    %3111 = vmatprep.subr.mxu0 0.0
    %3112 = vmatpush1.msra.mxu0 0.0
    %3113 = vmatprep.subr.mxu0 0.0
    %3114 = vmatpush1.msra.mxu0 0.0
    %3115 = vmatprep.subr.mxu0 0.0
    %3116 = vmatpush1.msra.mxu0 0.0
    %3117 = vmatprep.subr.mxu0 0.0
    %3118 = vmatpush1.msra.mxu0 0.0
    %3119 = vmatprep.subr.mxu0 0.0
    %3120 = vmatpush1.msra.mxu0 0.0
    %3121 = vmatprep.subr.mxu0 0.0
    %3122 = vmatpush1.msra.mxu0 0.0
    %3123 = vmatprep.subr.mxu0 0.0
    %3124 = vmatpush1.msra.mxu0 0.0
    %3125 = vmatprep.subr.mxu0 0.0
    %3126 = vmatpush1.msra.mxu0 0.0
    %3127 = vmatprep.subr.mxu0 0.0
    %3128 = vmatpush1.msra.mxu0 0.0
    %3129 = vmatprep.subr.mxu0 0.0
    %3130 = vmatpush1.msra.mxu0 0.0
    %3131 = vmatprep.subr.mxu0 0.0
    %3132 = vmatpush1.msra.mxu0 0.0
    %3133 = vmatprep.subr.mxu0 0.0
    %3134 = vmatpush1.msra.mxu0 0.0
    %3135 = vmatprep.subr.mxu0 0.0
    %3136 = vmatpush1.msra.mxu0 0.0
    %3137 = vmatprep.subr.mxu0 0.0
    %3138 = vmatpush1.msra.mxu0 0.0
    %3139 = vmatprep.subr.mxu0 0.0
    %3140 = vmatpush1.msra.mxu0 0.0
    %3141 = vmatprep.mubr.f32.mxu0 0.0
    %3142 = vmatmul.mubr.f32.gmra.mrb[0].mxu0 %v3075
    %v3143 = vpop.f32.mrb[0].mxu0
    %v3144 = vadd.f32 0.0, %v3143
    %v3145 = vpop.f32.mrb[0].mxu0
    %3146 = vdwg.mxu0
    %3147 = vrot.lane.b32.xlu0 %v2172, 56
    %v3148 = vpop.permute.xlu0 %3147
    %v3151 = vsel %vm308, %v2908, 0
    %3153 = vmatprep.subr.mxu0 0.0
    %3154 = vmatpush1.msra.mxu0 %v3148
    %3155 = vmatprep.subr.mxu0 0.0
    %3156 = vmatpush1.msra.mxu0 0.0
    %3157 = vmatprep.subr.mxu0 0.0
    %3158 = vmatpush1.msra.mxu0 0.0
    %3159 = vmatprep.subr.mxu0 0.0
    %3160 = vmatpush1.msra.mxu0 0.0
    %3161 = vmatprep.subr.mxu0 0.0
    %3162 = vmatpush1.msra.mxu0 0.0
    %3163 = vmatprep.subr.mxu0 0.0
    %3164 = vmatpush1.msra.mxu0 0.0
    %3165 = vmatprep.subr.mxu0 0.0
    %3166 = vmatpush1.msra.mxu0 0.0
    %3167 = vmatprep.subr.mxu0 0.0
    %3168 = vmatpush1.msra.mxu0 0.0
    %3169 = vmatprep.subr.mxu0 0.0
    %3170 = vmatpush1.msra.mxu0 0.0
    %3171 = vmatprep.subr.mxu0 0.0
    %3172 = vmatpush1.msra.mxu0 0.0
    %3173 = vmatprep.subr.mxu0 0.0
    %3174 = vmatpush1.msra.mxu0 0.0
    %3175 = vmatprep.subr.mxu0 0.0
    %3176 = vmatpush1.msra.mxu0 0.0
    %3177 = vmatprep.subr.mxu0 0.0
    %3178 = vmatpush1.msra.mxu0 0.0
    %3179 = vmatprep.subr.mxu0 0.0
    %3180 = vmatpush1.msra.mxu0 0.0
    %3181 = vmatprep.subr.mxu0 0.0
    %3182 = vmatpush1.msra.mxu0 0.0
    %3183 = vmatprep.subr.mxu0 0.0
    %3184 = vmatpush1.msra.mxu0 0.0
    %3185 = vmatprep.subr.mxu0 0.0
    %3186 = vmatpush1.msra.mxu0 0.0
    %3187 = vmatprep.subr.mxu0 0.0
    %3188 = vmatpush1.msra.mxu0 0.0
    %3189 = vmatprep.subr.mxu0 0.0
    %3190 = vmatpush1.msra.mxu0 0.0
    %3191 = vmatprep.subr.mxu0 0.0
    %3192 = vmatpush1.msra.mxu0 0.0
    %3193 = vmatprep.subr.mxu0 0.0
    %3194 = vmatpush1.msra.mxu0 0.0
    %3195 = vmatprep.subr.mxu0 0.0
    %3196 = vmatpush1.msra.mxu0 0.0
    %3197 = vmatprep.subr.mxu0 0.0
    %3198 = vmatpush1.msra.mxu0 0.0
    %3199 = vmatprep.subr.mxu0 0.0
    %3200 = vmatpush1.msra.mxu0 0.0
    %3201 = vmatprep.subr.mxu0 0.0
    %3202 = vmatpush1.msra.mxu0 0.0
    %3203 = vmatprep.subr.mxu0 0.0
    %3204 = vmatpush1.msra.mxu0 0.0
    %3205 = vmatprep.subr.mxu0 0.0
    %3206 = vmatpush1.msra.mxu0 0.0
    %3207 = vmatprep.subr.mxu0 0.0
    %3208 = vmatpush1.msra.mxu0 0.0
    %3209 = vmatprep.subr.mxu0 0.0
    %3210 = vmatpush1.msra.mxu0 0.0
    %3211 = vmatprep.subr.mxu0 0.0
    %3212 = vmatpush1.msra.mxu0 0.0
    %3213 = vmatprep.subr.mxu0 0.0
    %3214 = vmatpush1.msra.mxu0 0.0
    %3215 = vmatprep.subr.mxu0 0.0
    %3216 = vmatpush1.msra.mxu0 0.0
    %3217 = vmatprep.mubr.f32.mxu0 0.0
    %3218 = vmatmul.mubr.f32.gmra.mrb[0].mxu0 %v3151
    %v3219 = vpop.f32.mrb[0].mxu0
    %v3220 = vadd.f32 0.0, %v3219
    %v3221 = vpop.f32.mrb[0].mxu0
    %3222 = vdwg.mxu0
    %3225 = vrot.lane.b32.xlu0 %v3144, 8
    %v3226 = vpop.permute.xlu0 %3225
    %3227 = vrot.lane.b32.xlu0 %v3220, 8
    %v3228 = vpop.permute.xlu0 %3227
    %3231 = vst.msk [vmem:[#allocation3] sm:$0xff] %vm1362, %v3226
    %3232 = vst.msk [vmem:[#allocation3 + $0x8] sm:$0xff] %vm1362, %v3228
    %3233 = vrot.lane.b32.xlu0 %v2167, 48
    %v3234 = vpop.permute.xlu0 %3233
    %v3237 = vsel %vm308, %v2910, 0
    %3239 = vmatprep.subr.mxu0 0.0
    %3240 = vmatpush1.msra.mxu0 %v3234
    %3241 = vmatprep.subr.mxu0 0.0
    %3242 = vmatpush1.msra.mxu0 0.0
    %3243 = vmatprep.subr.mxu0 0.0
    %3244 = vmatpush1.msra.mxu0 0.0
    %3245 = vmatprep.subr.mxu0 0.0
    %3246 = vmatpush1.msra.mxu0 0.0
    %3247 = vmatprep.subr.mxu0 0.0
    %3248 = vmatpush1.msra.mxu0 0.0
    %3249 = vmatprep.subr.mxu0 0.0
    %3250 = vmatpush1.msra.mxu0 0.0
    %3251 = vmatprep.subr.mxu0 0.0
    %3252 = vmatpush1.msra.mxu0 0.0
    %3253 = vmatprep.subr.mxu0 0.0
    %3254 = vmatpush1.msra.mxu0 0.0
    %3255 = vmatprep.subr.mxu0 0.0
    %3256 = vmatpush1.msra.mxu0 0.0
    %3257 = vmatprep.subr.mxu0 0.0
    %3258 = vmatpush1.msra.mxu0 0.0
    %3259 = vmatprep.subr.mxu0 0.0
    %3260 = vmatpush1.msra.mxu0 0.0
    %3261 = vmatprep.subr.mxu0 0.0
    %3262 = vmatpush1.msra.mxu0 0.0
    %3263 = vmatprep.subr.mxu0 0.0
    %3264 = vmatpush1.msra.mxu0 0.0
    %3265 = vmatprep.subr.mxu0 0.0
    %3266 = vmatpush1.msra.mxu0 0.0
    %3267 = vmatprep.subr.mxu0 0.0
    %3268 = vmatpush1.msra.mxu0 0.0
    %3269 = vmatprep.subr.mxu0 0.0
    %3270 = vmatpush1.msra.mxu0 0.0
    %3271 = vmatprep.subr.mxu0 0.0
    %3272 = vmatpush1.msra.mxu0 0.0
    %3273 = vmatprep.subr.mxu0 0.0
    %3274 = vmatpush1.msra.mxu0 0.0
    %3275 = vmatprep.subr.mxu0 0.0
    %3276 = vmatpush1.msra.mxu0 0.0
    %3277 = vmatprep.subr.mxu0 0.0
    %3278 = vmatpush1.msra.mxu0 0.0
    %3279 = vmatprep.subr.mxu0 0.0
    %3280 = vmatpush1.msra.mxu0 0.0
    %3281 = vmatprep.subr.mxu0 0.0
    %3282 = vmatpush1.msra.mxu0 0.0
    %3283 = vmatprep.subr.mxu0 0.0
    %3284 = vmatpush1.msra.mxu0 0.0
    %3285 = vmatprep.subr.mxu0 0.0
    %3286 = vmatpush1.msra.mxu0 0.0
    %3287 = vmatprep.subr.mxu0 0.0
    %3288 = vmatpush1.msra.mxu0 0.0
    %3289 = vmatprep.subr.mxu0 0.0
    %3290 = vmatpush1.msra.mxu0 0.0
    %3291 = vmatprep.subr.mxu0 0.0
    %3292 = vmatpush1.msra.mxu0 0.0
    %3293 = vmatprep.subr.mxu0 0.0
    %3294 = vmatpush1.msra.mxu0 0.0
    %3295 = vmatprep.subr.mxu0 0.0
    %3296 = vmatpush1.msra.mxu0 0.0
    %3297 = vmatprep.subr.mxu0 0.0
    %3298 = vmatpush1.msra.mxu0 0.0
    %3299 = vmatprep.subr.mxu0 0.0
    %3300 = vmatpush1.msra.mxu0 0.0
    %3301 = vmatprep.subr.mxu0 0.0
    %3302 = vmatpush1.msra.mxu0 0.0
    %3303 = vmatprep.mubr.f32.mxu0 0.0
    %3304 = vmatmul.mubr.f32.gmra.mrb[0].mxu0 %v3237
    %v3305 = vpop.f32.mrb[0].mxu0
    %v3306 = vadd.f32 0.0, %v3305
    %v3307 = vpop.f32.mrb[0].mxu0
    %3308 = vdwg.mxu0
    %3309 = vrot.lane.b32.xlu0 %v2172, 48
    %v3310 = vpop.permute.xlu0 %3309
    %v3313 = vsel %vm308, %v2912, 0
    %3315 = vmatprep.subr.mxu0 0.0
    %3316 = vmatpush1.msra.mxu0 %v3310
    %3317 = vmatprep.subr.mxu0 0.0
    %3318 = vmatpush1.msra.mxu0 0.0
    %3319 = vmatprep.subr.mxu0 0.0
    %3320 = vmatpush1.msra.mxu0 0.0
    %3321 = vmatprep.subr.mxu0 0.0
    %3322 = vmatpush1.msra.mxu0 0.0
    %3323 = vmatprep.subr.mxu0 0.0
    %3324 = vmatpush1.msra.mxu0 0.0
    %3325 = vmatprep.subr.mxu0 0.0
    %3326 = vmatpush1.msra.mxu0 0.0
    %3327 = vmatprep.subr.mxu0 0.0
    %3328 = vmatpush1.msra.mxu0 0.0
    %3329 = vmatprep.subr.mxu0 0.0
    %3330 = vmatpush1.msra.mxu0 0.0
    %3331 = vmatprep.subr.mxu0 0.0
    %3332 = vmatpush1.msra.mxu0 0.0
    %3333 = vmatprep.subr.mxu0 0.0
    %3334 = vmatpush1.msra.mxu0 0.0
    %3335 = vmatprep.subr.mxu0 0.0
    %3336 = vmatpush1.msra.mxu0 0.0
    %3337 = vmatprep.subr.mxu0 0.0
    %3338 = vmatpush1.msra.mxu0 0.0
    %3339 = vmatprep.subr.mxu0 0.0
    %3340 = vmatpush1.msra.mxu0 0.0
    %3341 = vmatprep.subr.mxu0 0.0
    %3342 = vmatpush1.msra.mxu0 0.0
    %3343 = vmatprep.subr.mxu0 0.0
    %3344 = vmatpush1.msra.mxu0 0.0
    %3345 = vmatprep.subr.mxu0 0.0
    %3346 = vmatpush1.msra.mxu0 0.0
    %3347 = vmatprep.subr.mxu0 0.0
    %3348 = vmatpush1.msra.mxu0 0.0
    %3349 = vmatprep.subr.mxu0 0.0
    %3350 = vmatpush1.msra.mxu0 0.0
    %3351 = vmatprep.subr.mxu0 0.0
    %3352 = vmatpush1.msra.mxu0 0.0
    %3353 = vmatprep.subr.mxu0 0.0
    %3354 = vmatpush1.msra.mxu0 0.0
    %3355 = vmatprep.subr.mxu0 0.0
    %3356 = vmatpush1.msra.mxu0 0.0
    %3357 = vmatprep.subr.mxu0 0.0
    %3358 = vmatpush1.msra.mxu0 0.0
    %3359 = vmatprep.subr.mxu0 0.0
    %3360 = vmatpush1.msra.mxu0 0.0
    %3361 = vmatprep.subr.mxu0 0.0
    %3362 = vmatpush1.msra.mxu0 0.0
    %3363 = vmatprep.subr.mxu0 0.0
    %3364 = vmatpush1.msra.mxu0 0.0
    %3365 = vmatprep.subr.mxu0 0.0
    %3366 = vmatpush1.msra.mxu0 0.0
    %3367 = vmatprep.subr.mxu0 0.0
    %3368 = vmatpush1.msra.mxu0 0.0
    %3369 = vmatprep.subr.mxu0 0.0
    %3370 = vmatpush1.msra.mxu0 0.0
    %3371 = vmatprep.subr.mxu0 0.0
    %3372 = vmatpush1.msra.mxu0 0.0
    %3373 = vmatprep.subr.mxu0 0.0
    %3374 = vmatpush1.msra.mxu0 0.0
    %3375 = vmatprep.subr.mxu0 0.0
    %3376 = vmatpush1.msra.mxu0 0.0
    %3377 = vmatprep.subr.mxu0 0.0
    %3378 = vmatpush1.msra.mxu0 0.0
    %3379 = vmatprep.mubr.f32.mxu0 0.0
    %3380 = vmatmul.mubr.f32.gmra.mrb[0].mxu0 %v3313
    %v3381 = vpop.f32.mrb[0].mxu0
    %v3382 = vadd.f32 0.0, %v3381
    %v3383 = vpop.f32.mrb[0].mxu0
    %3384 = vdwg.mxu0
    %3387 = vrot.lane.b32.xlu0 %v3306, 16
    %v3388 = vpop.permute.xlu0 %3387
    %3389 = vrot.lane.b32.xlu0 %v3382, 16
    %v3390 = vpop.permute.xlu0 %3389
    %3393 = vst.msk [vmem:[#allocation3] sm:$0xff] %vm1525, %v3388
    %3394 = vst.msk [vmem:[#allocation3 + $0x8] sm:$0xff] %vm1525, %v3390
    %3395 = vrot.lane.b32.xlu0 %v2167, 40
    %v3396 = vpop.permute.xlu0 %3395
    %v3399 = vsel %vm308, %v2914, 0
    %3401 = vmatprep.subr.mxu0 0.0
    %3402 = vmatpush1.msra.mxu0 %v3396
    %3403 = vmatprep.subr.mxu0 0.0
    %3404 = vmatpush1.msra.mxu0 0.0
    %3405 = vmatprep.subr.mxu0 0.0
    %3406 = vmatpush1.msra.mxu0 0.0
    %3407 = vmatprep.subr.mxu0 0.0
    %3408 = vmatpush1.msra.mxu0 0.0
    %3409 = vmatprep.subr.mxu0 0.0
    %3410 = vmatpush1.msra.mxu0 0.0
    %3411 = vmatprep.subr.mxu0 0.0
    %3412 = vmatpush1.msra.mxu0 0.0
    %3413 = vmatprep.subr.mxu0 0.0
    %3414 = vmatpush1.msra.mxu0 0.0
    %3415 = vmatprep.subr.mxu0 0.0
    %3416 = vmatpush1.msra.mxu0 0.0
    %3417 = vmatprep.subr.mxu0 0.0
    %3418 = vmatpush1.msra.mxu0 0.0
    %3419 = vmatprep.subr.mxu0 0.0
    %3420 = vmatpush1.msra.mxu0 0.0
    %3421 = vmatprep.subr.mxu0 0.0
    %3422 = vmatpush1.msra.mxu0 0.0
    %3423 = vmatprep.subr.mxu0 0.0
    %3424 = vmatpush1.msra.mxu0 0.0
    %3425 = vmatprep.subr.mxu0 0.0
    %3426 = vmatpush1.msra.mxu0 0.0
    %3427 = vmatprep.subr.mxu0 0.0
    %3428 = vmatpush1.msra.mxu0 0.0
    %3429 = vmatprep.subr.mxu0 0.0
    %3430 = vmatpush1.msra.mxu0 0.0
    %3431 = vmatprep.subr.mxu0 0.0
    %3432 = vmatpush1.msra.mxu0 0.0
    %3433 = vmatprep.subr.mxu0 0.0
    %3434 = vmatpush1.msra.mxu0 0.0
    %3435 = vmatprep.subr.mxu0 0.0
    %3436 = vmatpush1.msra.mxu0 0.0
    %3437 = vmatprep.subr.mxu0 0.0
    %3438 = vmatpush1.msra.mxu0 0.0
    %3439 = vmatprep.subr.mxu0 0.0
    %3440 = vmatpush1.msra.mxu0 0.0
    %3441 = vmatprep.subr.mxu0 0.0
    %3442 = vmatpush1.msra.mxu0 0.0
    %3443 = vmatprep.subr.mxu0 0.0
    %3444 = vmatpush1.msra.mxu0 0.0
    %3445 = vmatprep.subr.mxu0 0.0
    %3446 = vmatpush1.msra.mxu0 0.0
    %3447 = vmatprep.subr.mxu0 0.0
    %3448 = vmatpush1.msra.mxu0 0.0
    %3449 = vmatprep.subr.mxu0 0.0
    %3450 = vmatpush1.msra.mxu0 0.0
    %3451 = vmatprep.subr.mxu0 0.0
    %3452 = vmatpush1.msra.mxu0 0.0
    %3453 = vmatprep.subr.mxu0 0.0
    %3454 = vmatpush1.msra.mxu0 0.0
    %3455 = vmatprep.subr.mxu0 0.0
    %3456 = vmatpush1.msra.mxu0 0.0
    %3457 = vmatprep.subr.mxu0 0.0
    %3458 = vmatpush1.msra.mxu0 0.0
    %3459 = vmatprep.subr.mxu0 0.0
    %3460 = vmatpush1.msra.mxu0 0.0
    %3461 = vmatprep.subr.mxu0 0.0
    %3462 = vmatpush1.msra.mxu0 0.0
    %3463 = vmatprep.subr.mxu0 0.0
    %3464 = vmatpush1.msra.mxu0 0.0
    %3465 = vmatprep.mubr.f32.mxu0 0.0
    %3466 = vmatmul.mubr.f32.gmra.mrb[0].mxu0 %v3399
    %v3467 = vpop.f32.mrb[0].mxu0
    %v3468 = vadd.f32 0.0, %v3467
    %v3469 = vpop.f32.mrb[0].mxu0
    %3470 = vdwg.mxu0
    %3471 = vrot.lane.b32.xlu0 %v2172, 40
    %v3472 = vpop.permute.xlu0 %3471
    %v3475 = vsel %vm308, %v2916, 0
    %3477 = vmatprep.subr.mxu0 0.0
    %3478 = vmatpush1.msra.mxu0 %v3472
    %3479 = vmatprep.subr.mxu0 0.0
    %3480 = vmatpush1.msra.mxu0 0.0
    %3481 = vmatprep.subr.mxu0 0.0
    %3482 = vmatpush1.msra.mxu0 0.0
    %3483 = vmatprep.subr.mxu0 0.0
    %3484 = vmatpush1.msra.mxu0 0.0
    %3485 = vmatprep.subr.mxu0 0.0
    %3486 = vmatpush1.msra.mxu0 0.0
    %3487 = vmatprep.subr.mxu0 0.0
    %3488 = vmatpush1.msra.mxu0 0.0
    %3489 = vmatprep.subr.mxu0 0.0
    %3490 = vmatpush1.msra.mxu0 0.0
    %3491 = vmatprep.subr.mxu0 0.0
    %3492 = vmatpush1.msra.mxu0 0.0
    %3493 = vmatprep.subr.mxu0 0.0
    %3494 = vmatpush1.msra.mxu0 0.0
    %3495 = vmatprep.subr.mxu0 0.0
    %3496 = vmatpush1.msra.mxu0 0.0
    %3497 = vmatprep.subr.mxu0 0.0
    %3498 = vmatpush1.msra.mxu0 0.0
    %3499 = vmatprep.subr.mxu0 0.0
    %3500 = vmatpush1.msra.mxu0 0.0
    %3501 = vmatprep.subr.mxu0 0.0
    %3502 = vmatpush1.msra.mxu0 0.0
    %3503 = vmatprep.subr.mxu0 0.0
    %3504 = vmatpush1.msra.mxu0 0.0
    %3505 = vmatprep.subr.mxu0 0.0
    %3506 = vmatpush1.msra.mxu0 0.0
    %3507 = vmatprep.subr.mxu0 0.0
    %3508 = vmatpush1.msra.mxu0 0.0
    %3509 = vmatprep.subr.mxu0 0.0
    %3510 = vmatpush1.msra.mxu0 0.0
    %3511 = vmatprep.subr.mxu0 0.0
    %3512 = vmatpush1.msra.mxu0 0.0
    %3513 = vmatprep.subr.mxu0 0.0
    %3514 = vmatpush1.msra.mxu0 0.0
    %3515 = vmatprep.subr.mxu0 0.0
    %3516 = vmatpush1.msra.mxu0 0.0
    %3517 = vmatprep.subr.mxu0 0.0
    %3518 = vmatpush1.msra.mxu0 0.0
    %3519 = vmatprep.subr.mxu0 0.0
    %3520 = vmatpush1.msra.mxu0 0.0
    %3521 = vmatprep.subr.mxu0 0.0
    %3522 = vmatpush1.msra.mxu0 0.0
    %3523 = vmatprep.subr.mxu0 0.0
    %3524 = vmatpush1.msra.mxu0 0.0
    %3525 = vmatprep.subr.mxu0 0.0
    %3526 = vmatpush1.msra.mxu0 0.0
    %3527 = vmatprep.subr.mxu0 0.0
    %3528 = vmatpush1.msra.mxu0 0.0
    %3529 = vmatprep.subr.mxu0 0.0
    %3530 = vmatpush1.msra.mxu0 0.0
    %3531 = vmatprep.subr.mxu0 0.0
    %3532 = vmatpush1.msra.mxu0 0.0
    %3533 = vmatprep.subr.mxu0 0.0
    %3534 = vmatpush1.msra.mxu0 0.0
    %3535 = vmatprep.subr.mxu0 0.0
    %3536 = vmatpush1.msra.mxu0 0.0
    %3537 = vmatprep.subr.mxu0 0.0
    %3538 = vmatpush1.msra.mxu0 0.0
    %3539 = vmatprep.subr.mxu0 0.0
    %3540 = vmatpush1.msra.mxu0 0.0
    %3541 = vmatprep.mubr.f32.mxu0 0.0
    %3542 = vmatmul.mubr.f32.gmra.mrb[0].mxu0 %v3475
    %v3543 = vpop.f32.mrb[0].mxu0
    %v3544 = vadd.f32 0.0, %v3543
    %v3545 = vpop.f32.mrb[0].mxu0
    %3546 = vdwg.mxu0
    %3549 = vrot.lane.b32.xlu0 %v3468, 24
    %v3550 = vpop.permute.xlu0 %3549
    %3551 = vrot.lane.b32.xlu0 %v3544, 24
    %v3552 = vpop.permute.xlu0 %3551
    %3555 = vst.msk [vmem:[#allocation3] sm:$0xff] %vm1688, %v3550
    %3556 = vst.msk [vmem:[#allocation3 + $0x8] sm:$0xff] %vm1688, %v3552
    %v3557 = vld [vmem:[#allocation3] sm:$0xff]
    %v3558 = vld [vmem:[#allocation3 + $0x8] sm:$0xff]
    %v3560 = vlaneseq
    %v3561 = vshrl.u32 %v3560, 7
    %v3562 = vsub.s32 0, %v3561
    %v3563 = vrot.slane %v2021, %v3562
    %v3566 = vsel %vm174, %v3557, 0
    %v3569 = vsel %vm174, %v3558, 0
    %3571 = vmatprep.subr.mxu0 0.0
    %3572 = vmatpush1.msra.mxu0 %v2017
    %3573 = vmatprep.subr.mxu0 0.0
    %3574 = vmatpush1.msra.mxu0 %v2018
    %3575 = vmatprep.subr.mxu0 0.0
    %3576 = vmatpush1.msra.mxu0 %v2019
    %3577 = vmatprep.subr.mxu0 0.0
    %3578 = vmatpush1.msra.mxu0 %v2020
    %3579 = vmatprep.subr.mxu0 0.0
    %3580 = vmatpush1.msra.mxu0 0.0
    %3581 = vmatprep.subr.mxu0 0.0
    %3582 = vmatpush1.msra.mxu0 0.0
    %3583 = vmatprep.subr.mxu0 0.0
    %3584 = vmatpush1.msra.mxu0 0.0
    %3585 = vmatprep.subr.mxu0 0.0
    %3586 = vmatpush1.msra.mxu0 0.0
    %3587 = vmatprep.subr.mxu0 0.0
    %3588 = vmatpush1.msra.mxu0 0.0
    %3589 = vmatprep.subr.mxu0 0.0
    %3590 = vmatpush1.msra.mxu0 0.0
    %3591 = vmatprep.subr.mxu0 0.0
    %3592 = vmatpush1.msra.mxu0 0.0
    %3593 = vmatprep.subr.mxu0 0.0
    %3594 = vmatpush1.msra.mxu0 0.0
    %3595 = vmatprep.subr.mxu0 0.0
    %3596 = vmatpush1.msra.mxu0 0.0
    %3597 = vmatprep.subr.mxu0 0.0
    %3598 = vmatpush1.msra.mxu0 0.0
    %3599 = vmatprep.subr.mxu0 0.0
    %3600 = vmatpush1.msra.mxu0 0.0
    %3601 = vmatprep.subr.mxu0 0.0
    %3602 = vmatpush1.msra.mxu0 0.0
    %3603 = vmatprep.subr.mxu0 0.0
    %3604 = vmatpush1.msra.mxu0 0.0
    %3605 = vmatprep.subr.mxu0 0.0
    %3606 = vmatpush1.msra.mxu0 0.0
    %3607 = vmatprep.subr.mxu0 0.0
    %3608 = vmatpush1.msra.mxu0 0.0
    %3609 = vmatprep.subr.mxu0 0.0
    %3610 = vmatpush1.msra.mxu0 0.0
    %3611 = vmatprep.subr.mxu0 0.0
    %3612 = vmatpush1.msra.mxu0 0.0
    %3613 = vmatprep.subr.mxu0 0.0
    %3614 = vmatpush1.msra.mxu0 0.0
    %3615 = vmatprep.subr.mxu0 0.0
    %3616 = vmatpush1.msra.mxu0 0.0
    %3617 = vmatprep.subr.mxu0 0.0
    %3618 = vmatpush1.msra.mxu0 0.0
    %3619 = vmatprep.subr.mxu0 0.0
    %3620 = vmatpush1.msra.mxu0 0.0
    %3621 = vmatprep.subr.mxu0 0.0
    %3622 = vmatpush1.msra.mxu0 0.0
    %3623 = vmatprep.subr.mxu0 0.0
    %3624 = vmatpush1.msra.mxu0 0.0
    %3625 = vmatprep.subr.mxu0 0.0
    %3626 = vmatpush1.msra.mxu0 0.0
    %3627 = vmatprep.subr.mxu0 0.0
    %3628 = vmatpush1.msra.mxu0 0.0
    %3629 = vmatprep.subr.mxu0 0.0
    %3630 = vmatpush1.msra.mxu0 0.0
    %3631 = vmatprep.subr.mxu0 0.0
    %3632 = vmatpush1.msra.mxu0 0.0
    %3633 = vmatprep.subr.mxu0 0.0
    %3634 = vmatpush1.msra.mxu0 0.0
    %3635 = vmatprep.mubr.f32.mxu0 0.0
    %3636 = vmatmul.mubr.f32.gmra.mrb[0].mxu0 %v3566
    %v3637 = vpop.f32.mrb[0].mxu0
    %v3638 = vadd.f32 %v3563, %v3637
    %v3639 = vpop.f32.mrb[0].mxu0
    %3640 = vmatprep.mubr.f32.mxu0 0.0
    %3641 = vmatmul.mubr.f32.gmra.mrb[0].mxu0 %v3569
    %v3642 = vpop.f32.mrb[0].mxu0
    %v3643 = vadd.f32 %v3563, %v3642
    %v3644 = vpop.f32.mrb[0].mxu0
    %3645 = vdwg.mxu0
    %v3646 = vadd.f32 %v2008, %v3638
    %v3647 = vadd.f32 %v2009, %v3643
    %v3648 = vsel %vm174, %v3646, 0.0
    %3649 = vadd.xlane.f32.xlu0 %v3648
    %v3650 = vpop.xlane.xlu0 %3649
    %v3651 = vsel %vm174, %v3647, 0.0
    %3652 = vadd.xlane.f32.xlu0 %v3651
    %v3653 = vpop.xlane.xlu0 %3652
    %v3654 = vmul.f32 %v3650, %v181
    %v3655 = vmul.f32 %v3653, %v181
    %v3656 = vsub.f32 %v3646, %v3654
    %v3657 = vsub.f32 %v3647, %v3655
    %v3658 = vmul.f32 %v3656, %v3656
    %v3659 = vmul.f32 %v3657, %v3657
    %v3660 = vsel %vm174, %v3658, 0.0
    %3661 = vadd.xlane.f32.xlu0 %v3660
    %v3662 = vpop.xlane.xlu0 %3661
    %v3663 = vsel %vm174, %v3659, 0.0
    %3664 = vadd.xlane.f32.xlu0 %v3663
    %v3665 = vpop.xlane.xlu0 %3664
    %v3666 = vmul.f32 %v3662, %v181
    %v3667 = vmul.f32 %v3665, %v181
    %v3668 = vadd.f32 %v3666, 1e-05
    %v3669 = vadd.f32 %v3667, 1e-05
    %v3670 = vrsqrt.pop %v3668
    %v3671 = vrsqrt.pop %v3669
    %v3672 = vmul.f32 %v3656, %v3670
    %v3673 = vmul.f32 %v3657, %v3671
    %v3675 = vlaneseq
    %v3676 = vshrl.u32 %v3675, 7
    %v3677 = vsub.s32 0, %v3676
    %v3678 = vrot.slane %v2022, %v3677
    %v3680 = vmul.f32 %v3672, %v3678
    %v3681 = vmul.f32 %v3673, %v3678
    %v3683 = vlaneseq
    %v3684 = vshrl.u32 %v3683, 7
    %v3685 = vsub.s32 0, %v3684
    %v3686 = vrot.slane %v2023, %v3685
    %v3688 = vadd.f32 %v3680, %v3686
    %v3689 = vadd.f32 %v3681, %v3686
    %v3691 = vlaneseq
    %v3692 = vshrl.u32 %v3691, 7
    %v3693 = vsub.s32 0, %v3692
    %v3694 = vrot.slane %v2028, %v3693
    %v3697 = vsel %vm174, %v3688, 0
    %v3700 = vsel %vm174, %v3689, 0
    %3702 = vmatprep.subr.mxu0 0.0
    %3703 = vmatpush1.msra.mxu0 %v2024
    %3704 = vmatprep.subr.mxu0 0.0
    %3705 = vmatpush1.msra.mxu0 %v2025
    %3706 = vmatprep.subr.mxu0 0.0
    %3707 = vmatpush1.msra.mxu0 %v2026
    %3708 = vmatprep.subr.mxu0 0.0
    %3709 = vmatpush1.msra.mxu0 %v2027
    %3710 = vmatprep.subr.mxu0 0.0
    %3711 = vmatpush1.msra.mxu0 0.0
    %3712 = vmatprep.subr.mxu0 0.0
    %3713 = vmatpush1.msra.mxu0 0.0
    %3714 = vmatprep.subr.mxu0 0.0
    %3715 = vmatpush1.msra.mxu0 0.0
    %3716 = vmatprep.subr.mxu0 0.0
    %3717 = vmatpush1.msra.mxu0 0.0
    %3718 = vmatprep.subr.mxu0 0.0
    %3719 = vmatpush1.msra.mxu0 0.0
    %3720 = vmatprep.subr.mxu0 0.0
    %3721 = vmatpush1.msra.mxu0 0.0
    %3722 = vmatprep.subr.mxu0 0.0
    %3723 = vmatpush1.msra.mxu0 0.0
    %3724 = vmatprep.subr.mxu0 0.0
    %3725 = vmatpush1.msra.mxu0 0.0
    %3726 = vmatprep.subr.mxu0 0.0
    %3727 = vmatpush1.msra.mxu0 0.0
    %3728 = vmatprep.subr.mxu0 0.0
    %3729 = vmatpush1.msra.mxu0 0.0
    %3730 = vmatprep.subr.mxu0 0.0
    %3731 = vmatpush1.msra.mxu0 0.0
    %3732 = vmatprep.subr.mxu0 0.0
    %3733 = vmatpush1.msra.mxu0 0.0
    %3734 = vmatprep.subr.mxu0 0.0
    %3735 = vmatpush1.msra.mxu0 0.0
    %3736 = vmatprep.subr.mxu0 0.0
    %3737 = vmatpush1.msra.mxu0 0.0
    %3738 = vmatprep.subr.mxu0 0.0
    %3739 = vmatpush1.msra.mxu0 0.0
    %3740 = vmatprep.subr.mxu0 0.0
    %3741 = vmatpush1.msra.mxu0 0.0
    %3742 = vmatprep.subr.mxu0 0.0
    %3743 = vmatpush1.msra.mxu0 0.0
    %3744 = vmatprep.subr.mxu0 0.0
    %3745 = vmatpush1.msra.mxu0 0.0
    %3746 = vmatprep.subr.mxu0 0.0
    %3747 = vmatpush1.msra.mxu0 0.0
    %3748 = vmatprep.subr.mxu0 0.0
    %3749 = vmatpush1.msra.mxu0 0.0
    %3750 = vmatprep.subr.mxu0 0.0
    %3751 = vmatpush1.msra.mxu0 0.0
    %3752 = vmatprep.subr.mxu0 0.0
    %3753 = vmatpush1.msra.mxu0 0.0
    %3754 = vmatprep.subr.mxu0 0.0
    %3755 = vmatpush1.msra.mxu0 0.0
    %3756 = vmatprep.subr.mxu0 0.0
    %3757 = vmatpush1.msra.mxu0 0.0
    %3758 = vmatprep.subr.mxu0 0.0
    %3759 = vmatpush1.msra.mxu0 0.0
    %3760 = vmatprep.subr.mxu0 0.0
    %3761 = vmatpush1.msra.mxu0 0.0
    %3762 = vmatprep.subr.mxu0 0.0
    %3763 = vmatpush1.msra.mxu0 0.0
    %3764 = vmatprep.subr.mxu0 0.0
    %3765 = vmatpush1.msra.mxu0 0.0
    %3766 = vmatprep.mubr.f32.mxu0 0.0
    %3767 = vmatmul.mubr.f32.gmra.mrb[0].mxu0 %v3697
    %v3768 = vpop.f32.mrb[0].mxu0
    %v3769 = vadd.f32 %v3694, %v3768
    %v3770 = vpop.f32.mrb[0].mxu0
    %3771 = vmatprep.mubr.f32.mxu0 0.0
    %3772 = vmatmul.mubr.f32.gmra.mrb[0].mxu0 %v3700
    %v3773 = vpop.f32.mrb[0].mxu0
    %v3774 = vadd.f32 %v3694, %v3773
    %v3775 = vpop.f32.mrb[0].mxu0
    %3776 = vdwg.mxu0
    %v3777 = vmul.f32 %v3769, -1.702
    %v3778 = vmul.f32 %v3774, -1.702
    %v3779 = vmul.f32 %v3777, 1.442695
    %v3780 = vpow.pop %v3779
    %v3781 = vmul.f32 %v3778, 1.442695
    %v3782 = vpow.pop %v3781
    %v3783 = vadd.f32 %v3780, 1.0
    %v3784 = vadd.f32 %v3782, 1.0
    %v3785 = vrcp.pop %v3783
    %v3786 = vmul.f32 1.0, %v3785
    %v3787 = vrcp.pop %v3784
    %v3788 = vmul.f32 1.0, %v3787
    %v3789 = vmul.f32 %v3769, %v3786
    %v3790 = vmul.f32 %v3774, %v3788
    %3791 = vmatprep.subr.mxu0 0.0
    %3792 = vmatpush1.msra.mxu0 %v2029
    %3793 = vmatprep.subr.mxu0 0.0
    %3794 = vmatpush1.msra.mxu0 %v2030
    %3795 = vmatprep.subr.mxu0 0.0
    %3796 = vmatpush1.msra.mxu0 %v2031
    %3797 = vmatprep.subr.mxu0 0.0
    %3798 = vmatpush1.msra.mxu0 %v2032
    %3799 = vmatprep.subr.mxu0 0.0
    %3800 = vmatpush1.msra.mxu0 %v2033
    %3801 = vmatprep.subr.mxu0 0.0
    %3802 = vmatpush1.msra.mxu0 %v2034
    %3803 = vmatprep.subr.mxu0 0.0
    %3804 = vmatpush1.msra.mxu0 %v2035
    %3805 = vmatprep.subr.mxu0 0.0
    %3806 = vmatpush1.msra.mxu0 %v2036
    %3807 = vmatprep.subr.mxu0 0.0
    %3808 = vmatpush1.msra.mxu0 %v2037
    %3809 = vmatprep.subr.mxu0 0.0
    %3810 = vmatpush1.msra.mxu0 %v2038
    %3811 = vmatprep.subr.mxu0 0.0
    %3812 = vmatpush1.msra.mxu0 %v2039
    %3813 = vmatprep.subr.mxu0 0.0
    %3814 = vmatpush1.msra.mxu0 %v2040
    %3815 = vmatprep.subr.mxu0 0.0
    %3816 = vmatpush1.msra.mxu0 %v2041
    %3817 = vmatprep.subr.mxu0 0.0
    %3818 = vmatpush1.msra.mxu0 %v2042
    %3819 = vmatprep.subr.mxu0 0.0
    %3820 = vmatpush1.msra.mxu0 %v2043
    %3821 = vmatprep.subr.mxu0 0.0
    %3822 = vmatpush1.msra.mxu0 %v2044
    %3823 = vmatprep.subr.mxu0 0.0
    %3824 = vmatpush1.msra.mxu0 0.0
    %3825 = vmatprep.subr.mxu0 0.0
    %3826 = vmatpush1.msra.mxu0 0.0
    %3827 = vmatprep.subr.mxu0 0.0
    %3828 = vmatpush1.msra.mxu0 0.0
    %3829 = vmatprep.subr.mxu0 0.0
    %3830 = vmatpush1.msra.mxu0 0.0
    %3831 = vmatprep.subr.mxu0 0.0
    %3832 = vmatpush1.msra.mxu0 0.0
    %3833 = vmatprep.subr.mxu0 0.0
    %3834 = vmatpush1.msra.mxu0 0.0
    %3835 = vmatprep.subr.mxu0 0.0
    %3836 = vmatpush1.msra.mxu0 0.0
    %3837 = vmatprep.subr.mxu0 0.0
    %3838 = vmatpush1.msra.mxu0 0.0
    %3839 = vmatprep.subr.mxu0 0.0
    %3840 = vmatpush1.msra.mxu0 0.0
    %3841 = vmatprep.subr.mxu0 0.0
    %3842 = vmatpush1.msra.mxu0 0.0
    %3843 = vmatprep.subr.mxu0 0.0
    %3844 = vmatpush1.msra.mxu0 0.0
    %3845 = vmatprep.subr.mxu0 0.0
    %3846 = vmatpush1.msra.mxu0 0.0
    %3847 = vmatprep.subr.mxu0 0.0
    %3848 = vmatpush1.msra.mxu0 0.0
    %3849 = vmatprep.subr.mxu0 0.0
    %3850 = vmatpush1.msra.mxu0 0.0
    %3851 = vmatprep.subr.mxu0 0.0
    %3852 = vmatpush1.msra.mxu0 0.0
    %3853 = vmatprep.subr.mxu0 0.0
    %3854 = vmatpush1.msra.mxu0 0.0
    %3855 = vmatprep.mubr.f32.mxu0 0.0
    %3856 = vmatmul.mubr.f32.gmra.mrb[0].mxu0 %v3789
    %v3857 = vpop.f32.mrb[0].mxu0
    %v3858 = vadd.f32 0.0, %v3857
    %v3859 = vpop.f32.mrb[0].mxu0
    %3860 = vmatprep.mubr.f32.mxu0 0.0
    %3861 = vmatmul.mubr.f32.gmra.mrb[0].mxu0 %v3790
    %v3862 = vpop.f32.mrb[0].mxu0
    %v3863 = vadd.f32 0.0, %v3862
    %v3864 = vpop.f32.mrb[0].mxu0
    %3865 = vdwg.mxu0
    %v3866 = vadd.f32 %v3646, %v3858
    %v3867 = vadd.f32 %v3647, %v3863
    %v3869 = vlaneseq
    %v3870 = vshrl.u32 %v3869, 7
    %v3871 = vsub.s32 0, %v3870
    %v3872 = vrot.slane %v2045, %v3871
    %v3874 = vadd.f32 %v3866, %v3872
    %v3875 = vadd.f32 %v3867, %v3872
    %v3876 = vld [vmem:[%s1] sm:$0x3]
    %v3877 = vmul.u32 %v128, 8
    %v3878 = vadd.s32 %v3876, %v3877
    %3879 = vset.pattern.permute.xlu0 0
    %3880 = vperm.xlu0 %3879, %v3878
    %v3881 = vpop.permute.xlu0 %3880
    %vm3882 = vcmp.eq.s32.totalorder %v130, %v3881
    %v3883 = vsel %vm3882, 1, 0
    %v3884 = vcvt.s32.f32 %v3883
    %vm3885 = vcmask 130048
    %v3887 = vsel %vm3885, %v3884, 0
    %3889 = vmatprep.subr.mxu0 0.0
    %3890 = vmatpush1.msra.mxu0 %v3874
    %3891 = vmatprep.subr.mxu0 0.0
    %3892 = vmatpush1.msra.mxu0 %v3875
    %3893 = vmatprep.subr.mxu0 0.0
    %3894 = vmatpush1.msra.mxu0 0.0
    %3895 = vmatprep.subr.mxu0 0.0
    %3896 = vmatpush1.msra.mxu0 0.0
    %3897 = vmatprep.subr.mxu0 0.0
    %3898 = vmatpush1.msra.mxu0 0.0
    %3899 = vmatprep.subr.mxu0 0.0
    %3900 = vmatpush1.msra.mxu0 0.0
    %3901 = vmatprep.subr.mxu0 0.0
    %3902 = vmatpush1.msra.mxu0 0.0
    %3903 = vmatprep.subr.mxu0 0.0
    %3904 = vmatpush1.msra.mxu0 0.0
    %3905 = vmatprep.subr.mxu0 0.0
    %3906 = vmatpush1.msra.mxu0 0.0
    %3907 = vmatprep.subr.mxu0 0.0
    %3908 = vmatpush1.msra.mxu0 0.0
    %3909 = vmatprep.subr.mxu0 0.0
    %3910 = vmatpush1.msra.mxu0 0.0
    %3911 = vmatprep.subr.mxu0 0.0
    %3912 = vmatpush1.msra.mxu0 0.0
    %3913 = vmatprep.subr.mxu0 0.0
    %3914 = vmatpush1.msra.mxu0 0.0
    %3915 = vmatprep.subr.mxu0 0.0
    %3916 = vmatpush1.msra.mxu0 0.0
    %3917 = vmatprep.subr.mxu0 0.0
    %3918 = vmatpush1.msra.mxu0 0.0
    %3919 = vmatprep.subr.mxu0 0.0
    %3920 = vmatpush1.msra.mxu0 0.0
    %3921 = vmatprep.subr.mxu0 0.0
    %3922 = vmatpush1.msra.mxu0 0.0
    %3923 = vmatprep.subr.mxu0 0.0
    %3924 = vmatpush1.msra.mxu0 0.0
    %3925 = vmatprep.subr.mxu0 0.0
    %3926 = vmatpush1.msra.mxu0 0.0
    %3927 = vmatprep.subr.mxu0 0.0
    %3928 = vmatpush1.msra.mxu0 0.0
    %3929 = vmatprep.subr.mxu0 0.0
    %3930 = vmatpush1.msra.mxu0 0.0
    %3931 = vmatprep.subr.mxu0 0.0
    %3932 = vmatpush1.msra.mxu0 0.0
    %3933 = vmatprep.subr.mxu0 0.0
    %3934 = vmatpush1.msra.mxu0 0.0
    %3935 = vmatprep.subr.mxu0 0.0
    %3936 = vmatpush1.msra.mxu0 0.0
    %3937 = vmatprep.subr.mxu0 0.0
    %3938 = vmatpush1.msra.mxu0 0.0
    %3939 = vmatprep.subr.mxu0 0.0
    %3940 = vmatpush1.msra.mxu0 0.0
    %3941 = vmatprep.subr.mxu0 0.0
    %3942 = vmatpush1.msra.mxu0 0.0
    %3943 = vmatprep.subr.mxu0 0.0
    %3944 = vmatpush1.msra.mxu0 0.0
    %3945 = vmatprep.subr.mxu0 0.0
    %3946 = vmatpush1.msra.mxu0 0.0
    %3947 = vmatprep.subr.mxu0 0.0
    %3948 = vmatpush1.msra.mxu0 0.0
    %3949 = vmatprep.subr.mxu0 0.0
    %3950 = vmatpush1.msra.mxu0 0.0
    %3951 = vmatprep.subr.mxu0 0.0
    %3952 = vmatpush1.msra.mxu0 0.0
    %3953 = vmatprep.mubr.f32.mxu0 0.0
    %3954 = vmatmul.mubr.f32.gmra.mrb[0].mxu0 %v3887
    %v3955 = vpop.f32.mrb[0].mxu0
    %v3956 = vadd.f32 0.0, %v3955
    %v3957 = vpop.f32.mrb[0].mxu0
    %3958 = vdwg.mxu0
    %v3959 = vld [vmem:[%s55] sm:$0x1]
    %v3960 = vld [vmem:[%s57] sm:$0x1]
    %vm3961 = vcmask 254976
    %v3962 = vsel %vm3961, %v3956, 0.0
    %3963 = vadd.xlane.f32.xlu0 %v3962
    %v3964 = vpop.xlane.xlu0 %3963
    %v3965 = vmul.f32 %v3964, %v181
    %v3966 = vsub.f32 %v3956, %v3965
    %v3967 = vmul.f32 %v3966, %v3966
    %v3968 = vsel %vm3961, %v3967, 0.0
    %3969 = vadd.xlane.f32.xlu0 %v3968
    %v3970 = vpop.xlane.xlu0 %3969
    %v3971 = vmul.f32 %v3970, %v181
    %v3972 = vadd.f32 %v3971, 1e-05
    %v3973 = vrsqrt.pop %v3972
    %v3974 = vmul.f32 %v3966, %v3973
    %v3976 = vlaneseq
    %v3977 = vshrl.u32 %v3976, 7
    %v3978 = vsub.s32 0, %v3977
    %v3979 = vrot.slane %v3959, %v3978
    %v3981 = vmul.f32 %v3974, %v3979
    %v3983 = vlaneseq
    %v3984 = vshrl.u32 %v3983, 7
    %v3985 = vsub.s32 0, %v3984
    %v3986 = vrot.slane %v3960, %v3985
    %v3988 = vadd.f32 %v3981, %v3986
    %v3989 = vld [vmem:[%s59] sm:$0xff]
    %v3990 = vld [vmem:[%s59 + $0x8] sm:$0xff]
    %v3991 = vld [vmem:[%s59 + $0x10] sm:$0xff]
    %v3992 = vld [vmem:[%s59 + $0x18] sm:$0xff]
    %v3994 = vsel %vm174, %v3988, 0
    %3996 = vmatprep.subr.mxu0 0.0
    %3997 = vmatpush1.msra.mxu0 %v3989
    %3998 = vmatprep.subr.mxu0 0.0
    %3999 = vmatpush1.msra.mxu0 %v3990
    %4000 = vmatprep.subr.mxu0 0.0
    %4001 = vmatpush1.msra.mxu0 %v3991
    %4002 = vmatprep.subr.mxu0 0.0
    %4003 = vmatpush1.msra.mxu0 %v3992
    %4004 = vmatprep.subr.mxu0 0.0
    %4005 = vmatpush1.msra.mxu0 0.0
    %4006 = vmatprep.subr.mxu0 0.0
    %4007 = vmatpush1.msra.mxu0 0.0
    %4008 = vmatprep.subr.mxu0 0.0
    %4009 = vmatpush1.msra.mxu0 0.0
    %4010 = vmatprep.subr.mxu0 0.0
    %4011 = vmatpush1.msra.mxu0 0.0
    %4012 = vmatprep.subr.mxu0 0.0
    %4013 = vmatpush1.msra.mxu0 0.0
    %4014 = vmatprep.subr.mxu0 0.0
    %4015 = vmatpush1.msra.mxu0 0.0
    %4016 = vmatprep.subr.mxu0 0.0
    %4017 = vmatpush1.msra.mxu0 0.0
    %4018 = vmatprep.subr.mxu0 0.0
    %4019 = vmatpush1.msra.mxu0 0.0
    %4020 = vmatprep.subr.mxu0 0.0
    %4021 = vmatpush1.msra.mxu0 0.0
    %4022 = vmatprep.subr.mxu0 0.0
    %4023 = vmatpush1.msra.mxu0 0.0
    %4024 = vmatprep.subr.mxu0 0.0
    %4025 = vmatpush1.msra.mxu0 0.0
    %4026 = vmatprep.subr.mxu0 0.0
    %4027 = vmatpush1.msra.mxu0 0.0
    %4028 = vmatprep.subr.mxu0 0.0
    %4029 = vmatpush1.msra.mxu0 0.0
    %4030 = vmatprep.subr.mxu0 0.0
    %4031 = vmatpush1.msra.mxu0 0.0
    %4032 = vmatprep.subr.mxu0 0.0
    %4033 = vmatpush1.msra.mxu0 0.0
    %4034 = vmatprep.subr.mxu0 0.0
    %4035 = vmatpush1.msra.mxu0 0.0
    %4036 = vmatprep.subr.mxu0 0.0
    %4037 = vmatpush1.msra.mxu0 0.0
    %4038 = vmatprep.subr.mxu0 0.0
    %4039 = vmatpush1.msra.mxu0 0.0
    %4040 = vmatprep.subr.mxu0 0.0
    %4041 = vmatpush1.msra.mxu0 0.0
    %4042 = vmatprep.subr.mxu0 0.0
    %4043 = vmatpush1.msra.mxu0 0.0
    %4044 = vmatprep.subr.mxu0 0.0
    %4045 = vmatpush1.msra.mxu0 0.0
    %4046 = vmatprep.subr.mxu0 0.0
    %4047 = vmatpush1.msra.mxu0 0.0
    %4048 = vmatprep.subr.mxu0 0.0
    %4049 = vmatpush1.msra.mxu0 0.0
    %4050 = vmatprep.subr.mxu0 0.0
    %4051 = vmatpush1.msra.mxu0 0.0
    %4052 = vmatprep.subr.mxu0 0.0
    %4053 = vmatpush1.msra.mxu0 0.0
    %4054 = vmatprep.subr.mxu0 0.0
    %4055 = vmatpush1.msra.mxu0 0.0
    %4056 = vmatprep.subr.mxu0 0.0
    %4057 = vmatpush1.msra.mxu0 0.0
    %4058 = vmatprep.subr.mxu0 0.0
    %4059 = vmatpush1.msra.mxu0 0.0
    %4060 = vmatprep.mubr.f32.mxu0 0.0
    %4061 = vmatmul.mubr.f32.gmra.mrb[0].mxu0 %v3994
    %v4062 = vpop.f32.mrb[0].mxu0
    %v4063 = vadd.f32 0.0, %v4062
    %v4064 = vpop.f32.mrb[0].mxu0
    %4065 = vdwg.mxu0
    %vm4066 = vcmask 123904
    %4067 = vst.msk [vmem:[#allocation4] sm:$0x3] %vm4066, %v4063
    // Predicated region
    $region122: #{text_encoder_forward.1} parent=1 // pred_check
      _
    $region123: #{text_encoder_forward.1} parent=1 // pred_check_branch
      %4069 = sbr.rel (0) target = $region125
    $region124: #{text_encoder_forward.1} parent=1 // pred_region
      %s4071 = ssub.s32 32, 32
      %4072 = vsyncadd [#allocation5], %s4071
      %s4074 = sshll.u32 [#allocation4], 4
      %s4075 = int_to_ptr.vmem [resolvable:$true] %s4074
      %4077 = dma.vmem_to_hbm [thread:$0]  %s4075, 32, %s61, [#allocation5]
    $region125: #{text_encoder_forward.1} parent=1 // pred_fallthru
      _
    // Predicated region
    $region126: #{text_encoder_forward.1} parent=1 // pred_check
      _
    $region127: #{text_encoder_forward.1} parent=1 // pred_check_branch
      %4079 = sbr.rel (0) target = $region129
    $region128: #{text_encoder_forward.1} parent=1 // pred_region
      %4080 = dma.done [#allocation5], 32
    $region129: #{text_encoder_forward.1} parent=1 // pred_fallthru
      _
    %4081 = vsyncpa [#allocation5], 1

</llo_original>
